<compile_context>
chip_gen: v7x
topology: tpu7x:2x2x1
jax: 0.10.0
libtpu: 0.0.40
codegen_flags: <defaults>
</compile_context>

<pallas_src>
import math
import functools

import jax
import jax.numpy as jnp
from jax.experimental import pallas as pl
from jax.experimental.pallas import tpu as pltpu


# ----------------------------- config -----------------------------

COMPUTE_DTYPE = jnp.bfloat16          # set to jnp.float32 for exact f32 numerics
VMEM_LIMIT = 48 * 1024 * 1024         # raised scoped-VMEM budget (safe on v5e/v6e/v7x)
LN_EPS = 1e-6


# ----------------------------- small helpers -----------------------------

def _round_up(x, m):
    return ((x + m - 1) // m) * m


def _pick_tile_m(M, target):
    # Tile the rows axis; target is a multiple of 8 (sublane) and 128.
    return target if M >= target else _round_up(M, 8)


def _pick_div_tile(X, candidates):
    # Largest candidate that exactly divides X (reduction-style axes must divide), else full X.
    for c in candidates:
        if X % c == 0:
            return min(c, X)
    return X


def _compiler_params(sem):
    return pltpu.CompilerParams(dimension_semantics=sem, vmem_limit_bytes=VMEM_LIMIT)


# ----------------------------- tiled matmul kernels -----------------------------

def _matmul_kernel(x_ref, w_ref, o_ref, acc_ref):
    @pl.when(pl.program_id(2) == 0)
    def _():
        acc_ref[...] = jnp.zeros_like(acc_ref)
    acc_ref[...] += jnp.dot(x_ref[...].astype(w_ref.dtype), w_ref[...],
                            preferred_element_type=jnp.float32)

    @pl.when(pl.program_id(2) == pl.num_programs(2) - 1)
    def _():
        o_ref[...] = acc_ref[...].astype(o_ref.dtype)


def _matmul_bias_kernel(x_ref, w_ref, b_ref, o_ref, acc_ref):
    @pl.when(pl.program_id(2) == 0)
    def _():
        acc_ref[...] = jnp.zeros_like(acc_ref)
    acc_ref[...] += jnp.dot(x_ref[...].astype(w_ref.dtype), w_ref[...],
                            preferred_element_type=jnp.float32)

    @pl.when(pl.program_id(2) == pl.num_programs(2) - 1)
    def _():
        o_ref[...] = (acc_ref[...] + b_ref[...]).astype(o_ref.dtype)


def matmul(x2d, w, bias=None, out_dtype=jnp.float32, tile_m=256):
    """o = x @ w (+ bias).  x:[M,K], w:[K,N] (already COMPUTE_DTYPE), bias:[N] f32 or None."""
    M, K = x2d.shape
    N = w.shape[1]
    tm = _pick_tile_m(M, tile_m)
    tn = _pick_div_tile(N, (512, 256, 128))
    tk = _pick_div_tile(K, (1024, 512, 256))
    grid = (pl.cdiv(M, tm), pl.cdiv(N, tn), pl.cdiv(K, tk))

    common = dict(
        out_shape=jax.ShapeDtypeStruct((M, N), out_dtype),
        grid=grid,
        out_specs=pl.BlockSpec((tm, tn), lambda i, j, k: (i, j)),
        scratch_shapes=[pltpu.VMEM((tm, tn), jnp.float32)],
        compiler_params=_compiler_params(("parallel", "parallel", "arbitrary")),
    )
    x_spec = pl.BlockSpec((tm, tk), lambda i, j, k: (i, k))
    w_spec = pl.BlockSpec((tk, tn), lambda i, j, k: (k, j))

    if bias is None:
        return pl.pallas_call(_matmul_kernel, in_specs=[x_spec, w_spec], **common)(x2d, w)
    b_spec = pl.BlockSpec((1, tn), lambda i, j, k: (0, j))
    return pl.pallas_call(_matmul_bias_kernel, in_specs=[x_spec, w_spec, b_spec],
                          **common)(x2d, w, bias.reshape(1, N))


# ----------------------------- FFN + residual + LayerNorm (fused) -----------------------------

def _ffn_ln_kernel(x_ref, w1_ref, b1_ref, w2_ref, b2_ref, g_ref, nb_ref, o_ref, acc_ref,
                   *, eps, feat):
    # out = LN( x + fc2(relu(fc1(x))) ), H-tiled on the second grid axis (accumulator).
    h_idx = pl.program_id(1)

    @pl.when(h_idx == 0)
    def _():
        acc_ref[...] = jnp.zeros_like(acc_ref)

    xb = x_ref[...].astype(w1_ref.dtype)
    h = jnp.dot(xb, w1_ref[...], preferred_element_type=jnp.float32) + b1_ref[...]
    h = jnp.maximum(h, 0.0)
    acc_ref[...] += jnp.dot(h.astype(w2_ref.dtype), w2_ref[...],
                            preferred_element_type=jnp.float32)

    @pl.when(h_idx == pl.num_programs(1) - 1)
    def _():
        y = x_ref[...] + acc_ref[...] + b2_ref[...]          # residual + fc2 bias (f32)
        mean = jnp.mean(y, axis=-1, keepdims=True)
        # torch.std is unbiased (N-1) and eps is added to std (reference LayerNormalization).
        var = jnp.sum((y - mean) ** 2, axis=-1, keepdims=True) * (1.0 / (feat - 1))
        inv = pl.reciprocal(jnp.sqrt(var) + eps)
        o_ref[...] = g_ref[...] * (y - mean) * inv + nb_ref[...]


def ffn_ln(x, w1, b1, w2, b2, gain, nbias, eps=LN_EPS, tile_m=512):
    B, S, E = x.shape
    M = B * S
    H = w1.shape[1]
    tm = _pick_tile_m(M, tile_m)
    th = _pick_div_tile(H, (2048, 1024, 512))
    grid = (pl.cdiv(M, tm), pl.cdiv(H, th))

    out = pl.pallas_call(
        functools.partial(_ffn_ln_kernel, eps=eps, feat=E),
        out_shape=jax.ShapeDtypeStruct((M, E), jnp.float32),
        grid=grid,
        in_specs=[
            pl.BlockSpec((tm, E), lambda i, h: (i, 0)),
            pl.BlockSpec((E, th), lambda i, h: (0, h)),
            pl.BlockSpec((1, th), lambda i, h: (0, h)),
            pl.BlockSpec((th, E), lambda i, h: (h, 0)),
            pl.BlockSpec((1, E), lambda i, h: (0, 0)),
            pl.BlockSpec((1, E), lambda i, h: (0, 0)),
            pl.BlockSpec((1, E), lambda i, h: (0, 0)),
        ],
        out_specs=pl.BlockSpec((tm, E), lambda i, h: (i, 0)),
        scratch_shapes=[pltpu.VMEM((tm, E), jnp.float32)],
        compiler_params=_compiler_params(("parallel", "arbitrary")),
    )(x.reshape(M, E), w1, b1.reshape(1, H), w2, b2.reshape(1, E),
      gain.reshape(1, E), nbias.reshape(1, E))
    return out.reshape(B, S, E)


# ----------------------------- attention + out-proj + residual + LayerNorm -----------------------------

def _mha_ln_kernel(q_ref, k_ref, v_ref, res_ref, pad_ref, wo_ref, bo_ref, g_ref, nb_ref,
                   o_ref, acc_ref, *, num_heads, scale, causal, eps, feat):
    # One (batch, q-tile): per-head scaled-dot-product attention with in-kernel mask
    # generation, head-wise accumulation of ctx_h @ wo[h] into VMEM scratch, then
    # residual + output bias + LayerNorm fused in the epilogue.
    tq = q_ref.shape[2]
    Sk = k_ref.shape[2]

    keep = jnp.broadcast_to(pad_ref[0] != 0, (tq, Sk))          # key-axis pad mask
    if causal:
        q_off = pl.program_id(1) * tq
        row = jax.lax.broadcasted_iota(jnp.int32, (tq, Sk), 0) + q_off
        col = jax.lax.broadcasted_iota(jnp.int32, (tq, Sk), 1)
        keep = keep & (col <= row)
    neg = jnp.float32(-1e20)

    acc_ref[...] = jnp.zeros_like(acc_ref)
    for h in range(num_heads):                                  # static; acc lives in scratch
        qh = q_ref[0, h]                                        # [tq, D] (COMPUTE_DTYPE)
        kh = k_ref[0, h]                                        # [Sk, D]
        vh = v_ref[0, h]                                        # [Sk, D]
        s = jax.lax.dot_general(qh, kh, (((1,), (1,)), ((), ())),
                                preferred_element_type=jnp.float32) * scale
        s = jnp.where(keep, s, neg)
        s = s - jnp.max(s, axis=-1, keepdims=True)
        p = jnp.exp(s)
        p = p * pl.reciprocal(jnp.sum(p, axis=-1, keepdims=True), approx=True)
        ctx = jnp.dot(p.astype(vh.dtype), vh, preferred_element_type=jnp.float32)   # [tq, D]
        # concat(ctx_h) @ wo == sum_h ctx_h @ wo[h]
        acc_ref[...] += jnp.dot(ctx.astype(wo_ref.dtype), wo_ref[h],
                                preferred_element_type=jnp.float32)

    y = res_ref[0] + acc_ref[...] + bo_ref[...]                 # residual + out-proj bias (f32)
    mean = jnp.mean(y, axis=-1, keepdims=True)
    var = jnp.sum((y - mean) ** 2, axis=-1, keepdims=True) * (1.0 / (feat - 1))
    inv = pl.reciprocal(jnp.sqrt(var) + eps)
    o_ref[0] = g_ref[...] * (y - mean) * inv + nb_ref[...]


def fused_attention_ln(q, k, v, residual, pad_mask, wo_hm, bo, gain, nbias,
                       num_heads, causal, eps=LN_EPS, tile_q=256):
    # q: [B,H,Sq,D]  k/v: [B,H,Sk,D]  (COMPUTE_DTYPE, head-major)
    # residual: [B,Sq,E] f32, pad_mask: [B,1,Sk] int32, wo_hm: [H,D,E] COMPUTE_DTYPE
    B, H, Sq, D = q.shape
    Sk = k.shape[2]
    E = H * D
    tq = _pick_tile_m(Sq, tile_q)
    grid = (B, pl.cdiv(Sq, tq))

    kernel = functools.partial(_mha_ln_kernel, num_heads=H, scale=1.0 / math.sqrt(D),
                               causal=causal, eps=eps, feat=E)
    return pl.pallas_call(
        kernel,
        out_shape=jax.ShapeDtypeStruct((B, Sq, E), jnp.float32),
        grid=grid,
        in_specs=[
            pl.BlockSpec((1, H, tq, D), lambda b, qi: (b, 0, qi, 0)),
            pl.BlockSpec((1, H, Sk, D), lambda b, qi: (b, 0, 0, 0)),
            pl.BlockSpec((1, H, Sk, D), lambda b, qi: (b, 0, 0, 0)),
            pl.BlockSpec((1, tq, E), lambda b, qi: (b, qi, 0)),
            pl.BlockSpec((1, 1, Sk), lambda b, qi: (b, 0, 0)),
            pl.BlockSpec((H, D, E), lambda b, qi: (0, 0, 0)),
            pl.BlockSpec((1, E), lambda b, qi: (0, 0)),
            pl.BlockSpec((1, E), lambda b, qi: (0, 0)),
            pl.BlockSpec((1, E), lambda b, qi: (0, 0)),
        ],
        out_specs=pl.BlockSpec((1, tq, E), lambda b, qi: (b, qi, 0)),
        scratch_shapes=[pltpu.VMEM((tq, E), jnp.float32)],
        compiler_params=_compiler_params(("parallel", "parallel")),
    )(q, k, v, residual, pad_mask, wo_hm, bo.reshape(1, E),
      gain.reshape(1, E), nbias.reshape(1, E))


# ------------------------------ model glue ------------------------------

def attention_block(x, kv, pad_mask, p, num_heads, *, self_attn, causal, norm_g, norm_b):
    # x: [B,Sq,E] (query + residual)   kv: [B,Sk,E] (key/value source)
    B, Sq, E = x.shape
    D = E // num_heads

    if self_attn:
        # fused Q/K/V projection against prepacked [E, 3E] weight (x read once)
        qkv = matmul(x.reshape(-1, E), p["wqkv"], out_dtype=COMPUTE_DTYPE)
        qkv = jnp.transpose(qkv.reshape(B, Sq, 3, num_heads, D), (2, 0, 3, 1, 4))
        q, k, v = qkv[0], qkv[1], qkv[2]                        # [B,H,Sq,D] each
    else:
        Sk = kv.shape[1]
        q = matmul(x.reshape(-1, E), p["wq"], out_dtype=COMPUTE_DTYPE)
        q = jnp.transpose(q.reshape(B, Sq, num_heads, D), (0, 2, 1, 3))
        kvp = matmul(kv.reshape(-1, E), p["wkv"], out_dtype=COMPUTE_DTYPE)
        kvp = jnp.transpose(kvp.reshape(B, Sk, 2, num_heads, D), (2, 0, 3, 1, 4))
        k, v = kvp[0], kvp[1]

    return fused_attention_ln(q, k, v, x, pad_mask, p["wo_hm"], p["bo"],
                              norm_g, norm_b, num_heads, causal)


def encoder_layer(x, src_pad, lp, num_heads):
    x = attention_block(x, x, src_pad, lp["attn"], num_heads, self_attn=True, causal=False,
                        norm_g=lp["norm1_g"], norm_b=lp["norm1_b"])
    x = ffn_ln(x, lp["ff_w1"], lp["ff_b1"], lp["ff_w2"], lp["ff_b2"],
               lp["norm2_g"], lp["norm2_b"])
    return x


def decoder_layer(x, enc_out, src_pad, tgt_pad, lp, num_heads):
    x = attention_block(x, x, tgt_pad, lp["masked_attn"], num_heads, self_attn=True,
                        causal=True, norm_g=lp["norm1_g"], norm_b=lp["norm1_b"])
    x = attention_block(x, enc_out, src_pad, lp["enc_attn"], num_heads, self_attn=False,
                        causal=False, norm_g=lp["norm2_g"], norm_b=lp["norm2_b"])
    x = ffn_ln(x, lp["ff_w1"], lp["ff_b1"], lp["ff_w2"], lp["ff_b2"],
               lp["norm3_g"], lp["norm3_b"])
    return x


def encoder_forward(eparams, src, src_pad, num_heads):
    B, S = src.shape
    # TODO(synk): embedding gather stays in plain JAX (no clean rectangular-tile Pallas form).
    x = eparams["word_emb"][src] + eparams["pos_emb"][:S][None, :, :]
    for lp in eparams["layers"]:
        x = encoder_layer(x, src_pad, lp, num_heads)
    return x


def decoder_forward(dparams, tgt, enc_out, src_pad, tgt_pad, num_heads, tgt_vocab):
    B, T = tgt.shape
    x = dparams["word_emb"][tgt] + dparams["pos_emb"][:T][None, :, :]
    for lp in dparams["layers"]:
        x = decoder_layer(x, enc_out, src_pad, tgt_pad, lp, num_heads)
    E = x.shape[-1]
    # vocab projection against the 128-lane-padded weight, sliced back to the true vocab
    logits = matmul(x.reshape(-1, E), dparams["fc_out_w"], dparams["fc_out_b"])
    return logits[:, :tgt_vocab].reshape(B, T, tgt_vocab)


def make_pad_mask(tokens):
    # [B, 1, S] int32; 1 = keep key position. Causal part is generated inside the kernel.
    return (tokens != 0).astype(jnp.int32)[:, None, :]


def transformer_forward(params, src, tgt, num_heads, tgt_vocab):
    src_pad = make_pad_mask(src)
    tgt_pad = make_pad_mask(tgt)
    enc_out = encoder_forward(params["encoder"], src, src_pad, num_heads)
    return decoder_forward(params["decoder"], tgt, enc_out, src_pad, tgt_pad,
                           num_heads, tgt_vocab)


# ------------------------------ init (torch-like) + one-time prepack ------------------------------

def _init_mat(key, shape, scale=0.05):
    return (jax.random.normal(key, shape, jnp.float32) * scale).astype(jnp.float32)


def init_attn(key, E):
    ks = jax.random.split(key, 5)
    return {"wq": _init_mat(ks[0], (E, E)), "wk": _init_mat(ks[1], (E, E)),
            "wv": _init_mat(ks[2], (E, E)), "wo": _init_mat(ks[3], (E, E)),
            "bo": _init_mat(ks[4], (E,))}


def init_encoder_layer(key, E, hidden):
    ks = jax.random.split(key, 5)
    return {"attn": init_attn(ks[0], E),
            "norm1_g": jnp.ones((E,), jnp.float32), "norm1_b": jnp.zeros((E,), jnp.float32),
            "norm2_g": jnp.ones((E,), jnp.float32), "norm2_b": jnp.zeros((E,), jnp.float32),
            "ff_w1": _init_mat(ks[1], (E, hidden)), "ff_b1": _init_mat(ks[2], (hidden,)),
            "ff_w2": _init_mat(ks[3], (hidden, E)), "ff_b2": _init_mat(ks[4], (E,))}


def init_decoder_layer(key, E, hidden):
    ks = jax.random.split(key, 6)
    return {"masked_attn": init_attn(ks[0], E), "enc_attn": init_attn(ks[1], E),
            "norm1_g": jnp.ones((E,), jnp.float32), "norm1_b": jnp.zeros((E,), jnp.float32),
            "norm2_g": jnp.ones((E,), jnp.float32), "norm2_b": jnp.zeros((E,), jnp.float32),
            "norm3_g": jnp.ones((E,), jnp.float32), "norm3_b": jnp.zeros((E,), jnp.float32),
            "ff_w1": _init_mat(ks[2], (E, hidden)), "ff_b1": _init_mat(ks[3], (hidden,)),
            "ff_w2": _init_mat(ks[4], (hidden, E)), "ff_b2": _init_mat(ks[5], (E,))}


def init_transformer(key, src_vocab, tgt_vocab, src_max_len, tgt_max_len,
                     E, num_heads, num_layers, hidden):
    k_enc, k_dec = jax.random.split(key)
    ke = jax.random.split(k_enc, num_layers + 2)
    kd = jax.random.split(k_dec, num_layers + 4)
    encoder = {"word_emb": _init_mat(ke[0], (src_vocab, E)),
               "pos_emb": _init_mat(ke[1], (src_max_len, E)),
               "layers": [init_encoder_layer(ke[2 + i], E, hidden) for i in range(num_layers)]}
    decoder = {"word_emb": _init_mat(kd[0], (tgt_vocab, E)),
               "pos_emb": _init_mat(kd[1], (tgt_max_len, E)),
               "layers": [init_decoder_layer(kd[2 + i], E, hidden) for i in range(num_layers)],
               "fc_out_w": _init_mat(kd[num_layers + 2], (E, tgt_vocab)),
               "fc_out_b": _init_mat(kd[num_layers + 3], (tgt_vocab,))}
    return {"encoder": encoder, "decoder": decoder}


def _prepack_attn(p, num_heads):
    E = p["wq"].shape[0]
    D = E // num_heads
    dt = COMPUTE_DTYPE
    return {"wqkv": jnp.concatenate([p["wq"], p["wk"], p["wv"]], axis=1).astype(dt),
            "wq": p["wq"].astype(dt),
            "wkv": jnp.concatenate([p["wk"], p["wv"]], axis=1).astype(dt),
            "wo_hm": p["wo"].reshape(num_heads, D, E).astype(dt),
            "bo": p["bo"]}


def _prepack_layer(lp, num_heads, is_decoder):
    out = {k: v for k, v in lp.items() if not isinstance(v, dict)}
    out["ff_w1"] = lp["ff_w1"].astype(COMPUTE_DTYPE)
    out["ff_w2"] = lp["ff_w2"].astype(COMPUTE_DTYPE)
    if is_decoder:
        out["masked_attn"] = _prepack_attn(lp["masked_attn"], num_heads)
        out["enc_attn"] = _prepack_attn(lp["enc_attn"], num_heads)
    else:
        out["attn"] = _prepack_attn(lp["attn"], num_heads)
    return out


def prepack_params(params, num_heads):
    """One-time prepack: fuse QKV weights, head-major wo, cast GEMM weights to COMPUTE_DTYPE,
    pad the vocab projection to a multiple of 128 lanes."""
    enc, dec = params["encoder"], params["decoder"]
    E, V = dec["fc_out_w"].shape
    V_pad = _round_up(V, 128)
    fc_w = jnp.zeros((E, V_pad), jnp.float32).at[:, :V].set(dec["fc_out_w"]).astype(COMPUTE_DTYPE)
    fc_b = jnp.zeros((V_pad,), jnp.float32).at[:V].set(dec["fc_out_b"])
    return {
        "encoder": {"word_emb": enc["word_emb"], "pos_emb": enc["pos_emb"],
                    "layers": [_prepack_layer(lp, num_heads, False) for lp in enc["layers"]]},
        "decoder": {"word_emb": dec["word_emb"], "pos_emb": dec["pos_emb"],
                    "layers": [_prepack_layer(lp, num_heads, True) for lp in dec["layers"]],
                    "fc_out_w": fc_w, "fc_out_b": fc_b},
    }


# ------------------------------ main ------------------------------

if __name__ == "__main__":
    # small but representative config
    SRC_VOCAB, TGT_VOCAB = 20, 24
    SRC_MAX_LEN, TGT_MAX_LEN = 16, 16
    EMBED, NUM_HEADS, NUM_LAYERS, HIDDEN = 32, 4, 2, 64
    B, S_SRC, S_TGT = 2, 8, 8

    key = jax.random.PRNGKey(0)
    k_params, k_src, k_tgt = jax.random.split(key, 3)

    raw_params = init_transformer(k_params, SRC_VOCAB, TGT_VOCAB, SRC_MAX_LEN, TGT_MAX_LEN,
                                  EMBED, NUM_HEADS, NUM_LAYERS, HIDDEN)
    params = prepack_params(raw_params, NUM_HEADS)

    # token ids; mostly nonzero, with a couple of pads (id 0)
    src = jax.random.randint(k_src, (B, S_SRC), 1, SRC_VOCAB).astype(jnp.int32)
    tgt = jax.random.randint(k_tgt, (B, S_TGT), 1, TGT_VOCAB).astype(jnp.int32)
    src = src.at[0, -1].set(0)
    tgt = tgt.at[1, -1].set(0)

    fwd = jax.jit(transformer_forward, static_argnums=(3, 4))
    out = fwd(params, src, tgt, NUM_HEADS, TGT_VOCAB)
    out = jax.block_until_ready(out)

    assert out.shape == (B, S_TGT, TGT_VOCAB), out.shape
    assert jnp.all(jnp.isfinite(out))
    print("KERNEL_OK")
</pallas_src>

<mosaic_0001>
module attributes {stable_mosaic.version = 11 : i64} {
  func.func @_matmul_kernel(%arg0: i32, %arg1: i32, %arg2: i32, %arg3: memref<16x32xf32, #tpu.memory_space<vmem>>, %arg4: memref<32x96xbf16, #tpu.memory_space<vmem>>, %arg5: memref<16x96xbf16, #tpu.memory_space<vmem>>, %arg6: memref<16x96xf32, #tpu.memory_space<vmem>>) attributes {dimension_semantics = [#tpu.dimension_semantics<parallel>, #tpu.dimension_semantics<parallel>, #tpu.dimension_semantics<arbitrary>], iteration_bounds = array<i64: 1, 1, 1>, scalar_prefetch = 0 : i64, scratch_operands = 1 : i64, tpu.core_type = #tpu.core_type<tc>, window_params = [{transform_indices = @transform_0, window_bounds = array<i64: 16, 32>}, {transform_indices = @transform_1, window_bounds = array<i64: 32, 96>}, {transform_indices = @transform_2, window_bounds = array<i64: 16, 96>}]} {
    %c0_i32 = arith.constant 0 : i32
    %0 = arith.cmpi eq, %arg2, %c0_i32 : i32
    %1 = arith.extui %0 : i1 to i32
    %c0_i32_0 = arith.constant 0 : i32
    %2 = arith.cmpi ne, %1, %c0_i32_0 : i32
    scf.if %2 {
      %cst_10 = arith.constant 0.000000e+00 : f32
      %13 = vector.broadcast %cst_10 : f32 to vector<16x96xf32>
      %c0_11 = arith.constant 0 : index
      %c0_12 = arith.constant 0 : index
      %14 = vector.load %arg6[%c0_11, %c0_12] : memref<16x96xf32, #tpu.memory_space<vmem>>, vector<16x96xf32>
      tpu.vector_store %arg6[%c0_11, %c0_12], %13 {strides = array<i32>} : memref<16x96xf32, #tpu.memory_space<vmem>>, vector<16x96xf32>,
    } else {
    }
    %c0 = arith.constant 0 : index
    %c0_1 = arith.constant 0 : index
    %3 = vector.load %arg6[%c0, %c0_1] : memref<16x96xf32, #tpu.memory_space<vmem>>, vector<16x96xf32>
    %c0_2 = arith.constant 0 : index
    %c0_3 = arith.constant 0 : index
    %4 = vector.load %arg3[%c0_2, %c0_3] : memref<16x32xf32, #tpu.memory_space<vmem>>, vector<16x32xf32>
    %5 = arith.truncf %4 : vector<16x32xf32> to vector<16x32xbf16>
    %c0_4 = arith.constant 0 : index
    %c0_5 = arith.constant 0 : index
    %6 = vector.load %arg4[%c0_4, %c0_5] : memref<32x96xbf16, #tpu.memory_space<vmem>>, vector<32x96xbf16>
    %cst = arith.constant dense<0.000000e+00> : vector<16x96xf32>
    %7 = tpu.matmul %5, %6, %cst {dimension_numbers = #tpu.dot_dimension_numbers<[1], [0], [0], [1], [0, 0, 1, 1], [], []>} : vector<16x32xbf16>, vector<32x96xbf16>, vector<16x96xf32> -> vector<16x96xf32>
    %8 = arith.addf %3, %7 : vector<16x96xf32>
    %c0_6 = arith.constant 0 : index
    %c0_7 = arith.constant 0 : index
    %9 = vector.load %arg6[%c0_6, %c0_7] : memref<16x96xf32, #tpu.memory_space<vmem>>, vector<16x96xf32>
    tpu.vector_store %arg6[%c0_6, %c0_7], %8 {strides = array<i32>} : memref<16x96xf32, #tpu.memory_space<vmem>>, vector<16x96xf32>,
    %c0_i32_8 = arith.constant 0 : i32
    %10 = arith.cmpi eq, %arg2, %c0_i32_8 : i32
    %11 = arith.extui %10 : i1 to i32
    %c0_i32_9 = arith.constant 0 : i32
    %12 = arith.cmpi ne, %11, %c0_i32_9 : i32
    scf.if %12 {
      %c0_10 = arith.constant 0 : index
      %c0_11 = arith.constant 0 : index
      %13 = vector.load %arg6[%c0_10, %c0_11] : memref<16x96xf32, #tpu.memory_space<vmem>>, vector<16x96xf32>
      %14 = arith.truncf %13 : vector<16x96xf32> to vector<16x96xbf16>
      %c0_12 = arith.constant 0 : index
      %c0_13 = arith.constant 0 : index
      %15 = vector.load %arg5[%c0_12, %c0_13] : memref<16x96xbf16, #tpu.memory_space<vmem>>, vector<16x96xbf16>
      tpu.vector_store %arg5[%c0_12, %c0_13], %14 {strides = array<i32>} : memref<16x96xbf16, #tpu.memory_space<vmem>>, vector<16x96xbf16>,
    } else {
    }
    return
  }
  func.func @transform_0(%arg0: i32, %arg1: i32, %arg2: i32) -> (i32, i32) {
    %c0_i32 = arith.constant 0 : i32
    return %arg0, %arg2 : i32, i32
  }
  func.func @transform_1(%arg0: i32, %arg1: i32, %arg2: i32) -> (i32, i32) {
    %c0_i32 = arith.constant 0 : i32
    return %arg2, %arg1 : i32, i32
  }
  func.func @transform_2(%arg0: i32, %arg1: i32, %arg2: i32) -> (i32, i32) {
    %c0_i32 = arith.constant 0 : i32
    return %arg0, %arg1 : i32, i32
  }
}

module attributes {stable_mosaic.version = 11 : i64} {
  func.func @_matmul_kernel(%arg0: i32, %arg1: i32, %arg2: i32, %arg3: memref<16x32xf32, #tpu.memory_space<vmem>>, %arg4: memref<32x32xbf16, #tpu.memory_space<vmem>>, %arg5: memref<16x32xbf16, #tpu.memory_space<vmem>>, %arg6: memref<16x32xf32, #tpu.memory_space<vmem>>) attributes {dimension_semantics = [#tpu.dimension_semantics<parallel>, #tpu.dimension_semantics<parallel>, #tpu.dimension_semantics<arbitrary>], iteration_bounds = array<i64: 1, 1, 1>, scalar_prefetch = 0 : i64, scratch_operands = 1 : i64, tpu.core_type = #tpu.core_type<tc>, window_params = [{transform_indices = @transform_0, window_bounds = array<i64: 16, 32>}, {transform_indices = @transform_1, window_bounds = array<i64: 32, 32>}, {transform_indices = @transform_2, window_bounds = array<i64: 16, 32>}]} {
    %c0_i32 = arith.constant 0 : i32
    %0 = arith.cmpi eq, %arg2, %c0_i32 : i32
    %1 = arith.extui %0 : i1 to i32
    %c0_i32_0 = arith.constant 0 : i32
    %2 = arith.cmpi ne, %1, %c0_i32_0 : i32
    scf.if %2 {
      %cst_10 = arith.constant 0.000000e+00 : f32
      %13 = vector.broadcast %cst_10 : f32 to vector<16x32xf32>
      %c0_11 = arith.constant 0 : index
      %c0_12 = arith.constant 0 : index
      %14 = vector.load %arg6[%c0_11, %c0_12] : memref<16x32xf32, #tpu.memory_space<vmem>>, vector<16x32xf32>
      tpu.vector_store %arg6[%c0_11, %c0_12], %13 {strides = array<i32>} : memref<16x32xf32, #tpu.memory_space<vmem>>, vector<16x32xf32>,
    } else {
    }
    %c0 = arith.constant 0 : index
    %c0_1 = arith.constant 0 : index
    %3 = vector.load %arg6[%c0, %c0_1] : memref<16x32xf32, #tpu.memory_space<vmem>>, vector<16x32xf32>
    %c0_2 = arith.constant 0 : index
    %c0_3 = arith.constant 0 : index
    %4 = vector.load %arg3[%c0_2, %c0_3] : memref<16x32xf32, #tpu.memory_space<vmem>>, vector<16x32xf32>
    %5 = arith.truncf %4 : vector<16x32xf32> to vector<16x32xbf16>
    %c0_4 = arith.constant 0 : index
    %c0_5 = arith.constant 0 : index
    %6 = vector.load %arg4[%c0_4, %c0_5] : memref<32x32xbf16, #tpu.memory_space<vmem>>, vector<32x32xbf16>
    %cst = arith.constant dense<0.000000e+00> : vector<16x32xf32>
    %7 = tpu.matmul %5, %6, %cst {dimension_numbers = #tpu.dot_dimension_numbers<[1], [0], [0], [1], [0, 0, 1, 1], [], []>} : vector<16x32xbf16>, vector<32x32xbf16>, vector<16x32xf32> -> vector<16x32xf32>
    %8 = arith.addf %3, %7 : vector<16x32xf32>
    %c0_6 = arith.constant 0 : index
    %c0_7 = arith.constant 0 : index
    %9 = vector.load %arg6[%c0_6, %c0_7] : memref<16x32xf32, #tpu.memory_space<vmem>>, vector<16x32xf32>
    tpu.vector_store %arg6[%c0_6, %c0_7], %8 {strides = array<i32>} : memref<16x32xf32, #tpu.memory_space<vmem>>, vector<16x32xf32>,
    %c0_i32_8 = arith.constant 0 : i32
    %10 = arith.cmpi eq, %arg2, %c0_i32_8 : i32
    %11 = arith.extui %10 : i1 to i32
    %c0_i32_9 = arith.constant 0 : i32
    %12 = arith.cmpi ne, %11, %c0_i32_9 : i32
    scf.if %12 {
      %c0_10 = arith.constant 0 : index
      %c0_11 = arith.constant 0 : index
      %13 = vector.load %arg6[%c0_10, %c0_11] : memref<16x32xf32, #tpu.memory_space<vmem>>, vector<16x32xf32>
      %14 = arith.truncf %13 : vector<16x32xf32> to vector<16x32xbf16>
      %c0_12 = arith.constant 0 : index
      %c0_13 = arith.constant 0 : index
      %15 = vector.load %arg5[%c0_12, %c0_13] : memref<16x32xbf16, #tpu.memory_space<vmem>>, vector<16x32xbf16>
      tpu.vector_store %arg5[%c0_12, %c0_13], %14 {strides = array<i32>} : memref<16x32xbf16, #tpu.memory_space<vmem>>, vector<16x32xbf16>,
    } else {
    }
    return
  }
  func.func @transform_0(%arg0: i32, %arg1: i32, %arg2: i32) -> (i32, i32) {
    %c0_i32 = arith.constant 0 : i32
    return %arg0, %arg2 : i32, i32
  }
  func.func @transform_1(%arg0: i32, %arg1: i32, %arg2: i32) -> (i32, i32) {
    %c0_i32 = arith.constant 0 : i32
    return %arg2, %arg1 : i32, i32
  }
  func.func @transform_2(%arg0: i32, %arg1: i32, %arg2: i32) -> (i32, i32) {
    %c0_i32 = arith.constant 0 : i32
    return %arg0, %arg1 : i32, i32
  }
}

module attributes {stable_mosaic.version = 11 : i64} {
  func.func @_mha_ln_kernel(%arg0: i32, %arg1: i32, %arg2: memref<1x4x8x8xbf16, #tpu.memory_space<vmem>>, %arg3: memref<1x4x8x8xbf16, #tpu.memory_space<vmem>>, %arg4: memref<1x4x8x8xbf16, #tpu.memory_space<vmem>>, %arg5: memref<1x8x32xf32, #tpu.memory_space<vmem>>, %arg6: memref<1x1x8xi32, #tpu.memory_space<vmem>>, %arg7: memref<4x8x32xbf16, #tpu.memory_space<vmem>>, %arg8: memref<1x32xf32, #tpu.memory_space<vmem>>, %arg9: memref<1x32xf32, #tpu.memory_space<vmem>>, %arg10: memref<1x32xf32, #tpu.memory_space<vmem>>, %arg11: memref<1x8x32xf32, #tpu.memory_space<vmem>>, %arg12: memref<8x32xf32, #tpu.memory_space<vmem>>) attributes {dimension_semantics = [#tpu.dimension_semantics<parallel>, #tpu.dimension_semantics<parallel>], iteration_bounds = array<i64: 2, 1>, scalar_prefetch = 0 : i64, scratch_operands = 1 : i64, tpu.core_type = #tpu.core_type<tc>, window_params = [{transform_indices = @transform_0, window_bounds = array<i64: 1, 4, 8, 8>}, {transform_indices = @transform_1, window_bounds = array<i64: 1, 4, 8, 8>}, {transform_indices = @transform_2, window_bounds = array<i64: 1, 4, 8, 8>}, {transform_indices = @transform_3, window_bounds = array<i64: 1, 8, 32>}, {transform_indices = @transform_4, window_bounds = array<i64: 1, 1, 8>}, {pipeline_mode = #tpu.pipeline_mode<synchronous>, transform_indices = @transform_5, window_bounds = array<i64: 4, 8, 32>}, {pipeline_mode = #tpu.pipeline_mode<synchronous>, transform_indices = @transform_6, window_bounds = array<i64: 1, 32>}, {pipeline_mode = #tpu.pipeline_mode<synchronous>, transform_indices = @transform_7, window_bounds = array<i64: 1, 32>}, {pipeline_mode = #tpu.pipeline_mode<synchronous>, transform_indices = @transform_8, window_bounds = array<i64: 1, 32>}, {transform_indices = @transform_9, window_bounds = array<i64: 1, 8, 32>}]} {
    %c0 = arith.constant 0 : index
    %c0_0 = arith.constant 0 : index
    %c0_1 = arith.constant 0 : index
    %0 = vector.load %arg6[%c0, %c0_0, %c0_1] : memref<1x1x8xi32, #tpu.memory_space<vmem>>, vector<1x1x8xi32>
    %1 = vector.shape_cast %0 : vector<1x1x8xi32> to vector<1x8xi32>
    %c0_i32 = arith.constant 0 : i32
    %2 = vector.broadcast %c0_i32 : i32 to vector<1x8xi32>
    %3 = arith.cmpi ne, %1, %2 : vector<1x8xi32>
    %4 = vector.shape_cast %3 : vector<1x8xi1> to vector<1x8xi1>
    %5 = vector.broadcast %4 : vector<1x8xi1> to vector<8x8xi1>
    %c8_i32 = arith.constant 8 : i32
    %6 = arith.muli %arg1, %c8_i32 : i32
    %7 = tpu.iota {dimensions = array<i32: 0>} : vector<8x8xi32>
    %8 = vector.broadcast %6 : i32 to vector<8x8xi32>
    %9 = arith.addi %7, %8 : vector<8x8xi32>
    %10 = tpu.iota {dimensions = array<i32: 1>} : vector<8x8xi32>
    %11 = arith.cmpi sle, %10, %9 : vector<8x8xi32>
    %12 = arith.andi %5, %11 : vector<8x8xi1>
    %cst = arith.constant 0.000000e+00 : f32
    %13 = vector.broadcast %cst : f32 to vector<8x32xf32>
    %c0_2 = arith.constant 0 : index
    %c0_3 = arith.constant 0 : index
    %14 = vector.load %arg12[%c0_2, %c0_3] : memref<8x32xf32, #tpu.memory_space<vmem>>, vector<8x32xf32>
    tpu.vector_store %arg12[%c0_2, %c0_3], %13 {strides = array<i32>} : memref<8x32xf32, #tpu.memory_space<vmem>>, vector<8x32xf32>,
    %c0_4 = arith.constant 0 : index
    %c0_5 = arith.constant 0 : index
    %c0_6 = arith.constant 0 : index
    %c0_7 = arith.constant 0 : index
    %15 = vector.load %arg2[%c0_4, %c0_5, %c0_6, %c0_7] : memref<1x4x8x8xbf16, #tpu.memory_space<vmem>>, vector<1x1x8x8xbf16>
    %16 = vector.shape_cast %15 : vector<1x1x8x8xbf16> to vector<8x8xbf16>
    %c0_8 = arith.constant 0 : index
    %c0_9 = arith.constant 0 : index
    %c0_10 = arith.constant 0 : index
    %c0_11 = arith.constant 0 : index
    %17 = vector.load %arg3[%c0_8, %c0_9, %c0_10, %c0_11] : memref<1x4x8x8xbf16, #tpu.memory_space<vmem>>, vector<1x1x8x8xbf16>
    %18 = vector.shape_cast %17 : vector<1x1x8x8xbf16> to vector<8x8xbf16>
    %c0_12 = arith.constant 0 : index
    %c0_13 = arith.constant 0 : index
    %c0_14 = arith.constant 0 : index
    %c0_15 = arith.constant 0 : index
    %19 = vector.load %arg4[%c0_12, %c0_13, %c0_14, %c0_15] : memref<1x4x8x8xbf16, #tpu.memory_space<vmem>>, vector<1x1x8x8xbf16>
    %20 = vector.shape_cast %19 : vector<1x1x8x8xbf16> to vector<8x8xbf16>
    %cst_16 = arith.constant dense<0.000000e+00> : vector<8x8xf32>
    %21 = tpu.matmul %16, %18, %cst_16 {dimension_numbers = #tpu.dot_dimension_numbers<[1], [1], [0], [0], [0, 0, 1, 0], [], []>} : vector<8x8xbf16>, vector<8x8xbf16>, vector<8x8xf32> -> vector<8x8xf32>
    %cst_17 = arith.constant 0.353553385 : f32
    %22 = vector.broadcast %cst_17 : f32 to vector<8x8xf32>
    %23 = arith.mulf %21, %22 : vector<8x8xf32>
    %cst_18 = arith.constant -1.000000e+20 : f32
    %24 = vector.broadcast %cst_18 : f32 to vector<8x8xf32>
    %25 = arith.select %12, %23, %24 : vector<8x8xi1>, vector<8x8xf32>
    %cst_19 = arith.constant dense<0xFF800000> : vector<8xf32>
    %26 = vector.multi_reduction <maximumf>, %25, %cst_19 [1] : vector<8x8xf32> to vector<8xf32>
    %27 = vector.shape_cast %26 : vector<8xf32> to vector<8x1xf32>
    %28 = vector.broadcast %27 : vector<8x1xf32> to vector<8x8xf32>
    %29 = arith.subf %25, %28 : vector<8x8xf32>
    %30 = math.exp %29 : vector<8x8xf32>
    %cst_20 = arith.constant dense<0.000000e+00> : vector<8xf32>
    %31 = vector.multi_reduction <add>, %30, %cst_20 [1] : vector<8x8xf32> to vector<8xf32>
    %32 = vector.shape_cast %31 : vector<8xf32> to vector<8x1xf32>
    %33 = tpu.reciprocal %32 {approx = true} : vector<8x1xf32> -> vector<8x1xf32>
    %34 = vector.broadcast %33 : vector<8x1xf32> to vector<8x8xf32>
    %35 = arith.mulf %30, %34 : vector<8x8xf32>
    %36 = arith.truncf %35 : vector<8x8xf32> to vector<8x8xbf16>
    %cst_21 = arith.constant dense<0.000000e+00> : vector<8x8xf32>
    %37 = tpu.matmul %36, %20, %cst_21 {dimension_numbers = #tpu.dot_dimension_numbers<[1], [0], [0], [1], [0, 0, 1, 1], [], []>} : vector<8x8xbf16>, vector<8x8xbf16>, vector<8x8xf32> -> vector<8x8xf32>
    %c0_22 = arith.constant 0 : index
    %c0_23 = arith.constant 0 : index
    %38 = vector.load %arg12[%c0_22, %c0_23] : memref<8x32xf32, #tpu.memory_space<vmem>>, vector<8x32xf32>
    %39 = arith.truncf %37 : vector<8x8xf32> to vector<8x8xbf16>
    %c0_24 = arith.constant 0 : index
    %c0_25 = arith.constant 0 : index
    %c0_26 = arith.constant 0 : index
    %40 = vector.load %arg7[%c0_24, %c0_25, %c0_26] : memref<4x8x32xbf16, #tpu.memory_space<vmem>>, vector<1x8x32xbf16>
    %41 = vector.shape_cast %40 : vector<1x8x32xbf16> to vector<8x32xbf16>
    %cst_27 = arith.constant dense<0.000000e+00> : vector<8x32xf32>
    %42 = tpu.matmul %39, %41, %cst_27 {dimension_numbers = #tpu.dot_dimension_numbers<[1], [0], [0], [1], [0, 0, 1, 1], [], []>} : vector<8x8xbf16>, vector<8x32xbf16>, vector<8x32xf32> -> vector<8x32xf32>
    %43 = arith.addf %38, %42 : vector<8x32xf32>
    %c0_28 = arith.constant 0 : index
    %c0_29 = arith.constant 0 : index
    %44 = vector.load %arg12[%c0_28, %c0_29] : memref<8x32xf32, #tpu.memory_space<vmem>>, vector<8x32xf32>
    tpu.vector_store %arg12[%c0_28, %c0_29], %43 {strides = array<i32>} : memref<8x32xf32, #tpu.memory_space<vmem>>, vector<8x32xf32>,
    %c0_30 = arith.constant 0 : index
    %c1 = arith.constant 1 : index
    %c0_31 = arith.constant 0 : index
    %c0_32 = arith.constant 0 : index
    %45 = vector.load %arg2[%c0_30, %c1, %c0_31, %c0_32] : memref<1x4x8x8xbf16, #tpu.memory_space<vmem>>, vector<1x1x8x8xbf16>
    %46 = vector.shape_cast %45 : vector<1x1x8x8xbf16> to vector<8x8xbf16>
    %c0_33 = arith.constant 0 : index
    %c1_34 = arith.constant 1 : index
    %c0_35 = arith.constant 0 : index
    %c0_36 = arith.constant 0 : index
    %47 = vector.load %arg3[%c0_33, %c1_34, %c0_35, %c0_36] : memref<1x4x8x8xbf16, #tpu.memory_space<vmem>>, vector<1x1x8x8xbf16>
    %48 = vector.shape_cast %47 : vector<1x1x8x8xbf16> to vector<8x8xbf16>
    %c0_37 = arith.constant 0 : index
    %c1_38 = arith.constant 1 : index
    %c0_39 = arith.constant 0 : index
    %c0_40 = arith.constant 0 : index
    %49 = vector.load %arg4[%c0_37, %c1_38, %c0_39, %c0_40] : memref<1x4x8x8xbf16, #tpu.memory_space<vmem>>, vector<1x1x8x8xbf16>
    %50 = vector.shape_cast %49 : vector<1x1x8x8xbf16> to vector<8x8xbf16>
    %cst_41 = arith.constant dense<0.000000e+00> : vector<8x8xf32>
    %51 = tpu.matmul %46, %48, %cst_41 {dimension_numbers = #tpu.dot_dimension_numbers<[1], [1], [0], [0], [0, 0, 1, 0], [], []>} : vector<8x8xbf16>, vector<8x8xbf16>, vector<8x8xf32> -> vector<8x8xf32>
    %cst_42 = arith.constant 0.353553385 : f32
    %52 = vector.broadcast %cst_42 : f32 to vector<8x8xf32>
    %53 = arith.mulf %51, %52 : vector<8x8xf32>
    %cst_43 = arith.constant -1.000000e+20 : f32
    %54 = vector.broadcast %cst_43 : f32 to vector<8x8xf32>
    %55 = arith.select %12, %53, %54 : vector<8x8xi1>, vector<8x8xf32>
    %cst_44 = arith.constant dense<0xFF800000> : vector<8xf32>
    %56 = vector.multi_reduction <maximumf>, %55, %cst_44 [1] : vector<8x8xf32> to vector<8xf32>
    %57 = vector.shape_cast %56 : vector<8xf32> to vector<8x1xf32>
    %58 = vector.broadcast %57 : vector<8x1xf32> to vector<8x8xf32>
    %59 = arith.subf %55, %58 : vector<8x8xf32>
    %60 = math.exp %59 : vector<8x8xf32>
    %cst_45 = arith.constant dense<0.000000e+00> : vector<8xf32>
    %61 = vector.multi_reduction <add>, %60, %cst_45 [1] : vector<8x8xf32> to vector<8xf32>
    %62 = vector.shape_cast %61 : vector<8xf32> to vector<8x1xf32>
    %63 = tpu.reciprocal %62 {approx = true} : vector<8x1xf32> -> vector<8x1xf32>
    %64 = vector.broadcast %63 : vector<8x1xf32> to vector<8x8xf32>
    %65 = arith.mulf %60, %64 : vector<8x8xf32>
    %66 = arith.truncf %65 : vector<8x8xf32> to vector<8x8xbf16>
    %cst_46 = arith.constant dense<0.000000e+00> : vector<8x8xf32>
    %67 = tpu.matmul %66, %50, %cst_46 {dimension_numbers = #tpu.dot_dimension_numbers<[1], [0], [0], [1], [0, 0, 1, 1], [], []>} : vector<8x8xbf16>, vector<8x8xbf16>, vector<8x8xf32> -> vector<8x8xf32>
    %c0_47 = arith.constant 0 : index
    %c0_48 = arith.constant 0 : index
    %68 = vector.load %arg12[%c0_47, %c0_48] : memref<8x32xf32, #tpu.memory_space<vmem>>, vector<8x32xf32>
    %69 = arith.truncf %67 : vector<8x8xf32> to vector<8x8xbf16>
    %c1_49 = arith.constant 1 : index
    %c0_50 = arith.constant 0 : index
    %c0_51 = arith.constant 0 : index
    %70 = vector.load %arg7[%c1_49, %c0_50, %c0_51] : memref<4x8x32xbf16, #tpu.memory_space<vmem>>, vector<1x8x32xbf16>
    %71 = vector.shape_cast %70 : vector<1x8x32xbf16> to vector<8x32xbf16>
    %cst_52 = arith.constant dense<0.000000e+00> : vector<8x32xf32>
    %72 = tpu.matmul %69, %71, %cst_52 {dimension_numbers = #tpu.dot_dimension_numbers<[1], [0], [0], [1], [0, 0, 1, 1], [], []>} : vector<8x8xbf16>, vector<8x32xbf16>, vector<8x32xf32> -> vector<8x32xf32>
    %73 = arith.addf %68, %72 : vector<8x32xf32>
    %c0_53 = arith.constant 0 : index
    %c0_54 = arith.constant 0 : index
    %74 = vector.load %arg12[%c0_53, %c0_54] : memref<8x32xf32, #tpu.memory_space<vmem>>, vector<8x32xf32>
    tpu.vector_store %arg12[%c0_53, %c0_54], %73 {strides = array<i32>} : memref<8x32xf32, #tpu.memory_space<vmem>>, vector<8x32xf32>,
    %c0_55 = arith.constant 0 : index
    %c2 = arith.constant 2 : index
    %c0_56 = arith.constant 0 : index
    %c0_57 = arith.constant 0 : index
    %75 = vector.load %arg2[%c0_55, %c2, %c0_56, %c0_57] : memref<1x4x8x8xbf16, #tpu.memory_space<vmem>>, vector<1x1x8x8xbf16>
    %76 = vector.shape_cast %75 : vector<1x1x8x8xbf16> to vector<8x8xbf16>
    %c0_58 = arith.constant 0 : index
    %c2_59 = arith.constant 2 : index
    %c0_60 = arith.constant 0 : index
    %c0_61 = arith.constant 0 : index
    %77 = vector.load %arg3[%c0_58, %c2_59, %c0_60, %c0_61] : memref<1x4x8x8xbf16, #tpu.memory_space<vmem>>, vector<1x1x8x8xbf16>
    %78 = vector.shape_cast %77 : vector<1x1x8x8xbf16> to vector<8x8xbf16>
    %c0_62 = arith.constant 0 : index
    %c2_63 = arith.constant 2 : index
    %c0_64 = arith.constant 0 : index
    %c0_65 = arith.constant 0 : index
    %79 = vector.load %arg4[%c0_62, %c2_63, %c0_64, %c0_65] : memref<1x4x8x8xbf16, #tpu.memory_space<vmem>>, vector<1x1x8x8xbf16>
    %80 = vector.shape_cast %79 : vector<1x1x8x8xbf16> to vector<8x8xbf16>
    %cst_66 = arith.constant dense<0.000000e+00> : vector<8x8xf32>
    %81 = tpu.matmul %76, %78, %cst_66 {dimension_numbers = #tpu.dot_dimension_numbers<[1], [1], [0], [0], [0, 0, 1, 0], [], []>} : vector<8x8xbf16>, vector<8x8xbf16>, vector<8x8xf32> -> vector<8x8xf32>
    %cst_67 = arith.constant 0.353553385 : f32
    %82 = vector.broadcast %cst_67 : f32 to vector<8x8xf32>
    %83 = arith.mulf %81, %82 : vector<8x8xf32>
    %cst_68 = arith.constant -1.000000e+20 : f32
    %84 = vector.broadcast %cst_68 : f32 to vector<8x8xf32>
    %85 = arith.select %12, %83, %84 : vector<8x8xi1>, vector<8x8xf32>
    %cst_69 = arith.constant dense<0xFF800000> : vector<8xf32>
    %86 = vector.multi_reduction <maximumf>, %85, %cst_69 [1] : vector<8x8xf32> to vector<8xf32>
    %87 = vector.shape_cast %86 : vector<8xf32> to vector<8x1xf32>
    %88 = vector.broadcast %87 : vector<8x1xf32> to vector<8x8xf32>
    %89 = arith.subf %85, %88 : vector<8x8xf32>
    %90 = math.exp %89 : vector<8x8xf32>
    %cst_70 = arith.constant dense<0.000000e+00> : vector<8xf32>
    %91 = vector.multi_reduction <add>, %90, %cst_70 [1] : vector<8x8xf32> to vector<8xf32>
    %92 = vector.shape_cast %91 : vector<8xf32> to vector<8x1xf32>
    %93 = tpu.reciprocal %92 {approx = true} : vector<8x1xf32> -> vector<8x1xf32>
    %94 = vector.broadcast %93 : vector<8x1xf32> to vector<8x8xf32>
    %95 = arith.mulf %90, %94 : vector<8x8xf32>
    %96 = arith.truncf %95 : vector<8x8xf32> to vector<8x8xbf16>
    %cst_71 = arith.constant dense<0.000000e+00> : vector<8x8xf32>
    %97 = tpu.matmul %96, %80, %cst_71 {dimension_numbers = #tpu.dot_dimension_numbers<[1], [0], [0], [1], [0, 0, 1, 1], [], []>} : vector<8x8xbf16>, vector<8x8xbf16>, vector<8x8xf32> -> vector<8x8xf32>
    %c0_72 = arith.constant 0 : index
    %c0_73 = arith.constant 0 : index
    %98 = vector.load %arg12[%c0_72, %c0_73] : memref<8x32xf32, #tpu.memory_space<vmem>>, vector<8x32xf32>
    %99 = arith.truncf %97 : vector<8x8xf32> to vector<8x8xbf16>
    %c2_74 = arith.constant 2 : index
    %c0_75 = arith.constant 0 : index
    %c0_76 = arith.constant 0 : index
    %100 = vector.load %arg7[%c2_74, %c0_75, %c0_76] : memref<4x8x32xbf16, #tpu.memory_space<vmem>>, vector<1x8x32xbf16>
    %101 = vector.shape_cast %100 : vector<1x8x32xbf16> to vector<8x32xbf16>
    %cst_77 = arith.constant dense<0.000000e+00> : vector<8x32xf32>
    %102 = tpu.matmul %99, %101, %cst_77 {dimension_numbers = #tpu.dot_dimension_numbers<[1], [0], [0], [1], [0, 0, 1, 1], [], []>} : vector<8x8xbf16>, vector<8x32xbf16>, vector<8x32xf32> -> vector<8x32xf32>
    %103 = arith.addf %98, %102 : vector<8x32xf32>
    %c0_78 = arith.constant 0 : index
    %c0_79 = arith.constant 0 : index
    %104 = vector.load %arg12[%c0_78, %c0_79] : memref<8x32xf32, #tpu.memory_space<vmem>>, vector<8x32xf32>
    tpu.vector_store %arg12[%c0_78, %c0_79], %103 {strides = array<i32>} : memref<8x32xf32, #tpu.memory_space<vmem>>, vector<8x32xf32>,
    %c0_80 = arith.constant 0 : index
    %c3 = arith.constant 3 : index
    %c0_81 = arith.constant 0 : index
    %c0_82 = arith.constant 0 : index
    %105 = vector.load %arg2[%c0_80, %c3, %c0_81, %c0_82] : memref<1x4x8x8xbf16, #tpu.memory_space<vmem>>, vector<1x1x8x8xbf16>
    %106 = vector.shape_cast %105 : vector<1x1x8x8xbf16> to vector<8x8xbf16>
    %c0_83 = arith.constant 0 : index
    %c3_84 = arith.constant 3 : index
    %c0_85 = arith.constant 0 : index
    %c0_86 = arith.constant 0 : index
    %107 = vector.load %arg3[%c0_83, %c3_84, %c0_85, %c0_86] : memref<1x4x8x8xbf16, #tpu.memory_space<vmem>>, vector<1x1x8x8xbf16>
    %108 = vector.shape_cast %107 : vector<1x1x8x8xbf16> to vector<8x8xbf16>
    %c0_87 = arith.constant 0 : index
    %c3_88 = arith.constant 3 : index
    %c0_89 = arith.constant 0 : index
    %c0_90 = arith.constant 0 : index
    %109 = vector.load %arg4[%c0_87, %c3_88, %c0_89, %c0_90] : memref<1x4x8x8xbf16, #tpu.memory_space<vmem>>, vector<1x1x8x8xbf16>
    %110 = vector.shape_cast %109 : vector<1x1x8x8xbf16> to vector<8x8xbf16>
    %cst_91 = arith.constant dense<0.000000e+00> : vector<8x8xf32>
    %111 = tpu.matmul %106, %108, %cst_91 {dimension_numbers = #tpu.dot_dimension_numbers<[1], [1], [0], [0], [0, 0, 1, 0], [], []>} : vector<8x8xbf16>, vector<8x8xbf16>, vector<8x8xf32> -> vector<8x8xf32>
    %cst_92 = arith.constant 0.353553385 : f32
    %112 = vector.broadcast %cst_92 : f32 to vector<8x8xf32>
    %113 = arith.mulf %111, %112 : vector<8x8xf32>
    %cst_93 = arith.constant -1.000000e+20 : f32
    %114 = vector.broadcast %cst_93 : f32 to vector<8x8xf32>
    %115 = arith.select %12, %113, %114 : vector<8x8xi1>, vector<8x8xf32>
    %cst_94 = arith.constant dense<0xFF800000> : vector<8xf32>
    %116 = vector.multi_reduction <maximumf>, %115, %cst_94 [1] : vector<8x8xf32> to vector<8xf32>
    %117 = vector.shape_cast %116 : vector<8xf32> to vector<8x1xf32>
    %118 = vector.broadcast %117 : vector<8x1xf32> to vector<8x8xf32>
    %119 = arith.subf %115, %118 : vector<8x8xf32>
    %120 = math.exp %119 : vector<8x8xf32>
    %cst_95 = arith.constant dense<0.000000e+00> : vector<8xf32>
    %121 = vector.multi_reduction <add>, %120, %cst_95 [1] : vector<8x8xf32> to vector<8xf32>
    %122 = vector.shape_cast %121 : vector<8xf32> to vector<8x1xf32>
    %123 = tpu.reciprocal %122 {approx = true} : vector<8x1xf32> -> vector<8x1xf32>
    %124 = vector.broadcast %123 : vector<8x1xf32> to vector<8x8xf32>
    %125 = arith.mulf %120, %124 : vector<8x8xf32>
    %126 = arith.truncf %125 : vector<8x8xf32> to vector<8x8xbf16>
    %cst_96 = arith.constant dense<0.000000e+00> : vector<8x8xf32>
    %127 = tpu.matmul %126, %110, %cst_96 {dimension_numbers = #tpu.dot_dimension_numbers<[1], [0], [0], [1], [0, 0, 1, 1], [], []>} : vector<8x8xbf16>, vector<8x8xbf16>, vector<8x8xf32> -> vector<8x8xf32>
    %c0_97 = arith.constant 0 : index
    %c0_98 = arith.constant 0 : index
    %128 = vector.load %arg12[%c0_97, %c0_98] : memref<8x32xf32, #tpu.memory_space<vmem>>, vector<8x32xf32>
    %129 = arith.truncf %127 : vector<8x8xf32> to vector<8x8xbf16>
    %c3_99 = arith.constant 3 : index
    %c0_100 = arith.constant 0 : index
    %c0_101 = arith.constant 0 : index
    %130 = vector.load %arg7[%c3_99, %c0_100, %c0_101] : memref<4x8x32xbf16, #tpu.memory_space<vmem>>, vector<1x8x32xbf16>
    %131 = vector.shape_cast %130 : vector<1x8x32xbf16> to vector<8x32xbf16>
    %cst_102 = arith.constant dense<0.000000e+00> : vector<8x32xf32>
    %132 = tpu.matmul %129, %131, %cst_102 {dimension_numbers = #tpu.dot_dimension_numbers<[1], [0], [0], [1], [0, 0, 1, 1], [], []>} : vector<8x8xbf16>, vector<8x32xbf16>, vector<8x32xf32> -> vector<8x32xf32>
    %133 = arith.addf %128, %132 : vector<8x32xf32>
    %c0_103 = arith.constant 0 : index
    %c0_104 = arith.constant 0 : index
    %134 = vector.load %arg12[%c0_103, %c0_104] : memref<8x32xf32, #tpu.memory_space<vmem>>, vector<8x32xf32>
    tpu.vector_store %arg12[%c0_103, %c0_104], %133 {strides = array<i32>} : memref<8x32xf32, #tpu.memory_space<vmem>>, vector<8x32xf32>,
    %c0_105 = arith.constant 0 : index
    %c0_106 = arith.constant 0 : index
    %c0_107 = arith.constant 0 : index
    %135 = vector.load %arg5[%c0_105, %c0_106, %c0_107] : memref<1x8x32xf32, #tpu.memory_space<vmem>>, vector<1x8x32xf32>
    %136 = vector.shape_cast %135 : vector<1x8x32xf32> to vector<8x32xf32>
    %c0_108 = arith.constant 0 : index
    %c0_109 = arith.constant 0 : index
    %137 = vector.load %arg12[%c0_108, %c0_109] : memref<8x32xf32, #tpu.memory_space<vmem>>, vector<8x32xf32>
    %138 = arith.addf %136, %137 : vector<8x32xf32>
    %c0_110 = arith.constant 0 : index
    %c0_111 = arith.constant 0 : index
    %139 = vector.load %arg8[%c0_110, %c0_111] : memref<1x32xf32, #tpu.memory_space<vmem>>, vector<1x32xf32>
    %140 = vector.broadcast %139 : vector<1x32xf32> to vector<8x32xf32>
    %141 = arith.addf %138, %140 : vector<8x32xf32>
    %cst_112 = arith.constant dense<0.000000e+00> : vector<8xf32>
    %142 = vector.multi_reduction <add>, %141, %cst_112 [1] : vector<8x32xf32> to vector<8xf32>
    %143 = vector.shape_cast %142 : vector<8xf32> to vector<8x1xf32>
    %cst_113 = arith.constant 3.200000e+01 : f32
    %144 = vector.broadcast %cst_113 : f32 to vector<8x1xf32>
    %145 = arith.divf %143, %144 : vector<8x1xf32>
    %146 = vector.broadcast %145 : vector<8x1xf32> to vector<8x32xf32>
    %147 = arith.subf %141, %146 : vector<8x32xf32>
    %148 = arith.mulf %147, %147 : vector<8x32xf32>
    %cst_114 = arith.constant dense<0.000000e+00> : vector<8xf32>
    %149 = vector.multi_reduction <add>, %148, %cst_114 [1] : vector<8x32xf32> to vector<8xf32>
    %150 = vector.shape_cast %149 : vector<8xf32> to vector<8x1xf32>
    %cst_115 = arith.constant 0.0322580636 : f32
    %151 = vector.broadcast %cst_115 : f32 to vector<8x1xf32>
    %152 = arith.mulf %150, %151 : vector<8x1xf32>
    %153 = math.sqrt %152 : vector<8x1xf32>
    %cst_116 = arith.constant 9.99999997E-7 : f32
    %154 = vector.broadcast %cst_116 : f32 to vector<8x1xf32>
    %155 = arith.addf %153, %154 : vector<8x1xf32>
    %156 = tpu.reciprocal %155 : vector<8x1xf32> -> vector<8x1xf32>
    %c0_117 = arith.constant 0 : index
    %c0_118 = arith.constant 0 : index
    %157 = vector.load %arg9[%c0_117, %c0_118] : memref<1x32xf32, #tpu.memory_space<vmem>>, vector<1x32xf32>
    %158 = vector.broadcast %145 : vector<8x1xf32> to vector<8x32xf32>
    %159 = arith.subf %141, %158 : vector<8x32xf32>
    %160 = vector.broadcast %157 : vector<1x32xf32> to vector<8x32xf32>
    %161 = arith.mulf %160, %159 : vector<8x32xf32>
    %162 = vector.broadcast %156 : vector<8x1xf32> to vector<8x32xf32>
    %163 = arith.mulf %161, %162 : vector<8x32xf32>
    %c0_119 = arith.constant 0 : index
    %c0_120 = arith.constant 0 : index
    %164 = vector.load %arg10[%c0_119, %c0_120] : memref<1x32xf32, #tpu.memory_space<vmem>>, vector<1x32xf32>
    %165 = vector.broadcast %164 : vector<1x32xf32> to vector<8x32xf32>
    %166 = arith.addf %163, %165 : vector<8x32xf32>
    %c0_121 = arith.constant 0 : index
    %c0_122 = arith.constant 0 : index
    %c0_123 = arith.constant 0 : index
    %167 = vector.load %arg11[%c0_121, %c0_122, %c0_123] : memref<1x8x32xf32, #tpu.memory_space<vmem>>, vector<1x8x32xf32>
    %168 = vector.shape_cast %167 : vector<1x8x32xf32> to vector<8x32xf32>
    %169 = vector.shape_cast %166 : vector<8x32xf32> to vector<1x8x32xf32>
    tpu.vector_store %arg11[%c0_121, %c0_122, %c0_123], %169 {strides = array<i32>} : memref<1x8x32xf32, #tpu.memory_space<vmem>>, vector<1x8x32xf32>,
    return
  }
  func.func @transform_0(%arg0: i32, %arg1: i32) -> (i32, i32, i32, i32) {
    %c0_i32 = arith.constant 0 : i32
    %c0_i32_0 = arith.constant 0 : i32
    %c0_i32_1 = arith.constant 0 : i32
    return %arg0, %c0_i32, %arg1, %c0_i32_0 : i32, i32, i32, i32
  }
  func.func @transform_1(%arg0: i32, %arg1: i32) -> (i32, i32, i32, i32) {
    %c0_i32 = arith.constant 0 : i32
    %c0_i32_0 = arith.constant 0 : i32
    %c0_i32_1 = arith.constant 0 : i32
    %c0_i32_2 = arith.constant 0 : i32
    return %arg0, %c0_i32, %c0_i32_0, %c0_i32_1 : i32, i32, i32, i32
  }
  func.func @transform_2(%arg0: i32, %arg1: i32) -> (i32, i32, i32, i32) {
    %c0_i32 = arith.constant 0 : i32
    %c0_i32_0 = arith.constant 0 : i32
    %c0_i32_1 = arith.constant 0 : i32
    %c0_i32_2 = arith.constant 0 : i32
    return %arg0, %c0_i32, %c0_i32_0, %c0_i32_1 : i32, i32, i32, i32
  }
  func.func @transform_3(%arg0: i32, %arg1: i32) -> (i32, i32, i32) {
    %c0_i32 = arith.constant 0 : i32
    %c0_i32_0 = arith.constant 0 : i32
    return %arg0, %arg1, %c0_i32 : i32, i32, i32
  }
  func.func @transform_4(%arg0: i32, %arg1: i32) -> (i32, i32, i32) {
    %c0_i32 = arith.constant 0 : i32
    %c0_i32_0 = arith.constant 0 : i32
    %c0_i32_1 = arith.constant 0 : i32
    return %arg0, %c0_i32, %c0_i32_0 : i32, i32, i32
  }
  func.func @transform_5(%arg0: i32, %arg1: i32) -> (i32, i32, i32) {
    %c0_i32 = arith.constant 0 : i32
    %c0_i32_0 = arith.constant 0 : i32
    %c0_i32_1 = arith.constant 0 : i32
    %c0_i32_2 = arith.constant 0 : i32
    return %c0_i32, %c0_i32_0, %c0_i32_1 : i32, i32, i32
  }
  func.func @transform_6(%arg0: i32, %arg1: i32) -> (i32, i32) {
    %c0_i32 = arith.constant 0 : i32
    %c0_i32_0 = arith.constant 0 : i32
    %c0_i32_1 = arith.constant 0 : i32
    return %c0_i32, %c0_i32_0 : i32, i32
  }
  func.func @transform_7(%arg0: i32, %arg1: i32) -> (i32, i32) {
    %c0_i32 = arith.constant 0 : i32
    %c0_i32_0 = arith.constant 0 : i32
    %c0_i32_1 = arith.constant 0 : i32
    return %c0_i32, %c0_i32_0 : i32, i32
  }
  func.func @transform_8(%arg0: i32, %arg1: i32) -> (i32, i32) {
    %c0_i32 = arith.constant 0 : i32
    %c0_i32_0 = arith.constant 0 : i32
    %c0_i32_1 = arith.constant 0 : i32
    return %c0_i32, %c0_i32_0 : i32, i32
  }
  func.func @transform_9(%arg0: i32, %arg1: i32) -> (i32, i32, i32) {
    %c0_i32 = arith.constant 0 : i32
    %c0_i32_0 = arith.constant 0 : i32
    return %arg0, %arg1, %c0_i32 : i32, i32, i32
  }
}

module attributes {stable_mosaic.version = 11 : i64} {
  func.func @_mha_ln_kernel(%arg0: i32, %arg1: i32, %arg2: memref<1x4x8x8xbf16, #tpu.memory_space<vmem>>, %arg3: memref<1x4x8x8xbf16, #tpu.memory_space<vmem>>, %arg4: memref<1x4x8x8xbf16, #tpu.memory_space<vmem>>, %arg5: memref<1x8x32xf32, #tpu.memory_space<vmem>>, %arg6: memref<1x1x8xi32, #tpu.memory_space<vmem>>, %arg7: memref<4x8x32xbf16, #tpu.memory_space<vmem>>, %arg8: memref<1x32xf32, #tpu.memory_space<vmem>>, %arg9: memref<1x32xf32, #tpu.memory_space<vmem>>, %arg10: memref<1x32xf32, #tpu.memory_space<vmem>>, %arg11: memref<1x8x32xf32, #tpu.memory_space<vmem>>, %arg12: memref<8x32xf32, #tpu.memory_space<vmem>>) attributes {dimension_semantics = [#tpu.dimension_semantics<parallel>, #tpu.dimension_semantics<parallel>], iteration_bounds = array<i64: 2, 1>, scalar_prefetch = 0 : i64, scratch_operands = 1 : i64, tpu.core_type = #tpu.core_type<tc>, window_params = [{transform_indices = @transform_0, window_bounds = array<i64: 1, 4, 8, 8>}, {transform_indices = @transform_1, window_bounds = array<i64: 1, 4, 8, 8>}, {transform_indices = @transform_2, window_bounds = array<i64: 1, 4, 8, 8>}, {transform_indices = @transform_3, window_bounds = array<i64: 1, 8, 32>}, {transform_indices = @transform_4, window_bounds = array<i64: 1, 1, 8>}, {pipeline_mode = #tpu.pipeline_mode<synchronous>, transform_indices = @transform_5, window_bounds = array<i64: 4, 8, 32>}, {pipeline_mode = #tpu.pipeline_mode<synchronous>, transform_indices = @transform_6, window_bounds = array<i64: 1, 32>}, {pipeline_mode = #tpu.pipeline_mode<synchronous>, transform_indices = @transform_7, window_bounds = array<i64: 1, 32>}, {pipeline_mode = #tpu.pipeline_mode<synchronous>, transform_indices = @transform_8, window_bounds = array<i64: 1, 32>}, {transform_indices = @transform_9, window_bounds = array<i64: 1, 8, 32>}]} {
    %c0 = arith.constant 0 : index
    %c0_0 = arith.constant 0 : index
    %c0_1 = arith.constant 0 : index
    %0 = vector.load %arg6[%c0, %c0_0, %c0_1] : memref<1x1x8xi32, #tpu.memory_space<vmem>>, vector<1x1x8xi32>
    %1 = vector.shape_cast %0 : vector<1x1x8xi32> to vector<1x8xi32>
    %c0_i32 = arith.constant 0 : i32
    %2 = vector.broadcast %c0_i32 : i32 to vector<1x8xi32>
    %3 = arith.cmpi ne, %1, %2 : vector<1x8xi32>
    %4 = vector.shape_cast %3 : vector<1x8xi1> to vector<1x8xi1>
    %5 = vector.broadcast %4 : vector<1x8xi1> to vector<8x8xi1>
    %cst = arith.constant 0.000000e+00 : f32
    %6 = vector.broadcast %cst : f32 to vector<8x32xf32>
    %c0_2 = arith.constant 0 : index
    %c0_3 = arith.constant 0 : index
    %7 = vector.load %arg12[%c0_2, %c0_3] : memref<8x32xf32, #tpu.memory_space<vmem>>, vector<8x32xf32>
    tpu.vector_store %arg12[%c0_2, %c0_3], %6 {strides = array<i32>} : memref<8x32xf32, #tpu.memory_space<vmem>>, vector<8x32xf32>,
    %c0_4 = arith.constant 0 : index
    %c0_5 = arith.constant 0 : index
    %c0_6 = arith.constant 0 : index
    %c0_7 = arith.constant 0 : index
    %8 = vector.load %arg2[%c0_4, %c0_5, %c0_6, %c0_7] : memref<1x4x8x8xbf16, #tpu.memory_space<vmem>>, vector<1x1x8x8xbf16>
    %9 = vector.shape_cast %8 : vector<1x1x8x8xbf16> to vector<8x8xbf16>
    %c0_8 = arith.constant 0 : index
    %c0_9 = arith.constant 0 : index
    %c0_10 = arith.constant 0 : index
    %c0_11 = arith.constant 0 : index
    %10 = vector.load %arg3[%c0_8, %c0_9, %c0_10, %c0_11] : memref<1x4x8x8xbf16, #tpu.memory_space<vmem>>, vector<1x1x8x8xbf16>
    %11 = vector.shape_cast %10 : vector<1x1x8x8xbf16> to vector<8x8xbf16>
    %c0_12 = arith.constant 0 : index
    %c0_13 = arith.constant 0 : index
    %c0_14 = arith.constant 0 : index
    %c0_15 = arith.constant 0 : index
    %12 = vector.load %arg4[%c0_12, %c0_13, %c0_14, %c0_15] : memref<1x4x8x8xbf16, #tpu.memory_space<vmem>>, vector<1x1x8x8xbf16>
    %13 = vector.shape_cast %12 : vector<1x1x8x8xbf16> to vector<8x8xbf16>
    %cst_16 = arith.constant dense<0.000000e+00> : vector<8x8xf32>
    %14 = tpu.matmul %9, %11, %cst_16 {dimension_numbers = #tpu.dot_dimension_numbers<[1], [1], [0], [0], [0, 0, 1, 0], [], []>} : vector<8x8xbf16>, vector<8x8xbf16>, vector<8x8xf32> -> vector<8x8xf32>
    %cst_17 = arith.constant 0.353553385 : f32
    %15 = vector.broadcast %cst_17 : f32 to vector<8x8xf32>
    %16 = arith.mulf %14, %15 : vector<8x8xf32>
    %cst_18 = arith.constant -1.000000e+20 : f32
    %17 = vector.broadcast %cst_18 : f32 to vector<8x8xf32>
    %18 = arith.select %5, %16, %17 : vector<8x8xi1>, vector<8x8xf32>
    %cst_19 = arith.constant dense<0xFF800000> : vector<8xf32>
    %19 = vector.multi_reduction <maximumf>, %18, %cst_19 [1] : vector<8x8xf32> to vector<8xf32>
    %20 = vector.shape_cast %19 : vector<8xf32> to vector<8x1xf32>
    %21 = vector.broadcast %20 : vector<8x1xf32> to vector<8x8xf32>
    %22 = arith.subf %18, %21 : vector<8x8xf32>
    %23 = math.exp %22 : vector<8x8xf32>
    %cst_20 = arith.constant dense<0.000000e+00> : vector<8xf32>
    %24 = vector.multi_reduction <add>, %23, %cst_20 [1] : vector<8x8xf32> to vector<8xf32>
    %25 = vector.shape_cast %24 : vector<8xf32> to vector<8x1xf32>
    %26 = tpu.reciprocal %25 {approx = true} : vector<8x1xf32> -> vector<8x1xf32>
    %27 = vector.broadcast %26 : vector<8x1xf32> to vector<8x8xf32>
    %28 = arith.mulf %23, %27 : vector<8x8xf32>
    %29 = arith.truncf %28 : vector<8x8xf32> to vector<8x8xbf16>
    %cst_21 = arith.constant dense<0.000000e+00> : vector<8x8xf32>
    %30 = tpu.matmul %29, %13, %cst_21 {dimension_numbers = #tpu.dot_dimension_numbers<[1], [0], [0], [1], [0, 0, 1, 1], [], []>} : vector<8x8xbf16>, vector<8x8xbf16>, vector<8x8xf32> -> vector<8x8xf32>
    %c0_22 = arith.constant 0 : index
    %c0_23 = arith.constant 0 : index
    %31 = vector.load %arg12[%c0_22, %c0_23] : memref<8x32xf32, #tpu.memory_space<vmem>>, vector<8x32xf32>
    %32 = arith.truncf %30 : vector<8x8xf32> to vector<8x8xbf16>
    %c0_24 = arith.constant 0 : index
    %c0_25 = arith.constant 0 : index
    %c0_26 = arith.constant 0 : index
    %33 = vector.load %arg7[%c0_24, %c0_25, %c0_26] : memref<4x8x32xbf16, #tpu.memory_space<vmem>>, vector<1x8x32xbf16>
    %34 = vector.shape_cast %33 : vector<1x8x32xbf16> to vector<8x32xbf16>
    %cst_27 = arith.constant dense<0.000000e+00> : vector<8x32xf32>
    %35 = tpu.matmul %32, %34, %cst_27 {dimension_numbers = #tpu.dot_dimension_numbers<[1], [0], [0], [1], [0, 0, 1, 1], [], []>} : vector<8x8xbf16>, vector<8x32xbf16>, vector<8x32xf32> -> vector<8x32xf32>
    %36 = arith.addf %31, %35 : vector<8x32xf32>
    %c0_28 = arith.constant 0 : index
    %c0_29 = arith.constant 0 : index
    %37 = vector.load %arg12[%c0_28, %c0_29] : memref<8x32xf32, #tpu.memory_space<vmem>>, vector<8x32xf32>
    tpu.vector_store %arg12[%c0_28, %c0_29], %36 {strides = array<i32>} : memref<8x32xf32, #tpu.memory_space<vmem>>, vector<8x32xf32>,
    %c0_30 = arith.constant 0 : index
    %c1 = arith.constant 1 : index
    %c0_31 = arith.constant 0 : index
    %c0_32 = arith.constant 0 : index
    %38 = vector.load %arg2[%c0_30, %c1, %c0_31, %c0_32] : memref<1x4x8x8xbf16, #tpu.memory_space<vmem>>, vector<1x1x8x8xbf16>
    %39 = vector.shape_cast %38 : vector<1x1x8x8xbf16> to vector<8x8xbf16>
    %c0_33 = arith.constant 0 : index
    %c1_34 = arith.constant 1 : index
    %c0_35 = arith.constant 0 : index
    %c0_36 = arith.constant 0 : index
    %40 = vector.load %arg3[%c0_33, %c1_34, %c0_35, %c0_36] : memref<1x4x8x8xbf16, #tpu.memory_space<vmem>>, vector<1x1x8x8xbf16>
    %41 = vector.shape_cast %40 : vector<1x1x8x8xbf16> to vector<8x8xbf16>
    %c0_37 = arith.constant 0 : index
    %c1_38 = arith.constant 1 : index
    %c0_39 = arith.constant 0 : index
    %c0_40 = arith.constant 0 : index
    %42 = vector.load %arg4[%c0_37, %c1_38, %c0_39, %c0_40] : memref<1x4x8x8xbf16, #tpu.memory_space<vmem>>, vector<1x1x8x8xbf16>
    %43 = vector.shape_cast %42 : vector<1x1x8x8xbf16> to vector<8x8xbf16>
    %cst_41 = arith.constant dense<0.000000e+00> : vector<8x8xf32>
    %44 = tpu.matmul %39, %41, %cst_41 {dimension_numbers = #tpu.dot_dimension_numbers<[1], [1], [0], [0], [0, 0, 1, 0], [], []>} : vector<8x8xbf16>, vector<8x8xbf16>, vector<8x8xf32> -> vector<8x8xf32>
    %cst_42 = arith.constant 0.353553385 : f32
    %45 = vector.broadcast %cst_42 : f32 to vector<8x8xf32>
    %46 = arith.mulf %44, %45 : vector<8x8xf32>
    %cst_43 = arith.constant -1.000000e+20 : f32
    %47 = vector.broadcast %cst_43 : f32 to vector<8x8xf32>
    %48 = arith.select %5, %46, %47 : vector<8x8xi1>, vector<8x8xf32>
    %cst_44 = arith.constant dense<0xFF800000> : vector<8xf32>
    %49 = vector.multi_reduction <maximumf>, %48, %cst_44 [1] : vector<8x8xf32> to vector<8xf32>
    %50 = vector.shape_cast %49 : vector<8xf32> to vector<8x1xf32>
    %51 = vector.broadcast %50 : vector<8x1xf32> to vector<8x8xf32>
    %52 = arith.subf %48, %51 : vector<8x8xf32>
    %53 = math.exp %52 : vector<8x8xf32>
    %cst_45 = arith.constant dense<0.000000e+00> : vector<8xf32>
    %54 = vector.multi_reduction <add>, %53, %cst_45 [1] : vector<8x8xf32> to vector<8xf32>
    %55 = vector.shape_cast %54 : vector<8xf32> to vector<8x1xf32>
    %56 = tpu.reciprocal %55 {approx = true} : vector<8x1xf32> -> vector<8x1xf32>
    %57 = vector.broadcast %56 : vector<8x1xf32> to vector<8x8xf32>
    %58 = arith.mulf %53, %57 : vector<8x8xf32>
    %59 = arith.truncf %58 : vector<8x8xf32> to vector<8x8xbf16>
    %cst_46 = arith.constant dense<0.000000e+00> : vector<8x8xf32>
    %60 = tpu.matmul %59, %43, %cst_46 {dimension_numbers = #tpu.dot_dimension_numbers<[1], [0], [0], [1], [0, 0, 1, 1], [], []>} : vector<8x8xbf16>, vector<8x8xbf16>, vector<8x8xf32> -> vector<8x8xf32>
    %c0_47 = arith.constant 0 : index
    %c0_48 = arith.constant 0 : index
    %61 = vector.load %arg12[%c0_47, %c0_48] : memref<8x32xf32, #tpu.memory_space<vmem>>, vector<8x32xf32>
    %62 = arith.truncf %60 : vector<8x8xf32> to vector<8x8xbf16>
    %c1_49 = arith.constant 1 : index
    %c0_50 = arith.constant 0 : index
    %c0_51 = arith.constant 0 : index
    %63 = vector.load %arg7[%c1_49, %c0_50, %c0_51] : memref<4x8x32xbf16, #tpu.memory_space<vmem>>, vector<1x8x32xbf16>
    %64 = vector.shape_cast %63 : vector<1x8x32xbf16> to vector<8x32xbf16>
    %cst_52 = arith.constant dense<0.000000e+00> : vector<8x32xf32>
    %65 = tpu.matmul %62, %64, %cst_52 {dimension_numbers = #tpu.dot_dimension_numbers<[1], [0], [0], [1], [0, 0, 1, 1], [], []>} : vector<8x8xbf16>, vector<8x32xbf16>, vector<8x32xf32> -> vector<8x32xf32>
    %66 = arith.addf %61, %65 : vector<8x32xf32>
    %c0_53 = arith.constant 0 : index
    %c0_54 = arith.constant 0 : index
    %67 = vector.load %arg12[%c0_53, %c0_54] : memref<8x32xf32, #tpu.memory_space<vmem>>, vector<8x32xf32>
    tpu.vector_store %arg12[%c0_53, %c0_54], %66 {strides = array<i32>} : memref<8x32xf32, #tpu.memory_space<vmem>>, vector<8x32xf32>,
    %c0_55 = arith.constant 0 : index
    %c2 = arith.constant 2 : index
    %c0_56 = arith.constant 0 : index
    %c0_57 = arith.constant 0 : index
    %68 = vector.load %arg2[%c0_55, %c2, %c0_56, %c0_57] : memref<1x4x8x8xbf16, #tpu.memory_space<vmem>>, vector<1x1x8x8xbf16>
    %69 = vector.shape_cast %68 : vector<1x1x8x8xbf16> to vector<8x8xbf16>
    %c0_58 = arith.constant 0 : index
    %c2_59 = arith.constant 2 : index
    %c0_60 = arith.constant 0 : index
    %c0_61 = arith.constant 0 : index
    %70 = vector.load %arg3[%c0_58, %c2_59, %c0_60, %c0_61] : memref<1x4x8x8xbf16, #tpu.memory_space<vmem>>, vector<1x1x8x8xbf16>
    %71 = vector.shape_cast %70 : vector<1x1x8x8xbf16> to vector<8x8xbf16>
    %c0_62 = arith.constant 0 : index
    %c2_63 = arith.constant 2 : index
    %c0_64 = arith.constant 0 : index
    %c0_65 = arith.constant 0 : index
    %72 = vector.load %arg4[%c0_62, %c2_63, %c0_64, %c0_65] : memref<1x4x8x8xbf16, #tpu.memory_space<vmem>>, vector<1x1x8x8xbf16>
    %73 = vector.shape_cast %72 : vector<1x1x8x8xbf16> to vector<8x8xbf16>
    %cst_66 = arith.constant dense<0.000000e+00> : vector<8x8xf32>
    %74 = tpu.matmul %69, %71, %cst_66 {dimension_numbers = #tpu.dot_dimension_numbers<[1], [1], [0], [0], [0, 0, 1, 0], [], []>} : vector<8x8xbf16>, vector<8x8xbf16>, vector<8x8xf32> -> vector<8x8xf32>
    %cst_67 = arith.constant 0.353553385 : f32
    %75 = vector.broadcast %cst_67 : f32 to vector<8x8xf32>
    %76 = arith.mulf %74, %75 : vector<8x8xf32>
    %cst_68 = arith.constant -1.000000e+20 : f32
    %77 = vector.broadcast %cst_68 : f32 to vector<8x8xf32>
    %78 = arith.select %5, %76, %77 : vector<8x8xi1>, vector<8x8xf32>
    %cst_69 = arith.constant dense<0xFF800000> : vector<8xf32>
    %79 = vector.multi_reduction <maximumf>, %78, %cst_69 [1] : vector<8x8xf32> to vector<8xf32>
    %80 = vector.shape_cast %79 : vector<8xf32> to vector<8x1xf32>
    %81 = vector.broadcast %80 : vector<8x1xf32> to vector<8x8xf32>
    %82 = arith.subf %78, %81 : vector<8x8xf32>
    %83 = math.exp %82 : vector<8x8xf32>
    %cst_70 = arith.constant dense<0.000000e+00> : vector<8xf32>
    %84 = vector.multi_reduction <add>, %83, %cst_70 [1] : vector<8x8xf32> to vector<8xf32>
    %85 = vector.shape_cast %84 : vector<8xf32> to vector<8x1xf32>
    %86 = tpu.reciprocal %85 {approx = true} : vector<8x1xf32> -> vector<8x1xf32>
    %87 = vector.broadcast %86 : vector<8x1xf32> to vector<8x8xf32>
    %88 = arith.mulf %83, %87 : vector<8x8xf32>
    %89 = arith.truncf %88 : vector<8x8xf32> to vector<8x8xbf16>
    %cst_71 = arith.constant dense<0.000000e+00> : vector<8x8xf32>
    %90 = tpu.matmul %89, %73, %cst_71 {dimension_numbers = #tpu.dot_dimension_numbers<[1], [0], [0], [1], [0, 0, 1, 1], [], []>} : vector<8x8xbf16>, vector<8x8xbf16>, vector<8x8xf32> -> vector<8x8xf32>
    %c0_72 = arith.constant 0 : index
    %c0_73 = arith.constant 0 : index
    %91 = vector.load %arg12[%c0_72, %c0_73] : memref<8x32xf32, #tpu.memory_space<vmem>>, vector<8x32xf32>
    %92 = arith.truncf %90 : vector<8x8xf32> to vector<8x8xbf16>
    %c2_74 = arith.constant 2 : index
    %c0_75 = arith.constant 0 : index
    %c0_76 = arith.constant 0 : index
    %93 = vector.load %arg7[%c2_74, %c0_75, %c0_76] : memref<4x8x32xbf16, #tpu.memory_space<vmem>>, vector<1x8x32xbf16>
    %94 = vector.shape_cast %93 : vector<1x8x32xbf16> to vector<8x32xbf16>
    %cst_77 = arith.constant dense<0.000000e+00> : vector<8x32xf32>
    %95 = tpu.matmul %92, %94, %cst_77 {dimension_numbers = #tpu.dot_dimension_numbers<[1], [0], [0], [1], [0, 0, 1, 1], [], []>} : vector<8x8xbf16>, vector<8x32xbf16>, vector<8x32xf32> -> vector<8x32xf32>
    %96 = arith.addf %91, %95 : vector<8x32xf32>
    %c0_78 = arith.constant 0 : index
    %c0_79 = arith.constant 0 : index
    %97 = vector.load %arg12[%c0_78, %c0_79] : memref<8x32xf32, #tpu.memory_space<vmem>>, vector<8x32xf32>
    tpu.vector_store %arg12[%c0_78, %c0_79], %96 {strides = array<i32>} : memref<8x32xf32, #tpu.memory_space<vmem>>, vector<8x32xf32>,
    %c0_80 = arith.constant 0 : index
    %c3 = arith.constant 3 : index
    %c0_81 = arith.constant 0 : index
    %c0_82 = arith.constant 0 : index
    %98 = vector.load %arg2[%c0_80, %c3, %c0_81, %c0_82] : memref<1x4x8x8xbf16, #tpu.memory_space<vmem>>, vector<1x1x8x8xbf16>
    %99 = vector.shape_cast %98 : vector<1x1x8x8xbf16> to vector<8x8xbf16>
    %c0_83 = arith.constant 0 : index
    %c3_84 = arith.constant 3 : index
    %c0_85 = arith.constant 0 : index
    %c0_86 = arith.constant 0 : index
    %100 = vector.load %arg3[%c0_83, %c3_84, %c0_85, %c0_86] : memref<1x4x8x8xbf16, #tpu.memory_space<vmem>>, vector<1x1x8x8xbf16>
    %101 = vector.shape_cast %100 : vector<1x1x8x8xbf16> to vector<8x8xbf16>
    %c0_87 = arith.constant 0 : index
    %c3_88 = arith.constant 3 : index
    %c0_89 = arith.constant 0 : index
    %c0_90 = arith.constant 0 : index
    %102 = vector.load %arg4[%c0_87, %c3_88, %c0_89, %c0_90] : memref<1x4x8x8xbf16, #tpu.memory_space<vmem>>, vector<1x1x8x8xbf16>
    %103 = vector.shape_cast %102 : vector<1x1x8x8xbf16> to vector<8x8xbf16>
    %cst_91 = arith.constant dense<0.000000e+00> : vector<8x8xf32>
    %104 = tpu.matmul %99, %101, %cst_91 {dimension_numbers = #tpu.dot_dimension_numbers<[1], [1], [0], [0], [0, 0, 1, 0], [], []>} : vector<8x8xbf16>, vector<8x8xbf16>, vector<8x8xf32> -> vector<8x8xf32>
    %cst_92 = arith.constant 0.353553385 : f32
    %105 = vector.broadcast %cst_92 : f32 to vector<8x8xf32>
    %106 = arith.mulf %104, %105 : vector<8x8xf32>
    %cst_93 = arith.constant -1.000000e+20 : f32
    %107 = vector.broadcast %cst_93 : f32 to vector<8x8xf32>
    %108 = arith.select %5, %106, %107 : vector<8x8xi1>, vector<8x8xf32>
    %cst_94 = arith.constant dense<0xFF800000> : vector<8xf32>
    %109 = vector.multi_reduction <maximumf>, %108, %cst_94 [1] : vector<8x8xf32> to vector<8xf32>
    %110 = vector.shape_cast %109 : vector<8xf32> to vector<8x1xf32>
    %111 = vector.broadcast %110 : vector<8x1xf32> to vector<8x8xf32>
    %112 = arith.subf %108, %111 : vector<8x8xf32>
    %113 = math.exp %112 : vector<8x8xf32>
    %cst_95 = arith.constant dense<0.000000e+00> : vector<8xf32>
    %114 = vector.multi_reduction <add>, %113, %cst_95 [1] : vector<8x8xf32> to vector<8xf32>
    %115 = vector.shape_cast %114 : vector<8xf32> to vector<8x1xf32>
    %116 = tpu.reciprocal %115 {approx = true} : vector<8x1xf32> -> vector<8x1xf32>
    %117 = vector.broadcast %116 : vector<8x1xf32> to vector<8x8xf32>
    %118 = arith.mulf %113, %117 : vector<8x8xf32>
    %119 = arith.truncf %118 : vector<8x8xf32> to vector<8x8xbf16>
    %cst_96 = arith.constant dense<0.000000e+00> : vector<8x8xf32>
    %120 = tpu.matmul %119, %103, %cst_96 {dimension_numbers = #tpu.dot_dimension_numbers<[1], [0], [0], [1], [0, 0, 1, 1], [], []>} : vector<8x8xbf16>, vector<8x8xbf16>, vector<8x8xf32> -> vector<8x8xf32>
    %c0_97 = arith.constant 0 : index
    %c0_98 = arith.constant 0 : index
    %121 = vector.load %arg12[%c0_97, %c0_98] : memref<8x32xf32, #tpu.memory_space<vmem>>, vector<8x32xf32>
    %122 = arith.truncf %120 : vector<8x8xf32> to vector<8x8xbf16>
    %c3_99 = arith.constant 3 : index
    %c0_100 = arith.constant 0 : index
    %c0_101 = arith.constant 0 : index
    %123 = vector.load %arg7[%c3_99, %c0_100, %c0_101] : memref<4x8x32xbf16, #tpu.memory_space<vmem>>, vector<1x8x32xbf16>
    %124 = vector.shape_cast %123 : vector<1x8x32xbf16> to vector<8x32xbf16>
    %cst_102 = arith.constant dense<0.000000e+00> : vector<8x32xf32>
    %125 = tpu.matmul %122, %124, %cst_102 {dimension_numbers = #tpu.dot_dimension_numbers<[1], [0], [0], [1], [0, 0, 1, 1], [], []>} : vector<8x8xbf16>, vector<8x32xbf16>, vector<8x32xf32> -> vector<8x32xf32>
    %126 = arith.addf %121, %125 : vector<8x32xf32>
    %c0_103 = arith.constant 0 : index
    %c0_104 = arith.constant 0 : index
    %127 = vector.load %arg12[%c0_103, %c0_104] : memref<8x32xf32, #tpu.memory_space<vmem>>, vector<8x32xf32>
    tpu.vector_store %arg12[%c0_103, %c0_104], %126 {strides = array<i32>} : memref<8x32xf32, #tpu.memory_space<vmem>>, vector<8x32xf32>,
    %c0_105 = arith.constant 0 : index
    %c0_106 = arith.constant 0 : index
    %c0_107 = arith.constant 0 : index
    %128 = vector.load %arg5[%c0_105, %c0_106, %c0_107] : memref<1x8x32xf32, #tpu.memory_space<vmem>>, vector<1x8x32xf32>
    %129 = vector.shape_cast %128 : vector<1x8x32xf32> to vector<8x32xf32>
    %c0_108 = arith.constant 0 : index
    %c0_109 = arith.constant 0 : index
    %130 = vector.load %arg12[%c0_108, %c0_109] : memref<8x32xf32, #tpu.memory_space<vmem>>, vector<8x32xf32>
    %131 = arith.addf %129, %130 : vector<8x32xf32>
    %c0_110 = arith.constant 0 : index
    %c0_111 = arith.constant 0 : index
    %132 = vector.load %arg8[%c0_110, %c0_111] : memref<1x32xf32, #tpu.memory_space<vmem>>, vector<1x32xf32>
    %133 = vector.broadcast %132 : vector<1x32xf32> to vector<8x32xf32>
    %134 = arith.addf %131, %133 : vector<8x32xf32>
    %cst_112 = arith.constant dense<0.000000e+00> : vector<8xf32>
    %135 = vector.multi_reduction <add>, %134, %cst_112 [1] : vector<8x32xf32> to vector<8xf32>
    %136 = vector.shape_cast %135 : vector<8xf32> to vector<8x1xf32>
    %cst_113 = arith.constant 3.200000e+01 : f32
    %137 = vector.broadcast %cst_113 : f32 to vector<8x1xf32>
    %138 = arith.divf %136, %137 : vector<8x1xf32>
    %139 = vector.broadcast %138 : vector<8x1xf32> to vector<8x32xf32>
    %140 = arith.subf %134, %139 : vector<8x32xf32>
    %141 = arith.mulf %140, %140 : vector<8x32xf32>
    %cst_114 = arith.constant dense<0.000000e+00> : vector<8xf32>
    %142 = vector.multi_reduction <add>, %141, %cst_114 [1] : vector<8x32xf32> to vector<8xf32>
    %143 = vector.shape_cast %142 : vector<8xf32> to vector<8x1xf32>
    %cst_115 = arith.constant 0.0322580636 : f32
    %144 = vector.broadcast %cst_115 : f32 to vector<8x1xf32>
    %145 = arith.mulf %143, %144 : vector<8x1xf32>
    %146 = math.sqrt %145 : vector<8x1xf32>
    %cst_116 = arith.constant 9.99999997E-7 : f32
    %147 = vector.broadcast %cst_116 : f32 to vector<8x1xf32>
    %148 = arith.addf %146, %147 : vector<8x1xf32>
    %149 = tpu.reciprocal %148 : vector<8x1xf32> -> vector<8x1xf32>
    %c0_117 = arith.constant 0 : index
    %c0_118 = arith.constant 0 : index
    %150 = vector.load %arg9[%c0_117, %c0_118] : memref<1x32xf32, #tpu.memory_space<vmem>>, vector<1x32xf32>
    %151 = vector.broadcast %138 : vector<8x1xf32> to vector<8x32xf32>
    %152 = arith.subf %134, %151 : vector<8x32xf32>
    %153 = vector.broadcast %150 : vector<1x32xf32> to vector<8x32xf32>
    %154 = arith.mulf %153, %152 : vector<8x32xf32>
    %155 = vector.broadcast %149 : vector<8x1xf32> to vector<8x32xf32>
    %156 = arith.mulf %154, %155 : vector<8x32xf32>
    %c0_119 = arith.constant 0 : index
    %c0_120 = arith.constant 0 : index
    %157 = vector.load %arg10[%c0_119, %c0_120] : memref<1x32xf32, #tpu.memory_space<vmem>>, vector<1x32xf32>
    %158 = vector.broadcast %157 : vector<1x32xf32> to vector<8x32xf32>
    %159 = arith.addf %156, %158 : vector<8x32xf32>
    %c0_121 = arith.constant 0 : index
    %c0_122 = arith.constant 0 : index
    %c0_123 = arith.constant 0 : index
    %160 = vector.load %arg11[%c0_121, %c0_122, %c0_123] : memref<1x8x32xf32, #tpu.memory_space<vmem>>, vector<1x8x32xf32>
    %161 = vector.shape_cast %160 : vector<1x8x32xf32> to vector<8x32xf32>
    %162 = vector.shape_cast %159 : vector<8x32xf32> to vector<1x8x32xf32>
    tpu.vector_store %arg11[%c0_121, %c0_122, %c0_123], %162 {strides = array<i32>} : memref<1x8x32xf32, #tpu.memory_space<vmem>>, vector<1x8x32xf32>,
    return
  }
  func.func @transform_0(%arg0: i32, %arg1: i32) -> (i32, i32, i32, i32) {
    %c0_i32 = arith.constant 0 : i32
    %c0_i32_0 = arith.constant 0 : i32
    %c0_i32_1 = arith.constant 0 : i32
    return %arg0, %c0_i32, %arg1, %c0_i32_0 : i32, i32, i32, i32
  }
  func.func @transform_1(%arg0: i32, %arg1: i32) -> (i32, i32, i32, i32) {
    %c0_i32 = arith.constant 0 : i32
    %c0_i32_0 = arith.constant 0 : i32
    %c0_i32_1 = arith.constant 0 : i32
    %c0_i32_2 = arith.constant 0 : i32
    return %arg0, %c0_i32, %c0_i32_0, %c0_i32_1 : i32, i32, i32, i32
  }
  func.func @transform_2(%arg0: i32, %arg1: i32) -> (i32, i32, i32, i32) {
    %c0_i32 = arith.constant 0 : i32
    %c0_i32_0 = arith.constant 0 : i32
    %c0_i32_1 = arith.constant 0 : i32
    %c0_i32_2 = arith.constant 0 : i32
    return %arg0, %c0_i32, %c0_i32_0, %c0_i32_1 : i32, i32, i32, i32
  }
  func.func @transform_3(%arg0: i32, %arg1: i32) -> (i32, i32, i32) {
    %c0_i32 = arith.constant 0 : i32
    %c0_i32_0 = arith.constant 0 : i32
    return %arg0, %arg1, %c0_i32 : i32, i32, i32
  }
  func.func @transform_4(%arg0: i32, %arg1: i32) -> (i32, i32, i32) {
    %c0_i32 = arith.constant 0 : i32
    %c0_i32_0 = arith.constant 0 : i32
    %c0_i32_1 = arith.constant 0 : i32
    return %arg0, %c0_i32, %c0_i32_0 : i32, i32, i32
  }
  func.func @transform_5(%arg0: i32, %arg1: i32) -> (i32, i32, i32) {
    %c0_i32 = arith.constant 0 : i32
    %c0_i32_0 = arith.constant 0 : i32
    %c0_i32_1 = arith.constant 0 : i32
    %c0_i32_2 = arith.constant 0 : i32
    return %c0_i32, %c0_i32_0, %c0_i32_1 : i32, i32, i32
  }
  func.func @transform_6(%arg0: i32, %arg1: i32) -> (i32, i32) {
    %c0_i32 = arith.constant 0 : i32
    %c0_i32_0 = arith.constant 0 : i32
    %c0_i32_1 = arith.constant 0 : i32
    return %c0_i32, %c0_i32_0 : i32, i32
  }
  func.func @transform_7(%arg0: i32, %arg1: i32) -> (i32, i32) {
    %c0_i32 = arith.constant 0 : i32
    %c0_i32_0 = arith.constant 0 : i32
    %c0_i32_1 = arith.constant 0 : i32
    return %c0_i32, %c0_i32_0 : i32, i32
  }
  func.func @transform_8(%arg0: i32, %arg1: i32) -> (i32, i32) {
    %c0_i32 = arith.constant 0 : i32
    %c0_i32_0 = arith.constant 0 : i32
    %c0_i32_1 = arith.constant 0 : i32
    return %c0_i32, %c0_i32_0 : i32, i32
  }
  func.func @transform_9(%arg0: i32, %arg1: i32) -> (i32, i32, i32) {
    %c0_i32 = arith.constant 0 : i32
    %c0_i32_0 = arith.constant 0 : i32
    return %arg0, %arg1, %c0_i32 : i32, i32, i32
  }
}

module attributes {stable_mosaic.version = 11 : i64} {
  func.func @_matmul_kernel(%arg0: i32, %arg1: i32, %arg2: i32, %arg3: memref<16x32xf32, #tpu.memory_space<vmem>>, %arg4: memref<32x64xbf16, #tpu.memory_space<vmem>>, %arg5: memref<16x64xbf16, #tpu.memory_space<vmem>>, %arg6: memref<16x64xf32, #tpu.memory_space<vmem>>) attributes {dimension_semantics = [#tpu.dimension_semantics<parallel>, #tpu.dimension_semantics<parallel>, #tpu.dimension_semantics<arbitrary>], iteration_bounds = array<i64: 1, 1, 1>, scalar_prefetch = 0 : i64, scratch_operands = 1 : i64, tpu.core_type = #tpu.core_type<tc>, window_params = [{transform_indices = @transform_0, window_bounds = array<i64: 16, 32>}, {transform_indices = @transform_1, window_bounds = array<i64: 32, 64>}, {transform_indices = @transform_2, window_bounds = array<i64: 16, 64>}]} {
    %c0_i32 = arith.constant 0 : i32
    %0 = arith.cmpi eq, %arg2, %c0_i32 : i32
    %1 = arith.extui %0 : i1 to i32
    %c0_i32_0 = arith.constant 0 : i32
    %2 = arith.cmpi ne, %1, %c0_i32_0 : i32
    scf.if %2 {
      %cst_10 = arith.constant 0.000000e+00 : f32
      %13 = vector.broadcast %cst_10 : f32 to vector<16x64xf32>
      %c0_11 = arith.constant 0 : index
      %c0_12 = arith.constant 0 : index
      %14 = vector.load %arg6[%c0_11, %c0_12] : memref<16x64xf32, #tpu.memory_space<vmem>>, vector<16x64xf32>
      tpu.vector_store %arg6[%c0_11, %c0_12], %13 {strides = array<i32>} : memref<16x64xf32, #tpu.memory_space<vmem>>, vector<16x64xf32>,
    } else {
    }
    %c0 = arith.constant 0 : index
    %c0_1 = arith.constant 0 : index
    %3 = vector.load %arg6[%c0, %c0_1] : memref<16x64xf32, #tpu.memory_space<vmem>>, vector<16x64xf32>
    %c0_2 = arith.constant 0 : index
    %c0_3 = arith.constant 0 : index
    %4 = vector.load %arg3[%c0_2, %c0_3] : memref<16x32xf32, #tpu.memory_space<vmem>>, vector<16x32xf32>
    %5 = arith.truncf %4 : vector<16x32xf32> to vector<16x32xbf16>
    %c0_4 = arith.constant 0 : index
    %c0_5 = arith.constant 0 : index
    %6 = vector.load %arg4[%c0_4, %c0_5] : memref<32x64xbf16, #tpu.memory_space<vmem>>, vector<32x64xbf16>
    %cst = arith.constant dense<0.000000e+00> : vector<16x64xf32>
    %7 = tpu.matmul %5, %6, %cst {dimension_numbers = #tpu.dot_dimension_numbers<[1], [0], [0], [1], [0, 0, 1, 1], [], []>} : vector<16x32xbf16>, vector<32x64xbf16>, vector<16x64xf32> -> vector<16x64xf32>
    %8 = arith.addf %3, %7 : vector<16x64xf32>
    %c0_6 = arith.constant 0 : index
    %c0_7 = arith.constant 0 : index
    %9 = vector.load %arg6[%c0_6, %c0_7] : memref<16x64xf32, #tpu.memory_space<vmem>>, vector<16x64xf32>
    tpu.vector_store %arg6[%c0_6, %c0_7], %8 {strides = array<i32>} : memref<16x64xf32, #tpu.memory_space<vmem>>, vector<16x64xf32>,
    %c0_i32_8 = arith.constant 0 : i32
    %10 = arith.cmpi eq, %arg2, %c0_i32_8 : i32
    %11 = arith.extui %10 : i1 to i32
    %c0_i32_9 = arith.constant 0 : i32
    %12 = arith.cmpi ne, %11, %c0_i32_9 : i32
    scf.if %12 {
      %c0_10 = arith.constant 0 : index
      %c0_11 = arith.constant 0 : index
      %13 = vector.load %arg6[%c0_10, %c0_11] : memref<16x64xf32, #tpu.memory_space<vmem>>, vector<16x64xf32>
      %14 = arith.truncf %13 : vector<16x64xf32> to vector<16x64xbf16>
      %c0_12 = arith.constant 0 : index
      %c0_13 = arith.constant 0 : index
      %15 = vector.load %arg5[%c0_12, %c0_13] : memref<16x64xbf16, #tpu.memory_space<vmem>>, vector<16x64xbf16>
      tpu.vector_store %arg5[%c0_12, %c0_13], %14 {strides = array<i32>} : memref<16x64xbf16, #tpu.memory_space<vmem>>, vector<16x64xbf16>,
    } else {
    }
    return
  }
  func.func @transform_0(%arg0: i32, %arg1: i32, %arg2: i32) -> (i32, i32) {
    %c0_i32 = arith.constant 0 : i32
    return %arg0, %arg2 : i32, i32
  }
  func.func @transform_1(%arg0: i32, %arg1: i32, %arg2: i32) -> (i32, i32) {
    %c0_i32 = arith.constant 0 : i32
    return %arg2, %arg1 : i32, i32
  }
  func.func @transform_2(%arg0: i32, %arg1: i32, %arg2: i32) -> (i32, i32) {
    %c0_i32 = arith.constant 0 : i32
    return %arg0, %arg1 : i32, i32
  }
}

module attributes {stable_mosaic.version = 11 : i64} {
  func.func @_ffn_ln_kernel(%arg0: i32, %arg1: i32, %arg2: memref<16x32xf32, #tpu.memory_space<vmem>>, %arg3: memref<32x64xbf16, #tpu.memory_space<vmem>>, %arg4: memref<1x64xf32, #tpu.memory_space<vmem>>, %arg5: memref<64x32xbf16, #tpu.memory_space<vmem>>, %arg6: memref<1x32xf32, #tpu.memory_space<vmem>>, %arg7: memref<1x32xf32, #tpu.memory_space<vmem>>, %arg8: memref<1x32xf32, #tpu.memory_space<vmem>>, %arg9: memref<16x32xf32, #tpu.memory_space<vmem>>, %arg10: memref<16x32xf32, #tpu.memory_space<vmem>>) attributes {dimension_semantics = [#tpu.dimension_semantics<parallel>, #tpu.dimension_semantics<arbitrary>], iteration_bounds = array<i64: 1, 1>, scalar_prefetch = 0 : i64, scratch_operands = 1 : i64, tpu.core_type = #tpu.core_type<tc>, window_params = [{transform_indices = @transform_0, window_bounds = array<i64: 16, 32>}, {transform_indices = @transform_1, window_bounds = array<i64: 32, 64>}, {transform_indices = @transform_2, window_bounds = array<i64: 1, 64>}, {transform_indices = @transform_3, window_bounds = array<i64: 64, 32>}, {pipeline_mode = #tpu.pipeline_mode<synchronous>, transform_indices = @transform_4, window_bounds = array<i64: 1, 32>}, {pipeline_mode = #tpu.pipeline_mode<synchronous>, transform_indices = @transform_5, window_bounds = array<i64: 1, 32>}, {pipeline_mode = #tpu.pipeline_mode<synchronous>, transform_indices = @transform_6, window_bounds = array<i64: 1, 32>}, {transform_indices = @transform_7, window_bounds = array<i64: 16, 32>}]} {
    %c0_i32 = arith.constant 0 : i32
    %0 = arith.cmpi eq, %arg1, %c0_i32 : i32
    %1 = arith.extui %0 : i1 to i32
    %c0_i32_0 = arith.constant 0 : i32
    %2 = arith.cmpi ne, %1, %c0_i32_0 : i32
    scf.if %2 {
      %cst_16 = arith.constant 0.000000e+00 : f32
      %21 = vector.broadcast %cst_16 : f32 to vector<16x32xf32>
      %c0_17 = arith.constant 0 : index
      %c0_18 = arith.constant 0 : index
      %22 = vector.load %arg10[%c0_17, %c0_18] : memref<16x32xf32, #tpu.memory_space<vmem>>, vector<16x32xf32>
      tpu.vector_store %arg10[%c0_17, %c0_18], %21 {strides = array<i32>} : memref<16x32xf32, #tpu.memory_space<vmem>>, vector<16x32xf32>,
    } else {
    }
    %c0 = arith.constant 0 : index
    %c0_1 = arith.constant 0 : index
    %3 = vector.load %arg2[%c0, %c0_1] : memref<16x32xf32, #tpu.memory_space<vmem>>, vector<16x32xf32>
    %4 = arith.truncf %3 : vector<16x32xf32> to vector<16x32xbf16>
    %c0_2 = arith.constant 0 : index
    %c0_3 = arith.constant 0 : index
    %5 = vector.load %arg3[%c0_2, %c0_3] : memref<32x64xbf16, #tpu.memory_space<vmem>>, vector<32x64xbf16>
    %cst = arith.constant dense<0.000000e+00> : vector<16x64xf32>
    %6 = tpu.matmul %4, %5, %cst {dimension_numbers = #tpu.dot_dimension_numbers<[1], [0], [0], [1], [0, 0, 1, 1], [], []>} : vector<16x32xbf16>, vector<32x64xbf16>, vector<16x64xf32> -> vector<16x64xf32>
    %c0_4 = arith.constant 0 : index
    %c0_5 = arith.constant 0 : index
    %7 = vector.load %arg4[%c0_4, %c0_5] : memref<1x64xf32, #tpu.memory_space<vmem>>, vector<1x64xf32>
    %8 = vector.broadcast %7 : vector<1x64xf32> to vector<16x64xf32>
    %9 = arith.addf %6, %8 : vector<16x64xf32>
    %cst_6 = arith.constant 0.000000e+00 : f32
    %10 = vector.broadcast %cst_6 : f32 to vector<16x64xf32>
    %11 = arith.maximumf %9, %10 : vector<16x64xf32>
    %c0_7 = arith.constant 0 : index
    %c0_8 = arith.constant 0 : index
    %12 = vector.load %arg10[%c0_7, %c0_8] : memref<16x32xf32, #tpu.memory_space<vmem>>, vector<16x32xf32>
    %13 = arith.truncf %11 : vector<16x64xf32> to vector<16x64xbf16>
    %c0_9 = arith.constant 0 : index
    %c0_10 = arith.constant 0 : index
    %14 = vector.load %arg5[%c0_9, %c0_10] : memref<64x32xbf16, #tpu.memory_space<vmem>>, vector<64x32xbf16>
    %cst_11 = arith.constant dense<0.000000e+00> : vector<16x32xf32>
    %15 = tpu.matmul %13, %14, %cst_11 {dimension_numbers = #tpu.dot_dimension_numbers<[1], [0], [0], [1], [0, 0, 1, 1], [], []>} : vector<16x64xbf16>, vector<64x32xbf16>, vector<16x32xf32> -> vector<16x32xf32>
    %16 = arith.addf %12, %15 : vector<16x32xf32>
    %c0_12 = arith.constant 0 : index
    %c0_13 = arith.constant 0 : index
    %17 = vector.load %arg10[%c0_12, %c0_13] : memref<16x32xf32, #tpu.memory_space<vmem>>, vector<16x32xf32>
    tpu.vector_store %arg10[%c0_12, %c0_13], %16 {strides = array<i32>} : memref<16x32xf32, #tpu.memory_space<vmem>>, vector<16x32xf32>,
    %c0_i32_14 = arith.constant 0 : i32
    %18 = arith.cmpi eq, %arg1, %c0_i32_14 : i32
    %19 = arith.extui %18 : i1 to i32
    %c0_i32_15 = arith.constant 0 : i32
    %20 = arith.cmpi ne, %19, %c0_i32_15 : i32
    scf.if %20 {
      %c0_16 = arith.constant 0 : index
      %c0_17 = arith.constant 0 : index
      %21 = vector.load %arg2[%c0_16, %c0_17] : memref<16x32xf32, #tpu.memory_space<vmem>>, vector<16x32xf32>
      %c0_18 = arith.constant 0 : index
      %c0_19 = arith.constant 0 : index
      %22 = vector.load %arg10[%c0_18, %c0_19] : memref<16x32xf32, #tpu.memory_space<vmem>>, vector<16x32xf32>
      %23 = arith.addf %21, %22 : vector<16x32xf32>
      %c0_20 = arith.constant 0 : index
      %c0_21 = arith.constant 0 : index
      %24 = vector.load %arg6[%c0_20, %c0_21] : memref<1x32xf32, #tpu.memory_space<vmem>>, vector<1x32xf32>
      %25 = vector.broadcast %24 : vector<1x32xf32> to vector<16x32xf32>
      %26 = arith.addf %23, %25 : vector<16x32xf32>
      %cst_22 = arith.constant dense<0.000000e+00> : vector<16xf32>
      %27 = vector.multi_reduction <add>, %26, %cst_22 [1] : vector<16x32xf32> to vector<16xf32>
      %28 = vector.shape_cast %27 : vector<16xf32> to vector<16x1xf32>
      %cst_23 = arith.constant 3.200000e+01 : f32
      %29 = vector.broadcast %cst_23 : f32 to vector<16x1xf32>
      %30 = arith.divf %28, %29 : vector<16x1xf32>
      %31 = vector.broadcast %30 : vector<16x1xf32> to vector<16x32xf32>
      %32 = arith.subf %26, %31 : vector<16x32xf32>
      %33 = arith.mulf %32, %32 : vector<16x32xf32>
      %cst_24 = arith.constant dense<0.000000e+00> : vector<16xf32>
      %34 = vector.multi_reduction <add>, %33, %cst_24 [1] : vector<16x32xf32> to vector<16xf32>
      %35 = vector.shape_cast %34 : vector<16xf32> to vector<16x1xf32>
      %cst_25 = arith.constant 0.0322580636 : f32
      %36 = vector.broadcast %cst_25 : f32 to vector<16x1xf32>
      %37 = arith.mulf %35, %36 : vector<16x1xf32>
      %38 = math.sqrt %37 : vector<16x1xf32>
      %cst_26 = arith.constant 9.99999997E-7 : f32
      %39 = vector.broadcast %cst_26 : f32 to vector<16x1xf32>
      %40 = arith.addf %38, %39 : vector<16x1xf32>
      %41 = tpu.reciprocal %40 : vector<16x1xf32> -> vector<16x1xf32>
      %c0_27 = arith.constant 0 : index
      %c0_28 = arith.constant 0 : index
      %42 = vector.load %arg7[%c0_27, %c0_28] : memref<1x32xf32, #tpu.memory_space<vmem>>, vector<1x32xf32>
      %43 = vector.broadcast %30 : vector<16x1xf32> to vector<16x32xf32>
      %44 = arith.subf %26, %43 : vector<16x32xf32>
      %45 = vector.broadcast %42 : vector<1x32xf32> to vector<16x32xf32>
      %46 = arith.mulf %45, %44 : vector<16x32xf32>
      %47 = vector.broadcast %41 : vector<16x1xf32> to vector<16x32xf32>
      %48 = arith.mulf %46, %47 : vector<16x32xf32>
      %c0_29 = arith.constant 0 : index
      %c0_30 = arith.constant 0 : index
      %49 = vector.load %arg8[%c0_29, %c0_30] : memref<1x32xf32, #tpu.memory_space<vmem>>, vector<1x32xf32>
      %50 = vector.broadcast %49 : vector<1x32xf32> to vector<16x32xf32>
      %51 = arith.addf %48, %50 : vector<16x32xf32>
      %c0_31 = arith.constant 0 : index
      %c0_32 = arith.constant 0 : index
      %52 = vector.load %arg9[%c0_31, %c0_32] : memref<16x32xf32, #tpu.memory_space<vmem>>, vector<16x32xf32>
      tpu.vector_store %arg9[%c0_31, %c0_32], %51 {strides = array<i32>} : memref<16x32xf32, #tpu.memory_space<vmem>>, vector<16x32xf32>,
    } else {
    }
    return
  }
  func.func @transform_0(%arg0: i32, %arg1: i32) -> (i32, i32) {
    %c0_i32 = arith.constant 0 : i32
    %c0_i32_0 = arith.constant 0 : i32
    return %arg0, %c0_i32 : i32, i32
  }
  func.func @transform_1(%arg0: i32, %arg1: i32) -> (i32, i32) {
    %c0_i32 = arith.constant 0 : i32
    %c0_i32_0 = arith.constant 0 : i32
    return %c0_i32, %arg1 : i32, i32
  }
  func.func @transform_2(%arg0: i32, %arg1: i32) -> (i32, i32) {
    %c0_i32 = arith.constant 0 : i32
    %c0_i32_0 = arith.constant 0 : i32
    return %c0_i32, %arg1 : i32, i32
  }
  func.func @transform_3(%arg0: i32, %arg1: i32) -> (i32, i32) {
    %c0_i32 = arith.constant 0 : i32
    %c0_i32_0 = arith.constant 0 : i32
    return %arg1, %c0_i32 : i32, i32
  }
  func.func @transform_4(%arg0: i32, %arg1: i32) -> (i32, i32) {
    %c0_i32 = arith.constant 0 : i32
    %c0_i32_0 = arith.constant 0 : i32
    %c0_i32_1 = arith.constant 0 : i32
    return %c0_i32, %c0_i32_0 : i32, i32
  }
  func.func @transform_5(%arg0: i32, %arg1: i32) -> (i32, i32) {
    %c0_i32 = arith.constant 0 : i32
    %c0_i32_0 = arith.constant 0 : i32
    %c0_i32_1 = arith.constant 0 : i32
    return %c0_i32, %c0_i32_0 : i32, i32
  }
  func.func @transform_6(%arg0: i32, %arg1: i32) -> (i32, i32) {
    %c0_i32 = arith.constant 0 : i32
    %c0_i32_0 = arith.constant 0 : i32
    %c0_i32_1 = arith.constant 0 : i32
    return %c0_i32, %c0_i32_0 : i32, i32
  }
  func.func @transform_7(%arg0: i32, %arg1: i32) -> (i32, i32) {
    %c0_i32 = arith.constant 0 : i32
    %c0_i32_0 = arith.constant 0 : i32
    return %arg0, %c0_i32 : i32, i32
  }
}

module attributes {stable_mosaic.version = 11 : i64} {
  func.func @_matmul_bias_kernel(%arg0: i32, %arg1: i32, %arg2: i32, %arg3: memref<16x32xf32, #tpu.memory_space<vmem>>, %arg4: memref<32x128xbf16, #tpu.memory_space<vmem>>, %arg5: memref<1x128xf32, #tpu.memory_space<vmem>>, %arg6: memref<16x128xf32, #tpu.memory_space<vmem>>, %arg7: memref<16x128xf32, #tpu.memory_space<vmem>>) attributes {dimension_semantics = [#tpu.dimension_semantics<parallel>, #tpu.dimension_semantics<parallel>, #tpu.dimension_semantics<arbitrary>], iteration_bounds = array<i64: 1, 1, 1>, scalar_prefetch = 0 : i64, scratch_operands = 1 : i64, tpu.core_type = #tpu.core_type<tc>, window_params = [{transform_indices = @transform_0, window_bounds = array<i64: 16, 32>}, {transform_indices = @transform_1, window_bounds = array<i64: 32, 128>}, {transform_indices = @transform_2, window_bounds = array<i64: 1, 128>}, {transform_indices = @transform_3, window_bounds = array<i64: 16, 128>}]} {
    %c0_i32 = arith.constant 0 : i32
    %0 = arith.cmpi eq, %arg2, %c0_i32 : i32
    %1 = arith.extui %0 : i1 to i32
    %c0_i32_0 = arith.constant 0 : i32
    %2 = arith.cmpi ne, %1, %c0_i32_0 : i32
    scf.if %2 {
      %cst_10 = arith.constant 0.000000e+00 : f32
      %13 = vector.broadcast %cst_10 : f32 to vector<16x128xf32>
      %c0_11 = arith.constant 0 : index
      %c0_12 = arith.constant 0 : index
      %14 = vector.load %arg7[%c0_11, %c0_12] : memref<16x128xf32, #tpu.memory_space<vmem>>, vector<16x128xf32>
      tpu.vector_store %arg7[%c0_11, %c0_12], %13 {strides = array<i32>} : memref<16x128xf32, #tpu.memory_space<vmem>>, vector<16x128xf32>,
    } else {
    }
    %c0 = arith.constant 0 : index
    %c0_1 = arith.constant 0 : index
    %3 = vector.load %arg7[%c0, %c0_1] : memref<16x128xf32, #tpu.memory_space<vmem>>, vector<16x128xf32>
    %c0_2 = arith.constant 0 : index
    %c0_3 = arith.constant 0 : index
    %4 = vector.load %arg3[%c0_2, %c0_3] : memref<16x32xf32, #tpu.memory_space<vmem>>, vector<16x32xf32>
    %5 = arith.truncf %4 : vector<16x32xf32> to vector<16x32xbf16>
    %c0_4 = arith.constant 0 : index
    %c0_5 = arith.constant 0 : index
    %6 = vector.load %arg4[%c0_4, %c0_5] : memref<32x128xbf16, #tpu.memory_space<vmem>>, vector<32x128xbf16>
    %cst = arith.constant dense<0.000000e+00> : vector<16x128xf32>
    %7 = tpu.matmul %5, %6, %cst {dimension_numbers = #tpu.dot_dimension_numbers<[1], [0], [0], [1], [0, 0, 1, 1], [], []>} : vector<16x32xbf16>, vector<32x128xbf16>, vector<16x128xf32> -> vector<16x128xf32>
    %8 = arith.addf %3, %7 : vector<16x128xf32>
    %c0_6 = arith.constant 0 : index
    %c0_7 = arith.constant 0 : index
    %9 = vector.load %arg7[%c0_6, %c0_7] : memref<16x128xf32, #tpu.memory_space<vmem>>, vector<16x128xf32>
    tpu.vector_store %arg7[%c0_6, %c0_7], %8 {strides = array<i32>} : memref<16x128xf32, #tpu.memory_space<vmem>>, vector<16x128xf32>,
    %c0_i32_8 = arith.constant 0 : i32
    %10 = arith.cmpi eq, %arg2, %c0_i32_8 : i32
    %11 = arith.extui %10 : i1 to i32
    %c0_i32_9 = arith.constant 0 : i32
    %12 = arith.cmpi ne, %11, %c0_i32_9 : i32
    scf.if %12 {
      %c0_10 = arith.constant 0 : index
      %c0_11 = arith.constant 0 : index
      %13 = vector.load %arg7[%c0_10, %c0_11] : memref<16x128xf32, #tpu.memory_space<vmem>>, vector<16x128xf32>
      %c0_12 = arith.constant 0 : index
      %c0_13 = arith.constant 0 : index
      %14 = vector.load %arg5[%c0_12, %c0_13] : memref<1x128xf32, #tpu.memory_space<vmem>>, vector<1x128xf32>
      %15 = vector.broadcast %14 : vector<1x128xf32> to vector<16x128xf32>
      %16 = arith.addf %13, %15 : vector<16x128xf32>
      %c0_14 = arith.constant 0 : index
      %c0_15 = arith.constant 0 : index
      %17 = vector.load %arg6[%c0_14, %c0_15] : memref<16x128xf32, #tpu.memory_space<vmem>>, vector<16x128xf32>
      tpu.vector_store %arg6[%c0_14, %c0_15], %16 {strides = array<i32>} : memref<16x128xf32, #tpu.memory_space<vmem>>, vector<16x128xf32>,
    } else {
    }
    return
  }
  func.func @transform_0(%arg0: i32, %arg1: i32, %arg2: i32) -> (i32, i32) {
    %c0_i32 = arith.constant 0 : i32
    return %arg0, %arg2 : i32, i32
  }
  func.func @transform_1(%arg0: i32, %arg1: i32, %arg2: i32) -> (i32, i32) {
    %c0_i32 = arith.constant 0 : i32
    return %arg2, %arg1 : i32, i32
  }
  func.func @transform_2(%arg0: i32, %arg1: i32, %arg2: i32) -> (i32, i32) {
    %c0_i32 = arith.constant 0 : i32
    %c0_i32_0 = arith.constant 0 : i32
    return %c0_i32, %arg1 : i32, i32
  }
  func.func @transform_3(%arg0: i32, %arg1: i32, %arg2: i32) -> (i32, i32) {
    %c0_i32 = arith.constant 0 : i32
    return %arg0, %arg1 : i32, i32
  }
}

</mosaic_0001>

<llo_original>
// kernel: transformer_forward.25
$region0: #{transformer_forward.25}
  #allocation0 [shape = 'u32[]', space=smem, size = 0x4, offset = 0x4, fixed_abs, tag = 'smem constant byte address 0x4 - core index']
  #allocation1 [shape = 'u32[144,128]{1,0:T(1,128)}', space=vmem, size = 0x12000, scoped, tag = 'internal scratch']
  #allocation2 [shape = 'f32[16,96]{1,0:T(8,128)}', space=vmem, size = 0x2000, scoped, tag = 'scratch operand']
  %s0 = inlined_call_operand.vmem [shape: f32[16,32], index: 0, kind: input, shape index: {}]
  %s1 = inlined_call_operand.vmem [shape: bf16[32,96], index: 1, kind: input, shape index: {}]
  %s2 = inlined_call_operand.vmem [shape: bf16[16,96], index: 2, kind: output, shape index: {}]
  %s3 = sld [smem:[#allocation0]]
  $region26: #{transformer_forward.25} parent=0
    _
  %s5 = ssub.s32 1, %s3
  %s6 = scalar_select 0, %s5, %s3
  // Predicated region
  $region2: #{transformer_forward.25} parent=0 // pred_check
    _
  $region3: #{transformer_forward.25} parent=0 // pred_check_branch
    %8 = sbr.rel (0) target = $region5
  $region4: #{transformer_forward.25} parent=0 // pred_region
    _
  $region5: #{transformer_forward.25} parent=0 // pred_fallthru
    _
  // Predicated region
  $region6: #{transformer_forward.25} parent=0 // pred_check
    _
  $region7: #{transformer_forward.25} parent=0 // pred_check_branch
    %10 = sbr.rel (0) target = $region9
  $region8: #{transformer_forward.25} parent=0 // pred_region
    _
  $region9: #{transformer_forward.25} parent=0 // pred_fallthru
    _
  %p12 = scmp.eq.s32.totalorder 0, 0
  // Predicated region
  $region10: #{transformer_forward.25} parent=0 // pred_check
    %p13 = pneg %p12
  $region11: #{transformer_forward.25} parent=0 // pred_check_branch
    %15 = sbr.rel (%p13) target = $region13
  $region12: #{transformer_forward.25} parent=0 // pred_region
    %vm16 = vcmask 785408
    %17 = vst.msk [vmem:[#allocation2] sm:$0xff] %vm16, 0.0
    %18 = vst.msk [vmem:[#allocation2 + $0x8] sm:$0xff] %vm16, 0.0
  $region13: #{transformer_forward.25} parent=0 // pred_fallthru
    _
  %v19 = vld [vmem:[#allocation2] sm:$0xff]
  %v20 = vld [vmem:[#allocation2 + $0x8] sm:$0xff]
  %v21 = vld [vmem:[%s0] sm:$0xff]
  %v22 = vld [vmem:[%s0 + $0x8] sm:$0xff]
  %v23 = vpack.c.bf16 %v22, %v21
  %v24 = vld [vmem:[%s1] sm:$0xf]
  %v25 = vld [vmem:[%s1 + $0x4] sm:$0xf]
  %v26 = vld [vmem:[%s1 + $0x8] sm:$0xf]
  %v27 = vld [vmem:[%s1 + $0xc] sm:$0xf]
  %v32 = vunpack.c.l.b16 %v24
  %v33 = vunpack.c.l.b16 %v25
  %v34 = vunpack.c.l.b16 %v26
  %v35 = vunpack.c.l.b16 %v27
  %v36 = vpack.c.b16 %v33, %v32
  %v37 = vpack.c.b16 %v35, %v34
  %vm40 = vcmask 261120
  %v42 = vsel %vm40, %v23, 0
  %44 = vmatprep.subr.bf16.mxu0 0
  %45 = vmatpush1.bf16.msra.mxu0 %v36
  %46 = vmatprep.subr.bf16.mxu0 0
  %47 = vmatpush1.bf16.msra.mxu0 %v37
  %48 = vmatprep.subr.bf16.mxu0 0
  %49 = vmatpush1.bf16.msra.mxu0 0
  %50 = vmatprep.subr.bf16.mxu0 0
  %51 = vmatpush1.bf16.msra.mxu0 0
  %52 = vmatprep.subr.bf16.mxu0 0
  %53 = vmatpush1.bf16.msra.mxu0 0
  %54 = vmatprep.subr.bf16.mxu0 0
  %55 = vmatpush1.bf16.msra.mxu0 0
  %56 = vmatprep.subr.bf16.mxu0 0
  %57 = vmatpush1.bf16.msra.mxu0 0
  %58 = vmatprep.subr.bf16.mxu0 0
  %59 = vmatpush1.bf16.msra.mxu0 0
  %60 = vmatprep.subr.bf16.mxu0 0
  %61 = vmatpush1.bf16.msra.mxu0 0
  %62 = vmatprep.subr.bf16.mxu0 0
  %63 = vmatpush1.bf16.msra.mxu0 0
  %64 = vmatprep.subr.bf16.mxu0 0
  %65 = vmatpush1.bf16.msra.mxu0 0
  %66 = vmatprep.subr.bf16.mxu0 0
  %67 = vmatpush1.bf16.msra.mxu0 0
  %68 = vmatprep.subr.bf16.mxu0 0
  %69 = vmatpush1.bf16.msra.mxu0 0
  %70 = vmatprep.subr.bf16.mxu0 0
  %71 = vmatpush1.bf16.msra.mxu0 0
  %72 = vmatprep.subr.bf16.mxu0 0
  %73 = vmatpush1.bf16.msra.mxu0 0
  %74 = vmatprep.subr.bf16.mxu0 0
  %75 = vmatpush1.bf16.msra.mxu0 0
  %76 = vmatprep.mubr.bf16.mxu0 0
  %77 = vmatmul.mubr.bf16.gmra.mrb[0].mxu0 %v42
  %v78 = vpop.f32.mrb[0].mxu0
  %v79 = vadd.f32 0.0, %v78
  %v80 = vpop.f32.mrb[0].mxu0
  %v81 = vpop.f32.mrb[0].mxu0
  %v82 = vadd.f32 0.0, %v81
  %v83 = vpop.f32.mrb[0].mxu0
  %84 = vdwg.mxu0
  %v85 = vadd.f32 %v19, %v79
  %v86 = vadd.f32 %v20, %v82
  %vm87 = vcmask 785408
  %88 = vst.msk [vmem:[#allocation2] sm:$0xff] %vm87, %v85
  %89 = vst.msk [vmem:[#allocation2 + $0x8] sm:$0xff] %vm87, %v86
  // Predicated region
  $region14: #{transformer_forward.25} parent=0 // pred_check
    %p90 = pneg %p12
  $region15: #{transformer_forward.25} parent=0 // pred_check_branch
    %92 = sbr.rel (%p90) target = $region17
  $region16: #{transformer_forward.25} parent=0 // pred_region
    %v93 = vld [vmem:[#allocation2] sm:$0xff]
    %v94 = vld [vmem:[#allocation2 + $0x8] sm:$0xff]
    %v95 = vpack.c.bf16 %v94, %v93
    %v97 = vunpack.c.l.b16 %v95
    %v98 = vunpack.c.h.b16 %v95
    %v99 = vpack.c.b16 %v97, %v97
    %v100 = vpack.c.b16 %v98, %v98
    %vm103 = vcmask 781312
    %104 = vst.msk [vmem:[%s2] sm:$0xf] %vm103, %v99
    %105 = vst.msk [vmem:[%s2 + $0x4] sm:$0xf] %vm103, %v100
  $region17: #{transformer_forward.25} parent=0 // pred_fallthru
    _
  // Predicated region
  $region18: #{transformer_forward.25} parent=0 // pred_check
    _
  $region19: #{transformer_forward.25} parent=0 // pred_check_branch
    %107 = sbr.rel (0) target = $region21
  $region20: #{transformer_forward.25} parent=0 // pred_region
    _
  $region21: #{transformer_forward.25} parent=0 // pred_fallthru
    _
  // Predicated region
  $region22: #{transformer_forward.25} parent=0 // pred_check
    _
  $region23: #{transformer_forward.25} parent=0 // pred_check_branch
    %109 = sbr.rel (0) target = $region25
  $region24: #{transformer_forward.25} parent=0 // pred_region
    _
  $region25: #{transformer_forward.25} parent=0 // pred_fallthru
    _

// kernel: transformer_forward.27
$region0: #{transformer_forward.27}
  #allocation0 [shape = 'u32[]', space=smem, size = 0x4, offset = 0x4, fixed_abs, tag = 'smem constant byte address 0x4 - core index']
  #allocation1 [shape = 'u32[144,128]{1,0:T(1,128)}', space=vmem, size = 0x12000, scoped, tag = 'internal scratch']
  #allocation2 [shape = 'f32[16,32]{1,0:T(8,128)}', space=vmem, size = 0x2000, scoped, tag = 'scratch operand']
  %s0 = inlined_call_operand.vmem [shape: f32[16,32], index: 0, kind: input, shape index: {}]
  %s1 = inlined_call_operand.vmem [shape: bf16[32,32], index: 1, kind: input, shape index: {}]
  %s2 = inlined_call_operand.vmem [shape: bf16[16,32], index: 2, kind: output, shape index: {}]
  %s3 = sld [smem:[#allocation0]]
  $region26: #{transformer_forward.27} parent=0
    _
  %s5 = ssub.s32 1, %s3
  %s6 = scalar_select 0, %s5, %s3
  // Predicated region
  $region2: #{transformer_forward.27} parent=0 // pred_check
    _
  $region3: #{transformer_forward.27} parent=0 // pred_check_branch
    %8 = sbr.rel (0) target = $region5
  $region4: #{transformer_forward.27} parent=0 // pred_region
    _
  $region5: #{transformer_forward.27} parent=0 // pred_fallthru
    _
  // Predicated region
  $region6: #{transformer_forward.27} parent=0 // pred_check
    _
  $region7: #{transformer_forward.27} parent=0 // pred_check_branch
    %10 = sbr.rel (0) target = $region9
  $region8: #{transformer_forward.27} parent=0 // pred_region
    _
  $region9: #{transformer_forward.27} parent=0 // pred_fallthru
    _
  %p12 = scmp.eq.s32.totalorder 0, 0
  // Predicated region
  $region10: #{transformer_forward.27} parent=0 // pred_check
    %p13 = pneg %p12
  $region11: #{transformer_forward.27} parent=0 // pred_check_branch
    %15 = sbr.rel (%p13) target = $region13
  $region12: #{transformer_forward.27} parent=0 // pred_region
    %vm16 = vcmask 261120
    %17 = vst.msk [vmem:[#allocation2] sm:$0xff] %vm16, 0.0
    %18 = vst.msk [vmem:[#allocation2 + $0x8] sm:$0xff] %vm16, 0.0
  $region13: #{transformer_forward.27} parent=0 // pred_fallthru
    _
  %v19 = vld [vmem:[#allocation2] sm:$0xff]
  %v20 = vld [vmem:[#allocation2 + $0x8] sm:$0xff]
  %v21 = vld [vmem:[%s0] sm:$0xff]
  %v22 = vld [vmem:[%s0 + $0x8] sm:$0xff]
  %v23 = vpack.c.bf16 %v22, %v21
  %v24 = vld [vmem:[%s1] sm:$0xf]
  %v25 = vld [vmem:[%s1 + $0x4] sm:$0xf]
  %v26 = vld [vmem:[%s1 + $0x8] sm:$0xf]
  %v27 = vld [vmem:[%s1 + $0xc] sm:$0xf]
  %v32 = vunpack.c.l.b16 %v24
  %v33 = vunpack.c.l.b16 %v25
  %v34 = vunpack.c.l.b16 %v26
  %v35 = vunpack.c.l.b16 %v27
  %v36 = vpack.c.b16 %v33, %v32
  %v37 = vpack.c.b16 %v35, %v34
  %vm40 = vcmask 261120
  %v42 = vsel %vm40, %v23, 0
  %44 = vmatprep.subr.bf16.mxu0 0
  %45 = vmatpush1.bf16.msra.mxu0 %v36
  %46 = vmatprep.subr.bf16.mxu0 0
  %47 = vmatpush1.bf16.msra.mxu0 %v37
  %48 = vmatprep.subr.bf16.mxu0 0
  %49 = vmatpush1.bf16.msra.mxu0 0
  %50 = vmatprep.subr.bf16.mxu0 0
  %51 = vmatpush1.bf16.msra.mxu0 0
  %52 = vmatprep.subr.bf16.mxu0 0
  %53 = vmatpush1.bf16.msra.mxu0 0
  %54 = vmatprep.subr.bf16.mxu0 0
  %55 = vmatpush1.bf16.msra.mxu0 0
  %56 = vmatprep.subr.bf16.mxu0 0
  %57 = vmatpush1.bf16.msra.mxu0 0
  %58 = vmatprep.subr.bf16.mxu0 0
  %59 = vmatpush1.bf16.msra.mxu0 0
  %60 = vmatprep.subr.bf16.mxu0 0
  %61 = vmatpush1.bf16.msra.mxu0 0
  %62 = vmatprep.subr.bf16.mxu0 0
  %63 = vmatpush1.bf16.msra.mxu0 0
  %64 = vmatprep.subr.bf16.mxu0 0
  %65 = vmatpush1.bf16.msra.mxu0 0
  %66 = vmatprep.subr.bf16.mxu0 0
  %67 = vmatpush1.bf16.msra.mxu0 0
  %68 = vmatprep.subr.bf16.mxu0 0
  %69 = vmatpush1.bf16.msra.mxu0 0
  %70 = vmatprep.subr.bf16.mxu0 0
  %71 = vmatpush1.bf16.msra.mxu0 0
  %72 = vmatprep.subr.bf16.mxu0 0
  %73 = vmatpush1.bf16.msra.mxu0 0
  %74 = vmatprep.subr.bf16.mxu0 0
  %75 = vmatpush1.bf16.msra.mxu0 0
  %76 = vmatprep.mubr.bf16.mxu0 0
  %77 = vmatmul.mubr.bf16.gmra.mrb[0].mxu0 %v42
  %v78 = vpop.f32.mrb[0].mxu0
  %v79 = vadd.f32 0.0, %v78
  %v80 = vpop.f32.mrb[0].mxu0
  %v81 = vpop.f32.mrb[0].mxu0
  %v82 = vadd.f32 0.0, %v81
  %v83 = vpop.f32.mrb[0].mxu0
  %84 = vdwg.mxu0
  %v85 = vadd.f32 %v19, %v79
  %v86 = vadd.f32 %v20, %v82
  %87 = vst.msk [vmem:[#allocation2] sm:$0xff] %vm40, %v85
  %88 = vst.msk [vmem:[#allocation2 + $0x8] sm:$0xff] %vm40, %v86
  // Predicated region
  $region14: #{transformer_forward.27} parent=0 // pred_check
    %p89 = pneg %p12
  $region15: #{transformer_forward.27} parent=0 // pred_check_branch
    %91 = sbr.rel (%p89) target = $region17
  $region16: #{transformer_forward.27} parent=0 // pred_region
    %v92 = vld [vmem:[#allocation2] sm:$0xff]
    %v93 = vld [vmem:[#allocation2 + $0x8] sm:$0xff]
    %v94 = vpack.c.bf16 %v93, %v92
    %v96 = vunpack.c.l.b16 %v94
    %v97 = vunpack.c.h.b16 %v94
    %v98 = vpack.c.b16 %v96, %v96
    %v99 = vpack.c.b16 %v97, %v97
    %vm102 = vcmask 257024
    %103 = vst.msk [vmem:[%s2] sm:$0xf] %vm102, %v98
    %104 = vst.msk [vmem:[%s2 + $0x4] sm:$0xf] %vm102, %v99
  $region17: #{transformer_forward.27} parent=0 // pred_fallthru
    _
  // Predicated region
  $region18: #{transformer_forward.27} parent=0 // pred_check
    _
  $region19: #{transformer_forward.27} parent=0 // pred_check_branch
    %106 = sbr.rel (0) target = $region21
  $region20: #{transformer_forward.27} parent=0 // pred_region
    _
  $region21: #{transformer_forward.27} parent=0 // pred_fallthru
    _
  // Predicated region
  $region22: #{transformer_forward.27} parent=0 // pred_check
    _
  $region23: #{transformer_forward.27} parent=0 // pred_check_branch
    %108 = sbr.rel (0) target = $region25
  $region24: #{transformer_forward.27} parent=0 // pred_region
    _
  $region25: #{transformer_forward.27} parent=0 // pred_fallthru
    _

// kernel: transformer_forward.26
$region0: #{transformer_forward.26}
  #allocation0 [shape = 'u32[]', space=smem, size = 0x4, offset = 0x4, fixed_abs, tag = 'smem constant byte address 0x4 - core index']
  #allocation1 [shape = 'u32[144,128]{1,0:T(1,128)}', space=vmem, size = 0x12000, scoped, tag = 'internal scratch']
  #allocation2 [shape = 'f32[8,32]{1,0:T(8,128)}', space=vmem, size = 0x1000, scoped, tag = 'scratch operand']
  %s0 = inlined_call_operand.vmem [shape: bf16[2,4,8,8], index: 0, kind: input, shape index: {}]
  %s1 = inlined_call_operand.vmem [shape: bf16[2,4,8,8], index: 1, kind: input, shape index: {}]
  %s2 = inlined_call_operand.vmem [shape: bf16[2,4,8,8], index: 2, kind: input, shape index: {}]
  %s3 = inlined_call_operand.vmem [shape: f32[2,8,32], index: 3, kind: input, shape index: {}]
  %s4 = inlined_call_operand.vmem [shape: s32[2,1,8], index: 4, kind: input, shape index: {}]
  %s5 = inlined_call_operand.vmem [shape: bf16[4,8,32], index: 5, kind: input, shape index: {}]
  %s6 = inlined_call_operand.vmem [shape: f32[1,32], index: 6, kind: input, shape index: {}]
  %s7 = inlined_call_operand.vmem [shape: f32[1,32], index: 7, kind: input, shape index: {}]
  %s8 = inlined_call_operand.vmem [shape: f32[1,32], index: 8, kind: input, shape index: {}]
  %s9 = inlined_call_operand.vmem [shape: f32[2,8,32], index: 9, kind: output, shape index: {}]
  %s10 = sld [smem:[#allocation0]]
  $region69: #{transformer_forward.26} parent=0
    _
  %s12 = ssub.s32 1, %s10
  %s13 = scalar_select 0, %s12, %s10
  loop: start=0, step=1, limit=4
  $region2: #{transformer_forward.26} parent=0 // loop_pre_header
    _
  $region3: #{transformer_forward.26} parent=0 // loop_header
    %s15 = sphi 0, %s19
    %p16 = scmp.ge.s32.totalorder %s15, 4
    %s22 = sphi 0, %s34
    %s23 = sphi 0, %s30
    %s24 = sphi 0, %s22
    %s25 = sphi 0, %s23
    %s26 = sphi 0, %s24
    %s27 = sphi 0, %s25
    %s39 = sphi 0, %s41
    %s42 = sphi 0, %s39
    %s43 = sphi 0, %s42
    %s59 = sphi 0, %s43
    %s65 = sphi 0, %s67
    %s68 = sphi 0, %s65
    %s69 = sphi 0, %s68
    %s85 = sphi 0, %s69
    %s91 = sphi 0, %s93
    %s94 = sphi 0, %s91
    %s95 = sphi 0, %s94
    %s111 = sphi 0, %s95
    %s119 = sphi 0, %s121
    %s122 = sphi 0, %s119
    %s123 = sphi 0, %s122
    %s139 = sphi 0, %s123
    %s145 = sphi 0, %s147
    %s148 = sphi 0, %s145
    %s149 = sphi 0, %s148
    %s165 = sphi 0, %s149
    %s169 = sphi 0, %s169
    %s171 = sphi 0, %s169
    %s172 = sphi 0, %s171
    %s186 = sphi 0, %s172
    %s190 = sphi 0, %s190
    %s192 = sphi 0, %s190
    %s193 = sphi 0, %s192
    %s207 = sphi 0, %s193
    %s211 = sphi 0, %s211
    %s213 = sphi 0, %s211
    %s214 = sphi 0, %s213
    %s228 = sphi 0, %s214
    %s232 = sphi 0, %s232
    %s234 = sphi 0, %s232
    %s235 = sphi 0, %s234
    %s249 = sphi 0, %s235
    %s257 = sphi 0, %s259
    %s260 = sphi 0, %s257
    %s261 = sphi 0, %s260
    %s277 = sphi 0, %s261
  $region4: #{transformer_forward.26} parent=0 // loop_header_branch
    %18 = sbr.rel (%p16) target = $region8
  $region5: #{transformer_forward.26} parent=0 // loop_body
    %s20 = ssub.s32 %s15, 1
    %s21 = ssub.s32 %s15, 2
    %s28 = sadd.s32 1, %s23
    %p29 = scmp.ge.s32.totalorder %s28, 1
    %s30 = scalar_select %p29, 0, %s28
    %s31 = sadd.s32 1, %s22
    %s32 = scalar_select %p29, %s31, %s22
    %p33 = scmp.ge.s32.totalorder %s32, 2
    %s34 = scalar_select %p33, 0, %s32
    %s35 = ssub.s32 %s22, %s34
    %s36 = ssub.s32 %s23, %s30
    %s37 = sor.u32 %s35, %s36
    %p38 = scmp.eq.s32.totalorder %s37, 0
    %s40 = sadd.s32 %s39, 1
    %s41 = scalar_select %p38, %s39, %s40
    %p44 = pneg %p38
    %p45 = scmp.eq.s32.totalorder %s15, 1
    %p46 = por %p44, %p45
    %p47 = scmp.ne.s32.totalorder %s39, %s42
    %p48 = scmp.eq.s32.totalorder %s15, 0
    %p49 = por %p47, %p48
    %p50 = scmp.ne.s32.totalorder %s39, %s42
    %p51 = scmp.eq.s32.totalorder %s20, 1
    %p52 = por %p50, %p51
    %p53 = scmp.ne.s32.totalorder %s42, %s43
    %p54 = scmp.eq.s32.totalorder %s20, 0
    %p55 = por %p53, %p54
    %p56 = scmp.ne.s32.totalorder %s42, %s43
    %p57 = scmp.eq.s32.totalorder %s21, 1
    %p58 = por %p56, %p57
    %p60 = scmp.ne.s32.totalorder %s43, %s59
    %p61 = scmp.eq.s32.totalorder %s21, 0
    %p62 = por %p60, %p61
    %s63 = ssub.s32 %s22, %s34
    %p64 = scmp.eq.s32.totalorder %s63, 0
    %s66 = sadd.s32 %s65, 1
    %s67 = scalar_select %p64, %s65, %s66
    %p70 = pneg %p64
    %p71 = scmp.eq.s32.totalorder %s15, 1
    %p72 = por %p70, %p71
    %p73 = scmp.ne.s32.totalorder %s65, %s68
    %p74 = scmp.eq.s32.totalorder %s15, 0
    %p75 = por %p73, %p74
    %p76 = scmp.ne.s32.totalorder %s65, %s68
    %p77 = scmp.eq.s32.totalorder %s20, 1
    %p78 = por %p76, %p77
    %p79 = scmp.ne.s32.totalorder %s68, %s69
    %p80 = scmp.eq.s32.totalorder %s20, 0
    %p81 = por %p79, %p80
    %p82 = scmp.ne.s32.totalorder %s68, %s69
    %p83 = scmp.eq.s32.totalorder %s21, 1
    %p84 = por %p82, %p83
    %p86 = scmp.ne.s32.totalorder %s69, %s85
    %p87 = scmp.eq.s32.totalorder %s21, 0
    %p88 = por %p86, %p87
    %s89 = ssub.s32 %s22, %s34
    %p90 = scmp.eq.s32.totalorder %s89, 0
    %s92 = sadd.s32 %s91, 1
    %s93 = scalar_select %p90, %s91, %s92
    %p96 = pneg %p90
    %p97 = scmp.eq.s32.totalorder %s15, 1
    %p98 = por %p96, %p97
    %p99 = scmp.ne.s32.totalorder %s91, %s94
    %p100 = scmp.eq.s32.totalorder %s15, 0
    %p101 = por %p99, %p100
    %p102 = scmp.ne.s32.totalorder %s91, %s94
    %p103 = scmp.eq.s32.totalorder %s20, 1
    %p104 = por %p102, %p103
    %p105 = scmp.ne.s32.totalorder %s94, %s95
    %p106 = scmp.eq.s32.totalorder %s20, 0
    %p107 = por %p105, %p106
    %p108 = scmp.ne.s32.totalorder %s94, %s95
    %p109 = scmp.eq.s32.totalorder %s21, 1
    %p110 = por %p108, %p109
    %p112 = scmp.ne.s32.totalorder %s95, %s111
    %p113 = scmp.eq.s32.totalorder %s21, 0
    %p114 = por %p112, %p113
    %s115 = ssub.s32 %s22, %s34
    %s116 = ssub.s32 %s23, %s30
    %s117 = sor.u32 %s115, %s116
    %p118 = scmp.eq.s32.totalorder %s117, 0
    %s120 = sadd.s32 %s119, 1
    %s121 = scalar_select %p118, %s119, %s120
    %p124 = pneg %p118
    %p125 = scmp.eq.s32.totalorder %s15, 1
    %p126 = por %p124, %p125
    %p127 = scmp.ne.s32.totalorder %s119, %s122
    %p128 = scmp.eq.s32.totalorder %s15, 0
    %p129 = por %p127, %p128
    %p130 = scmp.ne.s32.totalorder %s119, %s122
    %p131 = scmp.eq.s32.totalorder %s20, 1
    %p132 = por %p130, %p131
    %p133 = scmp.ne.s32.totalorder %s122, %s123
    %p134 = scmp.eq.s32.totalorder %s20, 0
    %p135 = por %p133, %p134
    %p136 = scmp.ne.s32.totalorder %s122, %s123
    %p137 = scmp.eq.s32.totalorder %s21, 1
    %p138 = por %p136, %p137
    %p140 = scmp.ne.s32.totalorder %s123, %s139
    %p141 = scmp.eq.s32.totalorder %s21, 0
    %p142 = por %p140, %p141
    %s143 = ssub.s32 %s22, %s34
    %p144 = scmp.eq.s32.totalorder %s143, 0
    %s146 = sadd.s32 %s145, 1
    %s147 = scalar_select %p144, %s145, %s146
    %p150 = pneg %p144
    %p151 = scmp.eq.s32.totalorder %s15, 1
    %p152 = por %p150, %p151
    %p153 = scmp.ne.s32.totalorder %s145, %s148
    %p154 = scmp.eq.s32.totalorder %s15, 0
    %p155 = por %p153, %p154
    %p156 = scmp.ne.s32.totalorder %s145, %s148
    %p157 = scmp.eq.s32.totalorder %s20, 1
    %p158 = por %p156, %p157
    %p159 = scmp.ne.s32.totalorder %s148, %s149
    %p160 = scmp.eq.s32.totalorder %s20, 0
    %p161 = por %p159, %p160
    %p162 = scmp.ne.s32.totalorder %s148, %s149
    %p163 = scmp.eq.s32.totalorder %s21, 1
    %p164 = por %p162, %p163
    %p166 = scmp.ne.s32.totalorder %s149, %s165
    %p167 = scmp.eq.s32.totalorder %s21, 0
    %p168 = por %p166, %p167
    %s170 = sadd.s32 %s169, 1
    %p173 = scmp.eq.s32.totalorder %s15, 1
    %p174 = scmp.ne.s32.totalorder %s169, %s171
    %p175 = scmp.eq.s32.totalorder %s15, 0
    %p176 = por %p174, %p175
    %p177 = scmp.ne.s32.totalorder %s169, %s171
    %p178 = scmp.eq.s32.totalorder %s20, 1
    %p179 = por %p177, %p178
    %p180 = scmp.ne.s32.totalorder %s171, %s172
    %p181 = scmp.eq.s32.totalorder %s20, 0
    %p182 = por %p180, %p181
    %p183 = scmp.ne.s32.totalorder %s171, %s172
    %p184 = scmp.eq.s32.totalorder %s21, 1
    %p185 = por %p183, %p184
    %p187 = scmp.ne.s32.totalorder %s172, %s186
    %p188 = scmp.eq.s32.totalorder %s21, 0
    %p189 = por %p187, %p188
    %s191 = sadd.s32 %s190, 1
    %p194 = scmp.eq.s32.totalorder %s15, 1
    %p195 = scmp.ne.s32.totalorder %s190, %s192
    %p196 = scmp.eq.s32.totalorder %s15, 0
    %p197 = por %p195, %p196
    %p198 = scmp.ne.s32.totalorder %s190, %s192
    %p199 = scmp.eq.s32.totalorder %s20, 1
    %p200 = por %p198, %p199
    %p201 = scmp.ne.s32.totalorder %s192, %s193
    %p202 = scmp.eq.s32.totalorder %s20, 0
    %p203 = por %p201, %p202
    %p204 = scmp.ne.s32.totalorder %s192, %s193
    %p205 = scmp.eq.s32.totalorder %s21, 1
    %p206 = por %p204, %p205
    %p208 = scmp.ne.s32.totalorder %s193, %s207
    %p209 = scmp.eq.s32.totalorder %s21, 0
    %p210 = por %p208, %p209
    %s212 = sadd.s32 %s211, 1
    %p215 = scmp.eq.s32.totalorder %s15, 1
    %p216 = scmp.ne.s32.totalorder %s211, %s213
    %p217 = scmp.eq.s32.totalorder %s15, 0
    %p218 = por %p216, %p217
    %p219 = scmp.ne.s32.totalorder %s211, %s213
    %p220 = scmp.eq.s32.totalorder %s20, 1
    %p221 = por %p219, %p220
    %p222 = scmp.ne.s32.totalorder %s213, %s214
    %p223 = scmp.eq.s32.totalorder %s20, 0
    %p224 = por %p222, %p223
    %p225 = scmp.ne.s32.totalorder %s213, %s214
    %p226 = scmp.eq.s32.totalorder %s21, 1
    %p227 = por %p225, %p226
    %p229 = scmp.ne.s32.totalorder %s214, %s228
    %p230 = scmp.eq.s32.totalorder %s21, 0
    %p231 = por %p229, %p230
    %s233 = sadd.s32 %s232, 1
    %p236 = scmp.eq.s32.totalorder %s15, 1
    %p237 = scmp.ne.s32.totalorder %s232, %s234
    %p238 = scmp.eq.s32.totalorder %s15, 0
    %p239 = por %p237, %p238
    %p240 = scmp.ne.s32.totalorder %s232, %s234
    %p241 = scmp.eq.s32.totalorder %s20, 1
    %p242 = por %p240, %p241
    %p243 = scmp.ne.s32.totalorder %s234, %s235
    %p244 = scmp.eq.s32.totalorder %s20, 0
    %p245 = por %p243, %p244
    %p246 = scmp.ne.s32.totalorder %s234, %s235
    %p247 = scmp.eq.s32.totalorder %s21, 1
    %p248 = por %p246, %p247
    %p250 = scmp.ne.s32.totalorder %s235, %s249
    %p251 = scmp.eq.s32.totalorder %s21, 0
    %p252 = por %p250, %p251
    %s253 = ssub.s32 %s22, %s34
    %s254 = ssub.s32 %s23, %s30
    %s255 = sor.u32 %s253, %s254
    %p256 = scmp.eq.s32.totalorder %s255, 0
    %s258 = sadd.s32 %s257, 1
    %s259 = scalar_select %p256, %s257, %s258
    %p262 = pneg %p256
    %p263 = scmp.eq.s32.totalorder %s15, 1
    %p264 = por %p262, %p263
    %p265 = scmp.ne.s32.totalorder %s257, %s260
    %p266 = scmp.eq.s32.totalorder %s15, 0
    %p267 = por %p265, %p266
    %p268 = scmp.ne.s32.totalorder %s257, %s260
    %p269 = scmp.eq.s32.totalorder %s20, 1
    %p270 = por %p268, %p269
    %p271 = scmp.ne.s32.totalorder %s260, %s261
    %p272 = scmp.eq.s32.totalorder %s20, 0
    %p273 = por %p271, %p272
    %p274 = scmp.ne.s32.totalorder %s260, %s261
    %p275 = scmp.eq.s32.totalorder %s21, 1
    %p276 = por %p274, %p275
    %p278 = scmp.ne.s32.totalorder %s261, %s277
    %p279 = scmp.eq.s32.totalorder %s21, 0
    %p280 = por %p278, %p279
    %p281 = scmp.le.s32.totalorder 1, %s15
    %p282 = scmp.lt.s32.totalorder %s15, 3
    %p283 = pnand %p281, %p282
    %p284 = pneg %p283
    // Predicated region
    $region9: #{transformer_forward.26} parent=5 // pred_check
      _
    $region10: #{transformer_forward.26} parent=5 // pred_check_branch
      %286 = sbr.rel (%p283) target = $region12
    $region11: #{transformer_forward.26} parent=5 // pred_region
      %s287 = ssub.s32 %s15, 1
      // Predicated region
      $region13: #{transformer_forward.26} parent=11 // pred_check
        %p288 = pneg %p182
      $region14: #{transformer_forward.26} parent=11 // pred_check_branch
        %290 = sbr.rel (%p288) target = $region16
      $region15: #{transformer_forward.26} parent=11 // pred_region
        _
      $region16: #{transformer_forward.26} parent=11 // pred_fallthru
        _
      // Predicated region
      $region17: #{transformer_forward.26} parent=11 // pred_check
        %p291 = pneg %p203
      $region18: #{transformer_forward.26} parent=11 // pred_check_branch
        %293 = sbr.rel (%p291) target = $region20
      $region19: #{transformer_forward.26} parent=11 // pred_region
        _
      $region20: #{transformer_forward.26} parent=11 // pred_fallthru
        _
      // Predicated region
      $region21: #{transformer_forward.26} parent=11 // pred_check
        %p294 = pneg %p224
      $region22: #{transformer_forward.26} parent=11 // pred_check_branch
        %296 = sbr.rel (%p294) target = $region24
      $region23: #{transformer_forward.26} parent=11 // pred_region
        _
      $region24: #{transformer_forward.26} parent=11 // pred_fallthru
        _
      // Predicated region
      $region25: #{transformer_forward.26} parent=11 // pred_check
        %p297 = pneg %p245
      $region26: #{transformer_forward.26} parent=11 // pred_check_branch
        %299 = sbr.rel (%p297) target = $region28
      $region27: #{transformer_forward.26} parent=11 // pred_region
        _
      $region28: #{transformer_forward.26} parent=11 // pred_fallthru
        _
    $region12: #{transformer_forward.26} parent=5 // pred_fallthru
      _
    %p300 = scmp.lt.s32.totalorder %s15, 2
    // Predicated region
    $region29: #{transformer_forward.26} parent=5 // pred_check
      %p301 = pneg %p300
    $region30: #{transformer_forward.26} parent=5 // pred_check_branch
      %303 = sbr.rel (%p301) target = $region32
    $region31: #{transformer_forward.26} parent=5 // pred_region
      // Predicated region
      $region33: #{transformer_forward.26} parent=31 // pred_check
        %p304 = pneg %p49
      $region34: #{transformer_forward.26} parent=31 // pred_check_branch
        %306 = sbr.rel (%p304) target = $region36
      $region35: #{transformer_forward.26} parent=31 // pred_region
        %p307 = scmp.lt.s32.totalorder %s22, 1
        %s308 = scalar_select %p307, %s22, 1
        %p309 = scmp.lt.s32.totalorder %s23, 0
        %s310 = scalar_select %p309, %s23, 0
        %s311 = smul.addr %s308, 4
        %s312 = sadd.s32 %s310, %s311
        %s313 = smul.addr %s312, 4
        %s314 = scalar_lea.vmem %s0, %s313
      $region36: #{transformer_forward.26} parent=31 // pred_fallthru
        _
      // Predicated region
      $region37: #{transformer_forward.26} parent=31 // pred_check
        %p315 = pneg %p75
      $region38: #{transformer_forward.26} parent=31 // pred_check_branch
        %317 = sbr.rel (%p315) target = $region40
      $region39: #{transformer_forward.26} parent=31 // pred_region
        %p318 = scmp.lt.s32.totalorder %s22, 1
        %s319 = scalar_select %p318, %s22, 1
        %s320 = smul.addr %s319, 4
        %s321 = smul.addr %s320, 4
        %s322 = scalar_lea.vmem %s1, %s321
      $region40: #{transformer_forward.26} parent=31 // pred_fallthru
        _
      // Predicated region
      $region41: #{transformer_forward.26} parent=31 // pred_check
        %p323 = pneg %p101
      $region42: #{transformer_forward.26} parent=31 // pred_check_branch
        %325 = sbr.rel (%p323) target = $region44
      $region43: #{transformer_forward.26} parent=31 // pred_region
        %p326 = scmp.lt.s32.totalorder %s22, 1
        %s327 = scalar_select %p326, %s22, 1
        %s328 = smul.addr %s327, 4
        %s329 = smul.addr %s328, 4
        %s330 = scalar_lea.vmem %s2, %s329
      $region44: #{transformer_forward.26} parent=31 // pred_fallthru
        _
      // Predicated region
      $region45: #{transformer_forward.26} parent=31 // pred_check
        %p331 = pneg %p129
      $region46: #{transformer_forward.26} parent=31 // pred_check_branch
        %333 = sbr.rel (%p331) target = $region48
      $region47: #{transformer_forward.26} parent=31 // pred_region
        %p334 = scmp.lt.s32.totalorder %s22, 1
        %s335 = scalar_select %p334, %s22, 1
        %p336 = scmp.lt.s32.totalorder %s23, 0
        %s337 = scalar_select %p336, %s23, 0
        %s338 = sadd.s32 %s337, %s335
        %s339 = smul.addr %s338, 8
        %s340 = scalar_lea.vmem %s3, %s339
      $region48: #{transformer_forward.26} parent=31 // pred_fallthru
        _
      // Predicated region
      $region49: #{transformer_forward.26} parent=31 // pred_check
        %p341 = pneg %p155
      $region50: #{transformer_forward.26} parent=31 // pred_check_branch
        %343 = sbr.rel (%p341) target = $region52
      $region51: #{transformer_forward.26} parent=31 // pred_region
        %p344 = scmp.lt.s32.totalorder %s22, 1
        %s345 = scalar_select %p344, %s22, 1
        %s346 = scalar_lea.vmem %s4, %s345
      $region52: #{transformer_forward.26} parent=31 // pred_fallthru
        _
    $region32: #{transformer_forward.26} parent=5 // pred_fallthru
      _
    %p347 = scmp.le.s32.totalorder 1, %s15
    %p348 = scmp.lt.s32.totalorder %s15, 3
    %p349 = pnand %p347, %p348
    %p350 = pneg %p349
    // Predicated region
    $region53: #{transformer_forward.26} parent=5 // pred_check
      _
    $region54: #{transformer_forward.26} parent=5 // pred_check_branch
      %352 = sbr.rel (%p349) target = $region56
    $region55: #{transformer_forward.26} parent=5 // pred_region
      %s353 = ssub.s32 %s15, 1
      %p354 = scmp.lt.s32.totalorder %s24, 1
      %s355 = scalar_select %p354, %s24, 1
      %p356 = scmp.lt.s32.totalorder %s25, 0
      %s357 = scalar_select %p356, %s25, 0
      %s358 = smul.addr %s355, 4
      %s359 = sadd.s32 %s357, %s358
      %s360 = smul.addr %s359, 4
      %s361 = scalar_lea.vmem %s0, %s360
      %p362 = pneg %p55
      %p363 = pneg %p52
      %p364 = scmp.lt.s32.totalorder %s24, 1
      %s365 = scalar_select %p364, %s24, 1
      %s366 = smul.addr %s365, 4
      %s367 = smul.addr %s366, 4
      %s368 = scalar_lea.vmem %s1, %s367
      %p369 = pneg %p81
      %p370 = pneg %p78
      %p371 = scmp.lt.s32.totalorder %s24, 1
      %s372 = scalar_select %p371, %s24, 1
      %s373 = smul.addr %s372, 4
      %s374 = smul.addr %s373, 4
      %s375 = scalar_lea.vmem %s2, %s374
      %p376 = pneg %p107
      %p377 = pneg %p104
      %p378 = scmp.lt.s32.totalorder %s24, 1
      %s379 = scalar_select %p378, %s24, 1
      %p380 = scmp.lt.s32.totalorder %s25, 0
      %s381 = scalar_select %p380, %s25, 0
      %s382 = sadd.s32 %s381, %s379
      %s383 = smul.addr %s382, 8
      %s384 = scalar_lea.vmem %s3, %s383
      %p385 = pneg %p135
      %p386 = pneg %p132
      %p387 = scmp.lt.s32.totalorder %s24, 1
      %s388 = scalar_select %p387, %s24, 1
      %s389 = scalar_lea.vmem %s4, %s388
      %p390 = pneg %p161
      %p391 = pneg %p158
      %p392 = pneg %p182
      %p393 = pneg %p179
      %p394 = pneg %p203
      %p395 = pneg %p200
      %p396 = pneg %p224
      %p397 = pneg %p221
      %p398 = pneg %p245
      %p399 = pneg %p242
      %p400 = pneg %p273
      %p401 = pneg %p270
      %p402 = scmp.lt.s32.totalorder %s24, 1
      %s403 = scalar_select %p402, %s24, 1
      %p404 = scmp.lt.s32.totalorder %s25, 0
      %s405 = scalar_select %p404, %s25, 0
      %s406 = sadd.s32 %s405, %s403
      %s407 = smul.addr %s406, 8
      %s408 = scalar_lea.vmem %s9, %s407
      %p409 = scmp.lt.s32.totalorder %s24, 1
      %s410 = scalar_select %p409, %s24, 1
      %p411 = scmp.lt.s32.totalorder %s25, 0
      %s412 = scalar_select %p411, %s25, 0
      %s413 = smul.addr %s410, 4
      %s414 = sadd.s32 %s412, %s413
      %s415 = smul.addr %s414, 4
      %s416 = scalar_lea.vmem %s0, %s415
      %p417 = scmp.lt.s32.totalorder %s24, 1
      %s418 = scalar_select %p417, %s24, 1
      %s419 = smul.addr %s418, 4
      %s420 = smul.addr %s419, 4
      %s421 = scalar_lea.vmem %s1, %s420
      %p422 = scmp.lt.s32.totalorder %s24, 1
      %s423 = scalar_select %p422, %s24, 1
      %s424 = smul.addr %s423, 4
      %s425 = smul.addr %s424, 4
      %s426 = scalar_lea.vmem %s2, %s425
      %p427 = scmp.lt.s32.totalorder %s24, 1
      %s428 = scalar_select %p427, %s24, 1
      %p429 = scmp.lt.s32.totalorder %s25, 0
      %s430 = scalar_select %p429, %s25, 0
      %s431 = sadd.s32 %s430, %s428
      %s432 = smul.addr %s431, 8
      %s433 = scalar_lea.vmem %s3, %s432
      %p434 = scmp.lt.s32.totalorder %s24, 1
      %s435 = scalar_select %p434, %s24, 1
      %s436 = scalar_lea.vmem %s4, %s435
      %p437 = scmp.lt.s32.totalorder %s24, 1
      %s438 = scalar_select %p437, %s24, 1
      %p439 = scmp.lt.s32.totalorder %s25, 0
      %s440 = scalar_select %p439, %s25, 0
      %s441 = sadd.s32 %s440, %s438
      %s442 = smul.addr %s441, 8
      %s443 = scalar_lea.vmem %s9, %s442
      %v445 = vld [vmem:[%s436] sm:$0x1]
      %vm446 = vcmp.ne.s32.totalorder %v445, 0
      %v447 = vsel %vm446, 1, 0
      %v448 = vlaneseq
      %v449 = vshrl.u32 %v448, 7
      %v450 = vsub.s32 0, %v449
      %v451 = vrot.slane %v447, %v450
      %vm452 = vcmp.eq.s32.totalorder %v451, 1
      %s453 = smul.u32 %s25, 8
      %v454 = vlaneseq
      %v455 = vshrl.u32 %v454, 7
      %v456 = vstv %s453
      %v457 = vadd.s32 %v455, %v456
      %v458 = vlaneseq
      %v459 = vand.u32 %v458, 127
      %vm460 = vcmp.le.s32.totalorder %v459, %v457
      %vm461 = vmand %vm452, %vm460
      %vm462 = vcmask 261120
      %463 = vst.msk [vmem:[#allocation2] sm:$0xff] %vm462, 0.0
      %v464 = vld [vmem:[%s416] sm:$0xf]
      %v465 = vld [vmem:[%s421] sm:$0xf]
      %v466 = vld [vmem:[%s426] sm:$0xf]
      %vm467 = vcmask 64512
      %v469 = vsel %vm467, %v464, 0
      %v472 = vsel %vm467, %v465, 0
      %474 = vmatprep.subr.bf16.mxu0 0
      %475 = vmatpush1.bf16.xpose.msra.mxu0 %v472
      %476 = vmatprep.subr.bf16.mxu0 0
      %477 = vmatpush1.bf16.xpose.msra.mxu0 0
      %478 = vmatprep.subr.bf16.mxu0 0
      %479 = vmatpush1.bf16.xpose.msra.mxu0 0
      %480 = vmatprep.subr.bf16.mxu0 0
      %481 = vmatpush1.bf16.xpose.msra.mxu0 0
      %482 = vmatprep.subr.bf16.mxu0 0
      %483 = vmatpush1.bf16.xpose.msra.mxu0 0
      %484 = vmatprep.subr.bf16.mxu0 0
      %485 = vmatpush1.bf16.xpose.msra.mxu0 0
      %486 = vmatprep.subr.bf16.mxu0 0
      %487 = vmatpush1.bf16.xpose.msra.mxu0 0
      %488 = vmatprep.subr.bf16.mxu0 0
      %489 = vmatpush1.bf16.xpose.msra.mxu0 0
      %490 = vmatprep.subr.bf16.mxu0 0
      %491 = vmatpush1.bf16.xpose.msra.mxu0 0
      %492 = vmatprep.subr.bf16.mxu0 0
      %493 = vmatpush1.bf16.xpose.msra.mxu0 0
      %494 = vmatprep.subr.bf16.mxu0 0
      %495 = vmatpush1.bf16.xpose.msra.mxu0 0
      %496 = vmatprep.subr.bf16.mxu0 0
      %497 = vmatpush1.bf16.xpose.msra.mxu0 0
      %498 = vmatprep.subr.bf16.mxu0 0
      %499 = vmatpush1.bf16.xpose.msra.mxu0 0
      %500 = vmatprep.subr.bf16.mxu0 0
      %501 = vmatpush1.bf16.xpose.msra.mxu0 0
      %502 = vmatprep.subr.bf16.mxu0 0
      %503 = vmatpush1.bf16.xpose.msra.mxu0 0
      %504 = vmatprep.subr.bf16.mxu0 0
      %505 = vmatpush1.bf16.xpose.msra.mxu0 0
      %506 = vmatprep.mubr.bf16.mxu0 0
      %507 = vmatmul.mubr.bf16.gmra.mrb[0].mxu0 %v469
      %v508 = vpop.f32.mrb[0].mxu0
      %v509 = vadd.f32 0.0, %v508
      %v510 = vpop.f32.mrb[0].mxu0
      %v511 = vpop.f32.mrb[0].mxu0
      %v512 = vpop.f32.mrb[0].mxu0
      %513 = vdwg.mxu0
      %v514 = vmul.f32 %v509, 0.35355338
      %v515 = vsel %vm461, %v514, -1e+20
      %v516 = vsel %vm467, %v515, -inf
      %517 = vmax.xlane.f32.xlu0 %v516
      %v518 = vpop.xlane.xlu0 %517
      %v519 = vsub.f32 %v515, %v518
      %v520 = vmul.f32 %v519, 1.442695
      %v521 = vpow.pop %v520
      %v522 = vsel %vm467, %v521, 0.0
      %523 = vadd.xlane.f32.xlu0 %v522
      %v524 = vpop.xlane.xlu0 %523
      %v525 = vrcp.pop %v524
      %v526 = vmul.f32 %v521, %v525
      %v527 = vpack.c.bf16 %v526, %v526
      %v529 = vsel %vm467, %v527, 0
      %vm531 = vcmask 1043456
      %v533 = vsel %vm531, %v466, 0
      %535 = vmatprep.subr.bf16.mxu0 0
      %536 = vmatpush1.bf16.msra.mxu0 %v533
      %537 = vmatprep.subr.bf16.mxu0 0
      %538 = vmatpush1.bf16.msra.mxu0 0
      %539 = vmatprep.subr.bf16.mxu0 0
      %540 = vmatpush1.bf16.msra.mxu0 0
      %541 = vmatprep.subr.bf16.mxu0 0
      %542 = vmatpush1.bf16.msra.mxu0 0
      %543 = vmatprep.subr.bf16.mxu0 0
      %544 = vmatpush1.bf16.msra.mxu0 0
      %545 = vmatprep.subr.bf16.mxu0 0
      %546 = vmatpush1.bf16.msra.mxu0 0
      %547 = vmatprep.subr.bf16.mxu0 0
      %548 = vmatpush1.bf16.msra.mxu0 0
      %549 = vmatprep.subr.bf16.mxu0 0
      %550 = vmatpush1.bf16.msra.mxu0 0
      %551 = vmatprep.subr.bf16.mxu0 0
      %552 = vmatpush1.bf16.msra.mxu0 0
      %553 = vmatprep.subr.bf16.mxu0 0
      %554 = vmatpush1.bf16.msra.mxu0 0
      %555 = vmatprep.subr.bf16.mxu0 0
      %556 = vmatpush1.bf16.msra.mxu0 0
      %557 = vmatprep.subr.bf16.mxu0 0
      %558 = vmatpush1.bf16.msra.mxu0 0
      %559 = vmatprep.subr.bf16.mxu0 0
      %560 = vmatpush1.bf16.msra.mxu0 0
      %561 = vmatprep.subr.bf16.mxu0 0
      %562 = vmatpush1.bf16.msra.mxu0 0
      %563 = vmatprep.subr.bf16.mxu0 0
      %564 = vmatpush1.bf16.msra.mxu0 0
      %565 = vmatprep.subr.bf16.mxu0 0
      %566 = vmatpush1.bf16.msra.mxu0 0
      %567 = vmatprep.mubr.bf16.mxu0 0
      %568 = vmatmul.mubr.bf16.gmra.mrb[0].mxu0 %v529
      %v569 = vpop.f32.mrb[0].mxu0
      %v570 = vadd.f32 0.0, %v569
      %v571 = vpop.f32.mrb[0].mxu0
      %v572 = vpop.f32.mrb[0].mxu0
      %v573 = vpop.f32.mrb[0].mxu0
      %574 = vdwg.mxu0
      %v575 = vld [vmem:[#allocation2] sm:$0xff]
      %v576 = vpack.c.bf16 %v570, %v570
      %v577 = vld [vmem:[%s5] sm:$0xf]
      %v579 = vsel %vm467, %v576, 0
      %v582 = vsel %vm531, %v577, 0
      %584 = vmatprep.subr.bf16.mxu0 0
      %585 = vmatpush1.bf16.msra.mxu0 %v582
      %586 = vmatprep.subr.bf16.mxu0 0
      %587 = vmatpush1.bf16.msra.mxu0 0
      %588 = vmatprep.subr.bf16.mxu0 0
      %589 = vmatpush1.bf16.msra.mxu0 0
      %590 = vmatprep.subr.bf16.mxu0 0
      %591 = vmatpush1.bf16.msra.mxu0 0
      %592 = vmatprep.subr.bf16.mxu0 0
      %593 = vmatpush1.bf16.msra.mxu0 0
      %594 = vmatprep.subr.bf16.mxu0 0
      %595 = vmatpush1.bf16.msra.mxu0 0
      %596 = vmatprep.subr.bf16.mxu0 0
      %597 = vmatpush1.bf16.msra.mxu0 0
      %598 = vmatprep.subr.bf16.mxu0 0
      %599 = vmatpush1.bf16.msra.mxu0 0
      %600 = vmatprep.subr.bf16.mxu0 0
      %601 = vmatpush1.bf16.msra.mxu0 0
      %602 = vmatprep.subr.bf16.mxu0 0
      %603 = vmatpush1.bf16.msra.mxu0 0
      %604 = vmatprep.subr.bf16.mxu0 0
      %605 = vmatpush1.bf16.msra.mxu0 0
      %606 = vmatprep.subr.bf16.mxu0 0
      %607 = vmatpush1.bf16.msra.mxu0 0
      %608 = vmatprep.subr.bf16.mxu0 0
      %609 = vmatpush1.bf16.msra.mxu0 0
      %610 = vmatprep.subr.bf16.mxu0 0
      %611 = vmatpush1.bf16.msra.mxu0 0
      %612 = vmatprep.subr.bf16.mxu0 0
      %613 = vmatpush1.bf16.msra.mxu0 0
      %614 = vmatprep.subr.bf16.mxu0 0
      %615 = vmatpush1.bf16.msra.mxu0 0
      %616 = vmatprep.mubr.bf16.mxu0 0
      %617 = vmatmul.mubr.bf16.gmra.mrb[0].mxu0 %v579
      %v618 = vpop.f32.mrb[0].mxu0
      %v619 = vadd.f32 0.0, %v618
      %v620 = vpop.f32.mrb[0].mxu0
      %v621 = vpop.f32.mrb[0].mxu0
      %v622 = vpop.f32.mrb[0].mxu0
      %623 = vdwg.mxu0
      %v624 = vadd.f32 %v575, %v619
      %625 = vst.msk [vmem:[#allocation2] sm:$0xff] %vm462, %v624
      %s626 = scalar_lea.vmem %s416, 4
      %v627 = vld [vmem:[%s626] sm:$0xf]
      %s628 = scalar_lea.vmem %s421, 4
      %v629 = vld [vmem:[%s628] sm:$0xf]
      %s630 = scalar_lea.vmem %s426, 4
      %v631 = vld [vmem:[%s630] sm:$0xf]
      %v633 = vsel %vm467, %v627, 0
      %v636 = vsel %vm467, %v629, 0
      %638 = vmatprep.subr.bf16.mxu0 0
      %639 = vmatpush1.bf16.xpose.msra.mxu0 %v636
      %640 = vmatprep.subr.bf16.mxu0 0
      %641 = vmatpush1.bf16.xpose.msra.mxu0 0
      %642 = vmatprep.subr.bf16.mxu0 0
      %643 = vmatpush1.bf16.xpose.msra.mxu0 0
      %644 = vmatprep.subr.bf16.mxu0 0
      %645 = vmatpush1.bf16.xpose.msra.mxu0 0
      %646 = vmatprep.subr.bf16.mxu0 0
      %647 = vmatpush1.bf16.xpose.msra.mxu0 0
      %648 = vmatprep.subr.bf16.mxu0 0
      %649 = vmatpush1.bf16.xpose.msra.mxu0 0
      %650 = vmatprep.subr.bf16.mxu0 0
      %651 = vmatpush1.bf16.xpose.msra.mxu0 0
      %652 = vmatprep.subr.bf16.mxu0 0
      %653 = vmatpush1.bf16.xpose.msra.mxu0 0
      %654 = vmatprep.subr.bf16.mxu0 0
      %655 = vmatpush1.bf16.xpose.msra.mxu0 0
      %656 = vmatprep.subr.bf16.mxu0 0
      %657 = vmatpush1.bf16.xpose.msra.mxu0 0
      %658 = vmatprep.subr.bf16.mxu0 0
      %659 = vmatpush1.bf16.xpose.msra.mxu0 0
      %660 = vmatprep.subr.bf16.mxu0 0
      %661 = vmatpush1.bf16.xpose.msra.mxu0 0
      %662 = vmatprep.subr.bf16.mxu0 0
      %663 = vmatpush1.bf16.xpose.msra.mxu0 0
      %664 = vmatprep.subr.bf16.mxu0 0
      %665 = vmatpush1.bf16.xpose.msra.mxu0 0
      %666 = vmatprep.subr.bf16.mxu0 0
      %667 = vmatpush1.bf16.xpose.msra.mxu0 0
      %668 = vmatprep.subr.bf16.mxu0 0
      %669 = vmatpush1.bf16.xpose.msra.mxu0 0
      %670 = vmatprep.mubr.bf16.mxu0 0
      %671 = vmatmul.mubr.bf16.gmra.mrb[0].mxu0 %v633
      %v672 = vpop.f32.mrb[0].mxu0
      %v673 = vadd.f32 0.0, %v672
      %v674 = vpop.f32.mrb[0].mxu0
      %v675 = vpop.f32.mrb[0].mxu0
      %v676 = vpop.f32.mrb[0].mxu0
      %677 = vdwg.mxu0
      %v678 = vmul.f32 %v673, 0.35355338
      %v679 = vsel %vm461, %v678, -1e+20
      %v680 = vsel %vm467, %v679, -inf
      %681 = vmax.xlane.f32.xlu0 %v680
      %v682 = vpop.xlane.xlu0 %681
      %v683 = vsub.f32 %v679, %v682
      %v684 = vmul.f32 %v683, 1.442695
      %v685 = vpow.pop %v684
      %v686 = vsel %vm467, %v685, 0.0
      %687 = vadd.xlane.f32.xlu0 %v686
      %v688 = vpop.xlane.xlu0 %687
      %v689 = vrcp.pop %v688
      %v690 = vmul.f32 %v685, %v689
      %v691 = vpack.c.bf16 %v690, %v690
      %v693 = vsel %vm467, %v691, 0
      %v696 = vsel %vm531, %v631, 0
      %698 = vmatprep.subr.bf16.mxu0 0
      %699 = vmatpush1.bf16.msra.mxu0 %v696
      %700 = vmatprep.subr.bf16.mxu0 0
      %701 = vmatpush1.bf16.msra.mxu0 0
      %702 = vmatprep.subr.bf16.mxu0 0
      %703 = vmatpush1.bf16.msra.mxu0 0
      %704 = vmatprep.subr.bf16.mxu0 0
      %705 = vmatpush1.bf16.msra.mxu0 0
      %706 = vmatprep.subr.bf16.mxu0 0
      %707 = vmatpush1.bf16.msra.mxu0 0
      %708 = vmatprep.subr.bf16.mxu0 0
      %709 = vmatpush1.bf16.msra.mxu0 0
      %710 = vmatprep.subr.bf16.mxu0 0
      %711 = vmatpush1.bf16.msra.mxu0 0
      %712 = vmatprep.subr.bf16.mxu0 0
      %713 = vmatpush1.bf16.msra.mxu0 0
      %714 = vmatprep.subr.bf16.mxu0 0
      %715 = vmatpush1.bf16.msra.mxu0 0
      %716 = vmatprep.subr.bf16.mxu0 0
      %717 = vmatpush1.bf16.msra.mxu0 0
      %718 = vmatprep.subr.bf16.mxu0 0
      %719 = vmatpush1.bf16.msra.mxu0 0
      %720 = vmatprep.subr.bf16.mxu0 0
      %721 = vmatpush1.bf16.msra.mxu0 0
      %722 = vmatprep.subr.bf16.mxu0 0
      %723 = vmatpush1.bf16.msra.mxu0 0
      %724 = vmatprep.subr.bf16.mxu0 0
      %725 = vmatpush1.bf16.msra.mxu0 0
      %726 = vmatprep.subr.bf16.mxu0 0
      %727 = vmatpush1.bf16.msra.mxu0 0
      %728 = vmatprep.subr.bf16.mxu0 0
      %729 = vmatpush1.bf16.msra.mxu0 0
      %730 = vmatprep.mubr.bf16.mxu0 0
      %731 = vmatmul.mubr.bf16.gmra.mrb[0].mxu0 %v693
      %v732 = vpop.f32.mrb[0].mxu0
      %v733 = vadd.f32 0.0, %v732
      %v734 = vpop.f32.mrb[0].mxu0
      %v735 = vpop.f32.mrb[0].mxu0
      %v736 = vpop.f32.mrb[0].mxu0
      %737 = vdwg.mxu0
      %v738 = vld [vmem:[#allocation2] sm:$0xff]
      %v739 = vpack.c.bf16 %v733, %v733
      %s740 = scalar_lea.vmem %s5, 4
      %v741 = vld [vmem:[%s740] sm:$0xf]
      %v743 = vsel %vm467, %v739, 0
      %v746 = vsel %vm531, %v741, 0
      %748 = vmatprep.subr.bf16.mxu0 0
      %749 = vmatpush1.bf16.msra.mxu0 %v746
      %750 = vmatprep.subr.bf16.mxu0 0
      %751 = vmatpush1.bf16.msra.mxu0 0
      %752 = vmatprep.subr.bf16.mxu0 0
      %753 = vmatpush1.bf16.msra.mxu0 0
      %754 = vmatprep.subr.bf16.mxu0 0
      %755 = vmatpush1.bf16.msra.mxu0 0
      %756 = vmatprep.subr.bf16.mxu0 0
      %757 = vmatpush1.bf16.msra.mxu0 0
      %758 = vmatprep.subr.bf16.mxu0 0
      %759 = vmatpush1.bf16.msra.mxu0 0
      %760 = vmatprep.subr.bf16.mxu0 0
      %761 = vmatpush1.bf16.msra.mxu0 0
      %762 = vmatprep.subr.bf16.mxu0 0
      %763 = vmatpush1.bf16.msra.mxu0 0
      %764 = vmatprep.subr.bf16.mxu0 0
      %765 = vmatpush1.bf16.msra.mxu0 0
      %766 = vmatprep.subr.bf16.mxu0 0
      %767 = vmatpush1.bf16.msra.mxu0 0
      %768 = vmatprep.subr.bf16.mxu0 0
      %769 = vmatpush1.bf16.msra.mxu0 0
      %770 = vmatprep.subr.bf16.mxu0 0
      %771 = vmatpush1.bf16.msra.mxu0 0
      %772 = vmatprep.subr.bf16.mxu0 0
      %773 = vmatpush1.bf16.msra.mxu0 0
      %774 = vmatprep.subr.bf16.mxu0 0
      %775 = vmatpush1.bf16.msra.mxu0 0
      %776 = vmatprep.subr.bf16.mxu0 0
      %777 = vmatpush1.bf16.msra.mxu0 0
      %778 = vmatprep.subr.bf16.mxu0 0
      %779 = vmatpush1.bf16.msra.mxu0 0
      %780 = vmatprep.mubr.bf16.mxu0 0
      %781 = vmatmul.mubr.bf16.gmra.mrb[0].mxu0 %v743
      %v782 = vpop.f32.mrb[0].mxu0
      %v783 = vadd.f32 0.0, %v782
      %v784 = vpop.f32.mrb[0].mxu0
      %v785 = vpop.f32.mrb[0].mxu0
      %v786 = vpop.f32.mrb[0].mxu0
      %787 = vdwg.mxu0
      %v788 = vadd.f32 %v738, %v783
      %789 = vst.msk [vmem:[#allocation2] sm:$0xff] %vm462, %v788
      %s790 = scalar_lea.vmem %s416, 8
      %v791 = vld [vmem:[%s790] sm:$0xf]
      %s792 = scalar_lea.vmem %s421, 8
      %v793 = vld [vmem:[%s792] sm:$0xf]
      %s794 = scalar_lea.vmem %s426, 8
      %v795 = vld [vmem:[%s794] sm:$0xf]
      %v797 = vsel %vm467, %v791, 0
      %v800 = vsel %vm467, %v793, 0
      %802 = vmatprep.subr.bf16.mxu0 0
      %803 = vmatpush1.bf16.xpose.msra.mxu0 %v800
      %804 = vmatprep.subr.bf16.mxu0 0
      %805 = vmatpush1.bf16.xpose.msra.mxu0 0
      %806 = vmatprep.subr.bf16.mxu0 0
      %807 = vmatpush1.bf16.xpose.msra.mxu0 0
      %808 = vmatprep.subr.bf16.mxu0 0
      %809 = vmatpush1.bf16.xpose.msra.mxu0 0
      %810 = vmatprep.subr.bf16.mxu0 0
      %811 = vmatpush1.bf16.xpose.msra.mxu0 0
      %812 = vmatprep.subr.bf16.mxu0 0
      %813 = vmatpush1.bf16.xpose.msra.mxu0 0
      %814 = vmatprep.subr.bf16.mxu0 0
      %815 = vmatpush1.bf16.xpose.msra.mxu0 0
      %816 = vmatprep.subr.bf16.mxu0 0
      %817 = vmatpush1.bf16.xpose.msra.mxu0 0
      %818 = vmatprep.subr.bf16.mxu0 0
      %819 = vmatpush1.bf16.xpose.msra.mxu0 0
      %820 = vmatprep.subr.bf16.mxu0 0
      %821 = vmatpush1.bf16.xpose.msra.mxu0 0
      %822 = vmatprep.subr.bf16.mxu0 0
      %823 = vmatpush1.bf16.xpose.msra.mxu0 0
      %824 = vmatprep.subr.bf16.mxu0 0
      %825 = vmatpush1.bf16.xpose.msra.mxu0 0
      %826 = vmatprep.subr.bf16.mxu0 0
      %827 = vmatpush1.bf16.xpose.msra.mxu0 0
      %828 = vmatprep.subr.bf16.mxu0 0
      %829 = vmatpush1.bf16.xpose.msra.mxu0 0
      %830 = vmatprep.subr.bf16.mxu0 0
      %831 = vmatpush1.bf16.xpose.msra.mxu0 0
      %832 = vmatprep.subr.bf16.mxu0 0
      %833 = vmatpush1.bf16.xpose.msra.mxu0 0
      %834 = vmatprep.mubr.bf16.mxu0 0
      %835 = vmatmul.mubr.bf16.gmra.mrb[0].mxu0 %v797
      %v836 = vpop.f32.mrb[0].mxu0
      %v837 = vadd.f32 0.0, %v836
      %v838 = vpop.f32.mrb[0].mxu0
      %v839 = vpop.f32.mrb[0].mxu0
      %v840 = vpop.f32.mrb[0].mxu0
      %841 = vdwg.mxu0
      %v842 = vmul.f32 %v837, 0.35355338
      %v843 = vsel %vm461, %v842, -1e+20
      %v844 = vsel %vm467, %v843, -inf
      %845 = vmax.xlane.f32.xlu0 %v844
      %v846 = vpop.xlane.xlu0 %845
      %v847 = vsub.f32 %v843, %v846
      %v848 = vmul.f32 %v847, 1.442695
      %v849 = vpow.pop %v848
      %v850 = vsel %vm467, %v849, 0.0
      %851 = vadd.xlane.f32.xlu0 %v850
      %v852 = vpop.xlane.xlu0 %851
      %v853 = vrcp.pop %v852
      %v854 = vmul.f32 %v849, %v853
      %v855 = vpack.c.bf16 %v854, %v854
      %v857 = vsel %vm467, %v855, 0
      %v860 = vsel %vm531, %v795, 0
      %862 = vmatprep.subr.bf16.mxu0 0
      %863 = vmatpush1.bf16.msra.mxu0 %v860
      %864 = vmatprep.subr.bf16.mxu0 0
      %865 = vmatpush1.bf16.msra.mxu0 0
      %866 = vmatprep.subr.bf16.mxu0 0
      %867 = vmatpush1.bf16.msra.mxu0 0
      %868 = vmatprep.subr.bf16.mxu0 0
      %869 = vmatpush1.bf16.msra.mxu0 0
      %870 = vmatprep.subr.bf16.mxu0 0
      %871 = vmatpush1.bf16.msra.mxu0 0
      %872 = vmatprep.subr.bf16.mxu0 0
      %873 = vmatpush1.bf16.msra.mxu0 0
      %874 = vmatprep.subr.bf16.mxu0 0
      %875 = vmatpush1.bf16.msra.mxu0 0
      %876 = vmatprep.subr.bf16.mxu0 0
      %877 = vmatpush1.bf16.msra.mxu0 0
      %878 = vmatprep.subr.bf16.mxu0 0
      %879 = vmatpush1.bf16.msra.mxu0 0
      %880 = vmatprep.subr.bf16.mxu0 0
      %881 = vmatpush1.bf16.msra.mxu0 0
      %882 = vmatprep.subr.bf16.mxu0 0
      %883 = vmatpush1.bf16.msra.mxu0 0
      %884 = vmatprep.subr.bf16.mxu0 0
      %885 = vmatpush1.bf16.msra.mxu0 0
      %886 = vmatprep.subr.bf16.mxu0 0
      %887 = vmatpush1.bf16.msra.mxu0 0
      %888 = vmatprep.subr.bf16.mxu0 0
      %889 = vmatpush1.bf16.msra.mxu0 0
      %890 = vmatprep.subr.bf16.mxu0 0
      %891 = vmatpush1.bf16.msra.mxu0 0
      %892 = vmatprep.subr.bf16.mxu0 0
      %893 = vmatpush1.bf16.msra.mxu0 0
      %894 = vmatprep.mubr.bf16.mxu0 0
      %895 = vmatmul.mubr.bf16.gmra.mrb[0].mxu0 %v857
      %v896 = vpop.f32.mrb[0].mxu0
      %v897 = vadd.f32 0.0, %v896
      %v898 = vpop.f32.mrb[0].mxu0
      %v899 = vpop.f32.mrb[0].mxu0
      %v900 = vpop.f32.mrb[0].mxu0
      %901 = vdwg.mxu0
      %v902 = vld [vmem:[#allocation2] sm:$0xff]
      %v903 = vpack.c.bf16 %v897, %v897
      %s904 = scalar_lea.vmem %s5, 8
      %v905 = vld [vmem:[%s904] sm:$0xf]
      %v907 = vsel %vm467, %v903, 0
      %v910 = vsel %vm531, %v905, 0
      %912 = vmatprep.subr.bf16.mxu0 0
      %913 = vmatpush1.bf16.msra.mxu0 %v910
      %914 = vmatprep.subr.bf16.mxu0 0
      %915 = vmatpush1.bf16.msra.mxu0 0
      %916 = vmatprep.subr.bf16.mxu0 0
      %917 = vmatpush1.bf16.msra.mxu0 0
      %918 = vmatprep.subr.bf16.mxu0 0
      %919 = vmatpush1.bf16.msra.mxu0 0
      %920 = vmatprep.subr.bf16.mxu0 0
      %921 = vmatpush1.bf16.msra.mxu0 0
      %922 = vmatprep.subr.bf16.mxu0 0
      %923 = vmatpush1.bf16.msra.mxu0 0
      %924 = vmatprep.subr.bf16.mxu0 0
      %925 = vmatpush1.bf16.msra.mxu0 0
      %926 = vmatprep.subr.bf16.mxu0 0
      %927 = vmatpush1.bf16.msra.mxu0 0
      %928 = vmatprep.subr.bf16.mxu0 0
      %929 = vmatpush1.bf16.msra.mxu0 0
      %930 = vmatprep.subr.bf16.mxu0 0
      %931 = vmatpush1.bf16.msra.mxu0 0
      %932 = vmatprep.subr.bf16.mxu0 0
      %933 = vmatpush1.bf16.msra.mxu0 0
      %934 = vmatprep.subr.bf16.mxu0 0
      %935 = vmatpush1.bf16.msra.mxu0 0
      %936 = vmatprep.subr.bf16.mxu0 0
      %937 = vmatpush1.bf16.msra.mxu0 0
      %938 = vmatprep.subr.bf16.mxu0 0
      %939 = vmatpush1.bf16.msra.mxu0 0
      %940 = vmatprep.subr.bf16.mxu0 0
      %941 = vmatpush1.bf16.msra.mxu0 0
      %942 = vmatprep.subr.bf16.mxu0 0
      %943 = vmatpush1.bf16.msra.mxu0 0
      %944 = vmatprep.mubr.bf16.mxu0 0
      %945 = vmatmul.mubr.bf16.gmra.mrb[0].mxu0 %v907
      %v946 = vpop.f32.mrb[0].mxu0
      %v947 = vadd.f32 0.0, %v946
      %v948 = vpop.f32.mrb[0].mxu0
      %v949 = vpop.f32.mrb[0].mxu0
      %v950 = vpop.f32.mrb[0].mxu0
      %951 = vdwg.mxu0
      %v952 = vadd.f32 %v902, %v947
      %953 = vst.msk [vmem:[#allocation2] sm:$0xff] %vm462, %v952
      %s954 = scalar_lea.vmem %s416, 12
      %v955 = vld [vmem:[%s954] sm:$0xf]
      %s956 = scalar_lea.vmem %s421, 12
      %v957 = vld [vmem:[%s956] sm:$0xf]
      %s958 = scalar_lea.vmem %s426, 12
      %v959 = vld [vmem:[%s958] sm:$0xf]
      %v961 = vsel %vm467, %v955, 0
      %v964 = vsel %vm467, %v957, 0
      %966 = vmatprep.subr.bf16.mxu0 0
      %967 = vmatpush1.bf16.xpose.msra.mxu0 %v964
      %968 = vmatprep.subr.bf16.mxu0 0
      %969 = vmatpush1.bf16.xpose.msra.mxu0 0
      %970 = vmatprep.subr.bf16.mxu0 0
      %971 = vmatpush1.bf16.xpose.msra.mxu0 0
      %972 = vmatprep.subr.bf16.mxu0 0
      %973 = vmatpush1.bf16.xpose.msra.mxu0 0
      %974 = vmatprep.subr.bf16.mxu0 0
      %975 = vmatpush1.bf16.xpose.msra.mxu0 0
      %976 = vmatprep.subr.bf16.mxu0 0
      %977 = vmatpush1.bf16.xpose.msra.mxu0 0
      %978 = vmatprep.subr.bf16.mxu0 0
      %979 = vmatpush1.bf16.xpose.msra.mxu0 0
      %980 = vmatprep.subr.bf16.mxu0 0
      %981 = vmatpush1.bf16.xpose.msra.mxu0 0
      %982 = vmatprep.subr.bf16.mxu0 0
      %983 = vmatpush1.bf16.xpose.msra.mxu0 0
      %984 = vmatprep.subr.bf16.mxu0 0
      %985 = vmatpush1.bf16.xpose.msra.mxu0 0
      %986 = vmatprep.subr.bf16.mxu0 0
      %987 = vmatpush1.bf16.xpose.msra.mxu0 0
      %988 = vmatprep.subr.bf16.mxu0 0
      %989 = vmatpush1.bf16.xpose.msra.mxu0 0
      %990 = vmatprep.subr.bf16.mxu0 0
      %991 = vmatpush1.bf16.xpose.msra.mxu0 0
      %992 = vmatprep.subr.bf16.mxu0 0
      %993 = vmatpush1.bf16.xpose.msra.mxu0 0
      %994 = vmatprep.subr.bf16.mxu0 0
      %995 = vmatpush1.bf16.xpose.msra.mxu0 0
      %996 = vmatprep.subr.bf16.mxu0 0
      %997 = vmatpush1.bf16.xpose.msra.mxu0 0
      %998 = vmatprep.mubr.bf16.mxu0 0
      %999 = vmatmul.mubr.bf16.gmra.mrb[0].mxu0 %v961
      %v1000 = vpop.f32.mrb[0].mxu0
      %v1001 = vadd.f32 0.0, %v1000
      %v1002 = vpop.f32.mrb[0].mxu0
      %v1003 = vpop.f32.mrb[0].mxu0
      %v1004 = vpop.f32.mrb[0].mxu0
      %1005 = vdwg.mxu0
      %v1006 = vmul.f32 %v1001, 0.35355338
      %v1007 = vsel %vm461, %v1006, -1e+20
      %v1008 = vsel %vm467, %v1007, -inf
      %1009 = vmax.xlane.f32.xlu0 %v1008
      %v1010 = vpop.xlane.xlu0 %1009
      %v1011 = vsub.f32 %v1007, %v1010
      %v1012 = vmul.f32 %v1011, 1.442695
      %v1013 = vpow.pop %v1012
      %v1014 = vsel %vm467, %v1013, 0.0
      %1015 = vadd.xlane.f32.xlu0 %v1014
      %v1016 = vpop.xlane.xlu0 %1015
      %v1017 = vrcp.pop %v1016
      %v1018 = vmul.f32 %v1013, %v1017
      %v1019 = vpack.c.bf16 %v1018, %v1018
      %v1021 = vsel %vm467, %v1019, 0
      %v1024 = vsel %vm531, %v959, 0
      %1026 = vmatprep.subr.bf16.mxu0 0
      %1027 = vmatpush1.bf16.msra.mxu0 %v1024
      %1028 = vmatprep.subr.bf16.mxu0 0
      %1029 = vmatpush1.bf16.msra.mxu0 0
      %1030 = vmatprep.subr.bf16.mxu0 0
      %1031 = vmatpush1.bf16.msra.mxu0 0
      %1032 = vmatprep.subr.bf16.mxu0 0
      %1033 = vmatpush1.bf16.msra.mxu0 0
      %1034 = vmatprep.subr.bf16.mxu0 0
      %1035 = vmatpush1.bf16.msra.mxu0 0
      %1036 = vmatprep.subr.bf16.mxu0 0
      %1037 = vmatpush1.bf16.msra.mxu0 0
      %1038 = vmatprep.subr.bf16.mxu0 0
      %1039 = vmatpush1.bf16.msra.mxu0 0
      %1040 = vmatprep.subr.bf16.mxu0 0
      %1041 = vmatpush1.bf16.msra.mxu0 0
      %1042 = vmatprep.subr.bf16.mxu0 0
      %1043 = vmatpush1.bf16.msra.mxu0 0
      %1044 = vmatprep.subr.bf16.mxu0 0
      %1045 = vmatpush1.bf16.msra.mxu0 0
      %1046 = vmatprep.subr.bf16.mxu0 0
      %1047 = vmatpush1.bf16.msra.mxu0 0
      %1048 = vmatprep.subr.bf16.mxu0 0
      %1049 = vmatpush1.bf16.msra.mxu0 0
      %1050 = vmatprep.subr.bf16.mxu0 0
      %1051 = vmatpush1.bf16.msra.mxu0 0
      %1052 = vmatprep.subr.bf16.mxu0 0
      %1053 = vmatpush1.bf16.msra.mxu0 0
      %1054 = vmatprep.subr.bf16.mxu0 0
      %1055 = vmatpush1.bf16.msra.mxu0 0
      %1056 = vmatprep.subr.bf16.mxu0 0
      %1057 = vmatpush1.bf16.msra.mxu0 0
      %1058 = vmatprep.mubr.bf16.mxu0 0
      %1059 = vmatmul.mubr.bf16.gmra.mrb[0].mxu0 %v1021
      %v1060 = vpop.f32.mrb[0].mxu0
      %v1061 = vadd.f32 0.0, %v1060
      %v1062 = vpop.f32.mrb[0].mxu0
      %v1063 = vpop.f32.mrb[0].mxu0
      %v1064 = vpop.f32.mrb[0].mxu0
      %1065 = vdwg.mxu0
      %v1066 = vld [vmem:[#allocation2] sm:$0xff]
      %v1067 = vpack.c.bf16 %v1061, %v1061
      %s1068 = scalar_lea.vmem %s5, 12
      %v1069 = vld [vmem:[%s1068] sm:$0xf]
      %v1071 = vsel %vm467, %v1067, 0
      %v1074 = vsel %vm531, %v1069, 0
      %1076 = vmatprep.subr.bf16.mxu0 0
      %1077 = vmatpush1.bf16.msra.mxu0 %v1074
      %1078 = vmatprep.subr.bf16.mxu0 0
      %1079 = vmatpush1.bf16.msra.mxu0 0
      %1080 = vmatprep.subr.bf16.mxu0 0
      %1081 = vmatpush1.bf16.msra.mxu0 0
      %1082 = vmatprep.subr.bf16.mxu0 0
      %1083 = vmatpush1.bf16.msra.mxu0 0
      %1084 = vmatprep.subr.bf16.mxu0 0
      %1085 = vmatpush1.bf16.msra.mxu0 0
      %1086 = vmatprep.subr.bf16.mxu0 0
      %1087 = vmatpush1.bf16.msra.mxu0 0
      %1088 = vmatprep.subr.bf16.mxu0 0
      %1089 = vmatpush1.bf16.msra.mxu0 0
      %1090 = vmatprep.subr.bf16.mxu0 0
      %1091 = vmatpush1.bf16.msra.mxu0 0
      %1092 = vmatprep.subr.bf16.mxu0 0
      %1093 = vmatpush1.bf16.msra.mxu0 0
      %1094 = vmatprep.subr.bf16.mxu0 0
      %1095 = vmatpush1.bf16.msra.mxu0 0
      %1096 = vmatprep.subr.bf16.mxu0 0
      %1097 = vmatpush1.bf16.msra.mxu0 0
      %1098 = vmatprep.subr.bf16.mxu0 0
      %1099 = vmatpush1.bf16.msra.mxu0 0
      %1100 = vmatprep.subr.bf16.mxu0 0
      %1101 = vmatpush1.bf16.msra.mxu0 0
      %1102 = vmatprep.subr.bf16.mxu0 0
      %1103 = vmatpush1.bf16.msra.mxu0 0
      %1104 = vmatprep.subr.bf16.mxu0 0
      %1105 = vmatpush1.bf16.msra.mxu0 0
      %1106 = vmatprep.subr.bf16.mxu0 0
      %1107 = vmatpush1.bf16.msra.mxu0 0
      %1108 = vmatprep.mubr.bf16.mxu0 0
      %1109 = vmatmul.mubr.bf16.gmra.mrb[0].mxu0 %v1071
      %v1110 = vpop.f32.mrb[0].mxu0
      %v1111 = vadd.f32 0.0, %v1110
      %v1112 = vpop.f32.mrb[0].mxu0
      %v1113 = vpop.f32.mrb[0].mxu0
      %v1114 = vpop.f32.mrb[0].mxu0
      %1115 = vdwg.mxu0
      %v1116 = vadd.f32 %v1066, %v1111
      %1117 = vst.msk [vmem:[#allocation2] sm:$0xff] %vm462, %v1116
      %v1118 = vld [vmem:[%s433] sm:$0xff]
      %v1119 = vld [vmem:[#allocation2] sm:$0xff]
      %v1120 = vadd.f32 %v1118, %v1119
      %v1121 = vld [vmem:[%s6] sm:$0x1]
      %v1123 = vlaneseq
      %v1124 = vshrl.u32 %v1123, 7
      %v1125 = vsub.s32 0, %v1124
      %v1126 = vrot.slane %v1121, %v1125
      %v1128 = vadd.f32 %v1120, %v1126
      %v1129 = vsel %vm462, %v1128, 0.0
      %1130 = vadd.xlane.f32.xlu0 %v1129
      %v1131 = vpop.xlane.xlu0 %1130
      %v1132 = vrcp.pop 32.0
      %v1133 = vmul.f32 %v1131, %v1132
      %v1134 = vsub.f32 %v1128, %v1133
      %v1135 = vmul.f32 %v1134, %v1134
      %v1136 = vsel %vm462, %v1135, 0.0
      %1137 = vadd.xlane.f32.xlu0 %v1136
      %v1138 = vpop.xlane.xlu0 %1137
      %v1139 = vmul.f32 %v1138, 0.032258064
      %v1140 = vrsqrt.pop %v1139
      %v1141 = vmul.f32 %v1139, %v1140
      %vm1142 = vcmp.eq.f32.partialorder %v1139, inf
      %v1143 = vsel %vm1142, %v1139, %v1141
      %vm1144 = vcmp.eq.f32.partialorder %v1139, 0.0
      %v1145 = vand.u32 %v1139, 2147483648
      %v1146 = vsel %vm1144, %v1145, %v1143
      %v1147 = vadd.f32 %v1146, 1e-06
      %v1148 = vrcp.pop %v1147
      %v1149 = vld [vmem:[%s7] sm:$0x1]
      %v1151 = vlaneseq
      %v1152 = vshrl.u32 %v1151, 7
      %v1153 = vsub.s32 0, %v1152
      %v1154 = vrot.slane %v1149, %v1153
      %v1156 = vmul.f32 %v1154, %v1134
      %v1157 = vmul.f32 %v1156, %v1148
      %v1158 = vld [vmem:[%s8] sm:$0x1]
      %v1160 = vlaneseq
      %v1161 = vshrl.u32 %v1160, 7
      %v1162 = vsub.s32 0, %v1161
      %v1163 = vrot.slane %v1158, %v1162
      %v1165 = vadd.f32 %v1157, %v1163
      %1166 = vst.msk [vmem:[%s443] sm:$0xff] %vm462, %v1165
      %p1167 = scmp.lt.s32.totalorder %s24, 1
      %s1168 = scalar_select %p1167, %s24, 1
      %p1169 = scmp.lt.s32.totalorder %s25, 0
      %s1170 = scalar_select %p1169, %s25, 0
      %s1171 = sadd.s32 %s1170, %s1168
      %s1172 = smul.addr %s1171, 8
      %s1173 = scalar_lea.vmem %s9, %s1172
      // Predicated region
      $region57: #{transformer_forward.26} parent=55 // pred_check
        %p1174 = pneg %p270
      $region58: #{transformer_forward.26} parent=55 // pred_check_branch
        %1176 = sbr.rel (%p1174) target = $region60
      $region59: #{transformer_forward.26} parent=55 // pred_region
        _
      $region60: #{transformer_forward.26} parent=55 // pred_fallthru
        _
    $region56: #{transformer_forward.26} parent=5 // pred_fallthru
      _
    %p1177 = scmp.le.s32.totalorder 2, %s15
    // Predicated region
    $region61: #{transformer_forward.26} parent=5 // pred_check
      %p1178 = pneg %p1177
    $region62: #{transformer_forward.26} parent=5 // pred_check_branch
      %1180 = sbr.rel (%p1178) target = $region64
    $region63: #{transformer_forward.26} parent=5 // pred_region
      %s1181 = ssub.s32 %s15, 2
      // Predicated region
      $region65: #{transformer_forward.26} parent=63 // pred_check
        %p1182 = pneg %p276
      $region66: #{transformer_forward.26} parent=63 // pred_check_branch
        %1184 = sbr.rel (%p1182) target = $region68
      $region67: #{transformer_forward.26} parent=63 // pred_region
        %p1185 = scmp.lt.s32.totalorder %s26, 1
        %s1186 = scalar_select %p1185, %s26, 1
        %p1187 = scmp.lt.s32.totalorder %s27, 0
        %s1188 = scalar_select %p1187, %s27, 0
        %s1189 = sadd.s32 %s1188, %s1186
        %s1190 = smul.addr %s1189, 8
        %s1191 = scalar_lea.vmem %s9, %s1190
      $region68: #{transformer_forward.26} parent=63 // pred_fallthru
        _
    $region64: #{transformer_forward.26} parent=5 // pred_fallthru
      _
  $region6: #{transformer_forward.26} parent=0 // loop_footer
    %s19 = sadd.s32 1, %s15
  $region7: #{transformer_forward.26} parent=0 // loop_footer_branch
    %14 = sbr.rel target = $region3
  $region8: #{transformer_forward.26} parent=0 // loop_exit
    _

// kernel: transformer_forward.28
$region0: #{transformer_forward.28}
  #allocation0 [shape = 'u32[]', space=smem, size = 0x4, offset = 0x4, fixed_abs, tag = 'smem constant byte address 0x4 - core index']
  #allocation1 [shape = 'u32[144,128]{1,0:T(1,128)}', space=vmem, size = 0x12000, scoped, tag = 'internal scratch']
  #allocation2 [shape = 'f32[16,64]{1,0:T(8,128)}', space=vmem, size = 0x2000, scoped, tag = 'scratch operand']
  %s0 = inlined_call_operand.vmem [shape: f32[16,32], index: 0, kind: input, shape index: {}]
  %s1 = inlined_call_operand.vmem [shape: bf16[32,64], index: 1, kind: input, shape index: {}]
  %s2 = inlined_call_operand.vmem [shape: bf16[16,64], index: 2, kind: output, shape index: {}]
  %s3 = sld [smem:[#allocation0]]
  $region26: #{transformer_forward.28} parent=0
    _
  %s5 = ssub.s32 1, %s3
  %s6 = scalar_select 0, %s5, %s3
  // Predicated region
  $region2: #{transformer_forward.28} parent=0 // pred_check
    _
  $region3: #{transformer_forward.28} parent=0 // pred_check_branch
    %8 = sbr.rel (0) target = $region5
  $region4: #{transformer_forward.28} parent=0 // pred_region
    _
  $region5: #{transformer_forward.28} parent=0 // pred_fallthru
    _
  // Predicated region
  $region6: #{transformer_forward.28} parent=0 // pred_check
    _
  $region7: #{transformer_forward.28} parent=0 // pred_check_branch
    %10 = sbr.rel (0) target = $region9
  $region8: #{transformer_forward.28} parent=0 // pred_region
    _
  $region9: #{transformer_forward.28} parent=0 // pred_fallthru
    _
  %p12 = scmp.eq.s32.totalorder 0, 0
  // Predicated region
  $region10: #{transformer_forward.28} parent=0 // pred_check
    %p13 = pneg %p12
  $region11: #{transformer_forward.28} parent=0 // pred_check_branch
    %15 = sbr.rel (%p13) target = $region13
  $region12: #{transformer_forward.28} parent=0 // pred_region
    %vm16 = vcmask 523264
    %17 = vst.msk [vmem:[#allocation2] sm:$0xff] %vm16, 0.0
    %18 = vst.msk [vmem:[#allocation2 + $0x8] sm:$0xff] %vm16, 0.0
  $region13: #{transformer_forward.28} parent=0 // pred_fallthru
    _
  %v19 = vld [vmem:[#allocation2] sm:$0xff]
  %v20 = vld [vmem:[#allocation2 + $0x8] sm:$0xff]
  %v21 = vld [vmem:[%s0] sm:$0xff]
  %v22 = vld [vmem:[%s0 + $0x8] sm:$0xff]
  %v23 = vpack.c.bf16 %v22, %v21
  %v24 = vld [vmem:[%s1] sm:$0xf]
  %v25 = vld [vmem:[%s1 + $0x4] sm:$0xf]
  %v26 = vld [vmem:[%s1 + $0x8] sm:$0xf]
  %v27 = vld [vmem:[%s1 + $0xc] sm:$0xf]
  %v32 = vunpack.c.l.b16 %v24
  %v33 = vunpack.c.l.b16 %v25
  %v34 = vunpack.c.l.b16 %v26
  %v35 = vunpack.c.l.b16 %v27
  %v36 = vpack.c.b16 %v33, %v32
  %v37 = vpack.c.b16 %v35, %v34
  %vm40 = vcmask 261120
  %v42 = vsel %vm40, %v23, 0
  %44 = vmatprep.subr.bf16.mxu0 0
  %45 = vmatpush1.bf16.msra.mxu0 %v36
  %46 = vmatprep.subr.bf16.mxu0 0
  %47 = vmatpush1.bf16.msra.mxu0 %v37
  %48 = vmatprep.subr.bf16.mxu0 0
  %49 = vmatpush1.bf16.msra.mxu0 0
  %50 = vmatprep.subr.bf16.mxu0 0
  %51 = vmatpush1.bf16.msra.mxu0 0
  %52 = vmatprep.subr.bf16.mxu0 0
  %53 = vmatpush1.bf16.msra.mxu0 0
  %54 = vmatprep.subr.bf16.mxu0 0
  %55 = vmatpush1.bf16.msra.mxu0 0
  %56 = vmatprep.subr.bf16.mxu0 0
  %57 = vmatpush1.bf16.msra.mxu0 0
  %58 = vmatprep.subr.bf16.mxu0 0
  %59 = vmatpush1.bf16.msra.mxu0 0
  %60 = vmatprep.subr.bf16.mxu0 0
  %61 = vmatpush1.bf16.msra.mxu0 0
  %62 = vmatprep.subr.bf16.mxu0 0
  %63 = vmatpush1.bf16.msra.mxu0 0
  %64 = vmatprep.subr.bf16.mxu0 0
  %65 = vmatpush1.bf16.msra.mxu0 0
  %66 = vmatprep.subr.bf16.mxu0 0
  %67 = vmatpush1.bf16.msra.mxu0 0
  %68 = vmatprep.subr.bf16.mxu0 0
  %69 = vmatpush1.bf16.msra.mxu0 0
  %70 = vmatprep.subr.bf16.mxu0 0
  %71 = vmatpush1.bf16.msra.mxu0 0
  %72 = vmatprep.subr.bf16.mxu0 0
  %73 = vmatpush1.bf16.msra.mxu0 0
  %74 = vmatprep.subr.bf16.mxu0 0
  %75 = vmatpush1.bf16.msra.mxu0 0
  %76 = vmatprep.mubr.bf16.mxu0 0
  %77 = vmatmul.mubr.bf16.gmra.mrb[0].mxu0 %v42
  %v78 = vpop.f32.mrb[0].mxu0
  %v79 = vadd.f32 0.0, %v78
  %v80 = vpop.f32.mrb[0].mxu0
  %v81 = vpop.f32.mrb[0].mxu0
  %v82 = vadd.f32 0.0, %v81
  %v83 = vpop.f32.mrb[0].mxu0
  %84 = vdwg.mxu0
  %v85 = vadd.f32 %v19, %v79
  %v86 = vadd.f32 %v20, %v82
  %vm87 = vcmask 523264
  %88 = vst.msk [vmem:[#allocation2] sm:$0xff] %vm87, %v85
  %89 = vst.msk [vmem:[#allocation2 + $0x8] sm:$0xff] %vm87, %v86
  // Predicated region
  $region14: #{transformer_forward.28} parent=0 // pred_check
    %p90 = pneg %p12
  $region15: #{transformer_forward.28} parent=0 // pred_check_branch
    %92 = sbr.rel (%p90) target = $region17
  $region16: #{transformer_forward.28} parent=0 // pred_region
    %v93 = vld [vmem:[#allocation2] sm:$0xff]
    %v94 = vld [vmem:[#allocation2 + $0x8] sm:$0xff]
    %v95 = vpack.c.bf16 %v94, %v93
    %v97 = vunpack.c.l.b16 %v95
    %v98 = vunpack.c.h.b16 %v95
    %v99 = vpack.c.b16 %v97, %v97
    %v100 = vpack.c.b16 %v98, %v98
    %vm103 = vcmask 519168
    %104 = vst.msk [vmem:[%s2] sm:$0xf] %vm103, %v99
    %105 = vst.msk [vmem:[%s2 + $0x4] sm:$0xf] %vm103, %v100
  $region17: #{transformer_forward.28} parent=0 // pred_fallthru
    _
  // Predicated region
  $region18: #{transformer_forward.28} parent=0 // pred_check
    _
  $region19: #{transformer_forward.28} parent=0 // pred_check_branch
    %107 = sbr.rel (0) target = $region21
  $region20: #{transformer_forward.28} parent=0 // pred_region
    _
  $region21: #{transformer_forward.28} parent=0 // pred_fallthru
    _
  // Predicated region
  $region22: #{transformer_forward.28} parent=0 // pred_check
    _
  $region23: #{transformer_forward.28} parent=0 // pred_check_branch
    %109 = sbr.rel (0) target = $region25
  $region24: #{transformer_forward.28} parent=0 // pred_region
    _
  $region25: #{transformer_forward.28} parent=0 // pred_fallthru
    _

// kernel: transformer_forward.21
$region0: #{transformer_forward.21}
  #allocation0 [shape = 'u32[]', space=smem, size = 0x4, offset = 0x4, fixed_abs, tag = 'smem constant byte address 0x4 - core index']
  #allocation1 [shape = 'u32[144,128]{1,0:T(1,128)}', space=vmem, size = 0x12000, scoped, tag = 'internal scratch']
  #allocation2 [shape = 'f32[16,32]{1,0:T(8,128)}', space=vmem, size = 0x2000, scoped, tag = 'scratch operand']
  %s0 = inlined_call_operand.vmem [shape: f32[16,32], index: 0, kind: input, shape index: {}]
  %s1 = inlined_call_operand.vmem [shape: bf16[32,64], index: 1, kind: input, shape index: {}]
  %s2 = inlined_call_operand.vmem [shape: f32[1,64], index: 2, kind: input, shape index: {}]
  %s3 = inlined_call_operand.vmem [shape: bf16[64,32], index: 3, kind: input, shape index: {}]
  %s4 = inlined_call_operand.vmem [shape: f32[1,32], index: 4, kind: input, shape index: {}]
  %s5 = inlined_call_operand.vmem [shape: f32[1,32], index: 5, kind: input, shape index: {}]
  %s6 = inlined_call_operand.vmem [shape: f32[1,32], index: 6, kind: input, shape index: {}]
  %s7 = inlined_call_operand.vmem [shape: f32[16,32], index: 7, kind: output, shape index: {}]
  %s8 = sld [smem:[#allocation0]]
  $region46: #{transformer_forward.21} parent=0
    _
  %s10 = ssub.s32 1, %s8
  %s11 = scalar_select 0, %s10, %s8
  // Predicated region
  $region2: #{transformer_forward.21} parent=0 // pred_check
    _
  $region3: #{transformer_forward.21} parent=0 // pred_check_branch
    %13 = sbr.rel (0) target = $region5
  $region4: #{transformer_forward.21} parent=0 // pred_region
    _
  $region5: #{transformer_forward.21} parent=0 // pred_fallthru
    _
  // Predicated region
  $region6: #{transformer_forward.21} parent=0 // pred_check
    _
  $region7: #{transformer_forward.21} parent=0 // pred_check_branch
    %15 = sbr.rel (0) target = $region9
  $region8: #{transformer_forward.21} parent=0 // pred_region
    _
  $region9: #{transformer_forward.21} parent=0 // pred_fallthru
    _
  // Predicated region
  $region10: #{transformer_forward.21} parent=0 // pred_check
    _
  $region11: #{transformer_forward.21} parent=0 // pred_check_branch
    %17 = sbr.rel (0) target = $region13
  $region12: #{transformer_forward.21} parent=0 // pred_region
    _
  $region13: #{transformer_forward.21} parent=0 // pred_fallthru
    _
  // Predicated region
  $region14: #{transformer_forward.21} parent=0 // pred_check
    _
  $region15: #{transformer_forward.21} parent=0 // pred_check_branch
    %19 = sbr.rel (0) target = $region17
  $region16: #{transformer_forward.21} parent=0 // pred_region
    _
  $region17: #{transformer_forward.21} parent=0 // pred_fallthru
    _
  // Predicated region
  $region18: #{transformer_forward.21} parent=0 // pred_check
    _
  $region19: #{transformer_forward.21} parent=0 // pred_check_branch
    %21 = sbr.rel (0) target = $region21
  $region20: #{transformer_forward.21} parent=0 // pred_region
    _
  $region21: #{transformer_forward.21} parent=0 // pred_fallthru
    _
  // Predicated region
  $region22: #{transformer_forward.21} parent=0 // pred_check
    _
  $region23: #{transformer_forward.21} parent=0 // pred_check_branch
    %23 = sbr.rel (0) target = $region25
  $region24: #{transformer_forward.21} parent=0 // pred_region
    _
  $region25: #{transformer_forward.21} parent=0 // pred_fallthru
    _
  // Predicated region
  $region26: #{transformer_forward.21} parent=0 // pred_check
    _
  $region27: #{transformer_forward.21} parent=0 // pred_check_branch
    %25 = sbr.rel (0) target = $region29
  $region28: #{transformer_forward.21} parent=0 // pred_region
    _
  $region29: #{transformer_forward.21} parent=0 // pred_fallthru
    _
  %p27 = scmp.eq.s32.totalorder 0, 0
  // Predicated region
  $region30: #{transformer_forward.21} parent=0 // pred_check
    %p28 = pneg %p27
  $region31: #{transformer_forward.21} parent=0 // pred_check_branch
    %30 = sbr.rel (%p28) target = $region33
  $region32: #{transformer_forward.21} parent=0 // pred_region
    %vm31 = vcmask 261120
    %32 = vst.msk [vmem:[#allocation2] sm:$0xff] %vm31, 0.0
    %33 = vst.msk [vmem:[#allocation2 + $0x8] sm:$0xff] %vm31, 0.0
  $region33: #{transformer_forward.21} parent=0 // pred_fallthru
    _
  %v34 = vld [vmem:[%s0] sm:$0xff]
  %v35 = vld [vmem:[%s0 + $0x8] sm:$0xff]
  %v36 = vpack.c.bf16 %v35, %v34
  %v37 = vld [vmem:[%s1] sm:$0xf]
  %v38 = vld [vmem:[%s1 + $0x4] sm:$0xf]
  %v39 = vld [vmem:[%s1 + $0x8] sm:$0xf]
  %v40 = vld [vmem:[%s1 + $0xc] sm:$0xf]
  %v41 = vld [vmem:[%s2] sm:$0x1]
  %v43 = vlaneseq
  %v44 = vshrl.u32 %v43, 7
  %v45 = vsub.s32 0, %v44
  %v46 = vrot.slane %v41, %v45
  %v52 = vunpack.c.l.b16 %v37
  %v53 = vunpack.c.l.b16 %v38
  %v54 = vunpack.c.l.b16 %v39
  %v55 = vunpack.c.l.b16 %v40
  %v56 = vpack.c.b16 %v53, %v52
  %v57 = vpack.c.b16 %v55, %v54
  %vm60 = vcmask 261120
  %v62 = vsel %vm60, %v36, 0
  %64 = vmatprep.subr.bf16.mxu0 0
  %65 = vmatpush1.bf16.msra.mxu0 %v56
  %66 = vmatprep.subr.bf16.mxu0 0
  %67 = vmatpush1.bf16.msra.mxu0 %v57
  %68 = vmatprep.subr.bf16.mxu0 0
  %69 = vmatpush1.bf16.msra.mxu0 0
  %70 = vmatprep.subr.bf16.mxu0 0
  %71 = vmatpush1.bf16.msra.mxu0 0
  %72 = vmatprep.subr.bf16.mxu0 0
  %73 = vmatpush1.bf16.msra.mxu0 0
  %74 = vmatprep.subr.bf16.mxu0 0
  %75 = vmatpush1.bf16.msra.mxu0 0
  %76 = vmatprep.subr.bf16.mxu0 0
  %77 = vmatpush1.bf16.msra.mxu0 0
  %78 = vmatprep.subr.bf16.mxu0 0
  %79 = vmatpush1.bf16.msra.mxu0 0
  %80 = vmatprep.subr.bf16.mxu0 0
  %81 = vmatpush1.bf16.msra.mxu0 0
  %82 = vmatprep.subr.bf16.mxu0 0
  %83 = vmatpush1.bf16.msra.mxu0 0
  %84 = vmatprep.subr.bf16.mxu0 0
  %85 = vmatpush1.bf16.msra.mxu0 0
  %86 = vmatprep.subr.bf16.mxu0 0
  %87 = vmatpush1.bf16.msra.mxu0 0
  %88 = vmatprep.subr.bf16.mxu0 0
  %89 = vmatpush1.bf16.msra.mxu0 0
  %90 = vmatprep.subr.bf16.mxu0 0
  %91 = vmatpush1.bf16.msra.mxu0 0
  %92 = vmatprep.subr.bf16.mxu0 0
  %93 = vmatpush1.bf16.msra.mxu0 0
  %94 = vmatprep.subr.bf16.mxu0 0
  %95 = vmatpush1.bf16.msra.mxu0 0
  %96 = vmatprep.mubr.bf16.mxu0 0
  %97 = vmatmul.mubr.bf16.gmra.mrb[0].mxu0 %v62
  %v98 = vpop.f32.mrb[0].mxu0
  %v99 = vadd.f32 %v46, %v98
  %v100 = vpop.f32.mrb[0].mxu0
  %v101 = vpop.f32.mrb[0].mxu0
  %v102 = vadd.f32 %v46, %v101
  %v103 = vpop.f32.mrb[0].mxu0
  %104 = vdwg.mxu0
  %v105 = vmax.f32 %v99, 0.0
  %v106 = vmax.f32 %v102, 0.0
  %v107 = vld [vmem:[#allocation2] sm:$0xff]
  %v108 = vld [vmem:[#allocation2 + $0x8] sm:$0xff]
  %v109 = vpack.c.bf16 %v106, %v105
  %v110 = vld [vmem:[%s3] sm:$0xf]
  %v111 = vld [vmem:[%s3 + $0x4] sm:$0xf]
  %v112 = vld [vmem:[%s3 + $0x8] sm:$0xf]
  %v113 = vld [vmem:[%s3 + $0xc] sm:$0xf]
  %v114 = vld [vmem:[%s3 + $0x10] sm:$0xf]
  %v115 = vld [vmem:[%s3 + $0x14] sm:$0xf]
  %v116 = vld [vmem:[%s3 + $0x18] sm:$0xf]
  %v117 = vld [vmem:[%s3 + $0x1c] sm:$0xf]
  %v126 = vunpack.c.l.b16 %v110
  %v127 = vunpack.c.l.b16 %v111
  %v128 = vunpack.c.l.b16 %v112
  %v129 = vunpack.c.l.b16 %v113
  %v130 = vunpack.c.l.b16 %v114
  %v131 = vunpack.c.l.b16 %v115
  %v132 = vunpack.c.l.b16 %v116
  %v133 = vunpack.c.l.b16 %v117
  %v134 = vpack.c.b16 %v127, %v126
  %v135 = vpack.c.b16 %v129, %v128
  %v136 = vpack.c.b16 %v131, %v130
  %v137 = vpack.c.b16 %v133, %v132
  %vm142 = vcmask 523264
  %v144 = vsel %vm142, %v109, 0
  %146 = vmatprep.subr.bf16.mxu0 0
  %147 = vmatpush1.bf16.msra.mxu0 %v134
  %148 = vmatprep.subr.bf16.mxu0 0
  %149 = vmatpush1.bf16.msra.mxu0 %v135
  %150 = vmatprep.subr.bf16.mxu0 0
  %151 = vmatpush1.bf16.msra.mxu0 %v136
  %152 = vmatprep.subr.bf16.mxu0 0
  %153 = vmatpush1.bf16.msra.mxu0 %v137
  %154 = vmatprep.subr.bf16.mxu0 0
  %155 = vmatpush1.bf16.msra.mxu0 0
  %156 = vmatprep.subr.bf16.mxu0 0
  %157 = vmatpush1.bf16.msra.mxu0 0
  %158 = vmatprep.subr.bf16.mxu0 0
  %159 = vmatpush1.bf16.msra.mxu0 0
  %160 = vmatprep.subr.bf16.mxu0 0
  %161 = vmatpush1.bf16.msra.mxu0 0
  %162 = vmatprep.subr.bf16.mxu0 0
  %163 = vmatpush1.bf16.msra.mxu0 0
  %164 = vmatprep.subr.bf16.mxu0 0
  %165 = vmatpush1.bf16.msra.mxu0 0
  %166 = vmatprep.subr.bf16.mxu0 0
  %167 = vmatpush1.bf16.msra.mxu0 0
  %168 = vmatprep.subr.bf16.mxu0 0
  %169 = vmatpush1.bf16.msra.mxu0 0
  %170 = vmatprep.subr.bf16.mxu0 0
  %171 = vmatpush1.bf16.msra.mxu0 0
  %172 = vmatprep.subr.bf16.mxu0 0
  %173 = vmatpush1.bf16.msra.mxu0 0
  %174 = vmatprep.subr.bf16.mxu0 0
  %175 = vmatpush1.bf16.msra.mxu0 0
  %176 = vmatprep.subr.bf16.mxu0 0
  %177 = vmatpush1.bf16.msra.mxu0 0
  %178 = vmatprep.mubr.bf16.mxu0 0
  %179 = vmatmul.mubr.bf16.gmra.mrb[0].mxu0 %v144
  %v180 = vpop.f32.mrb[0].mxu0
  %v181 = vadd.f32 0.0, %v180
  %v182 = vpop.f32.mrb[0].mxu0
  %v183 = vpop.f32.mrb[0].mxu0
  %v184 = vadd.f32 0.0, %v183
  %v185 = vpop.f32.mrb[0].mxu0
  %186 = vdwg.mxu0
  %v187 = vadd.f32 %v107, %v181
  %v188 = vadd.f32 %v108, %v184
  %189 = vst.msk [vmem:[#allocation2] sm:$0xff] %vm60, %v187
  %190 = vst.msk [vmem:[#allocation2 + $0x8] sm:$0xff] %vm60, %v188
  // Predicated region
  $region34: #{transformer_forward.21} parent=0 // pred_check
    %p191 = pneg %p27
  $region35: #{transformer_forward.21} parent=0 // pred_check_branch
    %193 = sbr.rel (%p191) target = $region37
  $region36: #{transformer_forward.21} parent=0 // pred_region
    %v194 = vld [vmem:[%s0] sm:$0xff]
    %v195 = vld [vmem:[%s0 + $0x8] sm:$0xff]
    %v196 = vld [vmem:[#allocation2] sm:$0xff]
    %v197 = vld [vmem:[#allocation2 + $0x8] sm:$0xff]
    %v198 = vadd.f32 %v194, %v196
    %v199 = vadd.f32 %v195, %v197
    %v200 = vld [vmem:[%s4] sm:$0x1]
    %v202 = vlaneseq
    %v203 = vshrl.u32 %v202, 7
    %v204 = vsub.s32 0, %v203
    %v205 = vrot.slane %v200, %v204
    %v207 = vadd.f32 %v198, %v205
    %v208 = vadd.f32 %v199, %v205
    %v209 = vsel %vm60, %v207, 0.0
    %210 = vadd.xlane.f32.xlu0 %v209
    %v211 = vpop.xlane.xlu0 %210
    %v212 = vsel %vm60, %v208, 0.0
    %213 = vadd.xlane.f32.xlu0 %v212
    %v214 = vpop.xlane.xlu0 %213
    %v215 = vrcp.pop 32.0
    %v216 = vmul.f32 %v211, %v215
    %v217 = vmul.f32 %v214, %v215
    %v218 = vsub.f32 %v207, %v216
    %v219 = vsub.f32 %v208, %v217
    %v220 = vmul.f32 %v218, %v218
    %v221 = vmul.f32 %v219, %v219
    %v222 = vsel %vm60, %v220, 0.0
    %223 = vadd.xlane.f32.xlu0 %v222
    %v224 = vpop.xlane.xlu0 %223
    %v225 = vsel %vm60, %v221, 0.0
    %226 = vadd.xlane.f32.xlu0 %v225
    %v227 = vpop.xlane.xlu0 %226
    %v228 = vmul.f32 %v224, 0.032258064
    %v229 = vmul.f32 %v227, 0.032258064
    %v230 = vrsqrt.pop %v228
    %v231 = vmul.f32 %v228, %v230
    %vm232 = vcmp.eq.f32.partialorder %v228, inf
    %v233 = vsel %vm232, %v228, %v231
    %vm234 = vcmp.eq.f32.partialorder %v228, 0.0
    %v235 = vand.u32 %v228, 2147483648
    %v236 = vsel %vm234, %v235, %v233
    %v237 = vrsqrt.pop %v229
    %v238 = vmul.f32 %v229, %v237
    %vm239 = vcmp.eq.f32.partialorder %v229, inf
    %v240 = vsel %vm239, %v229, %v238
    %vm241 = vcmp.eq.f32.partialorder %v229, 0.0
    %v242 = vand.u32 %v229, 2147483648
    %v243 = vsel %vm241, %v242, %v240
    %v244 = vadd.f32 %v236, 1e-06
    %v245 = vadd.f32 %v243, 1e-06
    %v246 = vrcp.pop %v244
    %v247 = vrcp.pop %v245
    %v248 = vld [vmem:[%s5] sm:$0x1]
    %v250 = vlaneseq
    %v251 = vshrl.u32 %v250, 7
    %v252 = vsub.s32 0, %v251
    %v253 = vrot.slane %v248, %v252
    %v255 = vmul.f32 %v253, %v218
    %v256 = vmul.f32 %v253, %v219
    %v257 = vmul.f32 %v255, %v246
    %v258 = vmul.f32 %v256, %v247
    %v259 = vld [vmem:[%s6] sm:$0x1]
    %v261 = vlaneseq
    %v262 = vshrl.u32 %v261, 7
    %v263 = vsub.s32 0, %v262
    %v264 = vrot.slane %v259, %v263
    %v266 = vadd.f32 %v257, %v264
    %v267 = vadd.f32 %v258, %v264
    %268 = vst.msk [vmem:[%s7] sm:$0xff] %vm60, %v266
    %269 = vst.msk [vmem:[%s7 + $0x8] sm:$0xff] %vm60, %v267
  $region37: #{transformer_forward.21} parent=0 // pred_fallthru
    _
  // Predicated region
  $region38: #{transformer_forward.21} parent=0 // pred_check
    _
  $region39: #{transformer_forward.21} parent=0 // pred_check_branch
    %271 = sbr.rel (0) target = $region41
  $region40: #{transformer_forward.21} parent=0 // pred_region
    _
  $region41: #{transformer_forward.21} parent=0 // pred_fallthru
    _
  // Predicated region
  $region42: #{transformer_forward.21} parent=0 // pred_check
    _
  $region43: #{transformer_forward.21} parent=0 // pred_check_branch
    %273 = sbr.rel (0) target = $region45
  $region44: #{transformer_forward.21} parent=0 // pred_region
    _
  $region45: #{transformer_forward.21} parent=0 // pred_fallthru
    _

// kernel: transformer_forward.20
$region0: #{transformer_forward.20}
  #allocation0 [shape = 'u32[]', space=smem, size = 0x4, offset = 0x4, fixed_abs, tag = 'smem constant byte address 0x4 - core index']
  #allocation1 [shape = 'u32[144,128]{1,0:T(1,128)}', space=vmem, size = 0x12000, scoped, tag = 'internal scratch']
  #allocation2 [shape = 'f32[8,32]{1,0:T(8,128)}', space=vmem, size = 0x1000, scoped, tag = 'scratch operand']
  %s0 = inlined_call_operand.vmem [shape: bf16[2,4,8,8], index: 0, kind: input, shape index: {}]
  %s1 = inlined_call_operand.vmem [shape: bf16[2,4,8,8], index: 1, kind: input, shape index: {}]
  %s2 = inlined_call_operand.vmem [shape: bf16[2,4,8,8], index: 2, kind: input, shape index: {}]
  %s3 = inlined_call_operand.vmem [shape: f32[2,8,32], index: 3, kind: input, shape index: {}]
  %s4 = inlined_call_operand.vmem [shape: s32[2,1,8], index: 4, kind: input, shape index: {}]
  %s5 = inlined_call_operand.vmem [shape: bf16[4,8,32], index: 5, kind: input, shape index: {}]
  %s6 = inlined_call_operand.vmem [shape: f32[1,32], index: 6, kind: input, shape index: {}]
  %s7 = inlined_call_operand.vmem [shape: f32[1,32], index: 7, kind: input, shape index: {}]
  %s8 = inlined_call_operand.vmem [shape: f32[1,32], index: 8, kind: input, shape index: {}]
  %s9 = inlined_call_operand.vmem [shape: f32[2,8,32], index: 9, kind: output, shape index: {}]
  %s10 = sld [smem:[#allocation0]]
  $region69: #{transformer_forward.20} parent=0
    _
  %s12 = ssub.s32 1, %s10
  %s13 = scalar_select 0, %s12, %s10
  loop: start=0, step=1, limit=4
  $region2: #{transformer_forward.20} parent=0 // loop_pre_header
    _
  $region3: #{transformer_forward.20} parent=0 // loop_header
    %s15 = sphi 0, %s19
    %p16 = scmp.ge.s32.totalorder %s15, 4
    %s22 = sphi 0, %s34
    %s23 = sphi 0, %s30
    %s24 = sphi 0, %s22
    %s25 = sphi 0, %s23
    %s26 = sphi 0, %s24
    %s27 = sphi 0, %s25
    %s39 = sphi 0, %s41
    %s42 = sphi 0, %s39
    %s43 = sphi 0, %s42
    %s59 = sphi 0, %s43
    %s65 = sphi 0, %s67
    %s68 = sphi 0, %s65
    %s69 = sphi 0, %s68
    %s85 = sphi 0, %s69
    %s91 = sphi 0, %s93
    %s94 = sphi 0, %s91
    %s95 = sphi 0, %s94
    %s111 = sphi 0, %s95
    %s119 = sphi 0, %s121
    %s122 = sphi 0, %s119
    %s123 = sphi 0, %s122
    %s139 = sphi 0, %s123
    %s145 = sphi 0, %s147
    %s148 = sphi 0, %s145
    %s149 = sphi 0, %s148
    %s165 = sphi 0, %s149
    %s169 = sphi 0, %s169
    %s171 = sphi 0, %s169
    %s172 = sphi 0, %s171
    %s186 = sphi 0, %s172
    %s190 = sphi 0, %s190
    %s192 = sphi 0, %s190
    %s193 = sphi 0, %s192
    %s207 = sphi 0, %s193
    %s211 = sphi 0, %s211
    %s213 = sphi 0, %s211
    %s214 = sphi 0, %s213
    %s228 = sphi 0, %s214
    %s232 = sphi 0, %s232
    %s234 = sphi 0, %s232
    %s235 = sphi 0, %s234
    %s249 = sphi 0, %s235
    %s257 = sphi 0, %s259
    %s260 = sphi 0, %s257
    %s261 = sphi 0, %s260
    %s277 = sphi 0, %s261
  $region4: #{transformer_forward.20} parent=0 // loop_header_branch
    %18 = sbr.rel (%p16) target = $region8
  $region5: #{transformer_forward.20} parent=0 // loop_body
    %s20 = ssub.s32 %s15, 1
    %s21 = ssub.s32 %s15, 2
    %s28 = sadd.s32 1, %s23
    %p29 = scmp.ge.s32.totalorder %s28, 1
    %s30 = scalar_select %p29, 0, %s28
    %s31 = sadd.s32 1, %s22
    %s32 = scalar_select %p29, %s31, %s22
    %p33 = scmp.ge.s32.totalorder %s32, 2
    %s34 = scalar_select %p33, 0, %s32
    %s35 = ssub.s32 %s22, %s34
    %s36 = ssub.s32 %s23, %s30
    %s37 = sor.u32 %s35, %s36
    %p38 = scmp.eq.s32.totalorder %s37, 0
    %s40 = sadd.s32 %s39, 1
    %s41 = scalar_select %p38, %s39, %s40
    %p44 = pneg %p38
    %p45 = scmp.eq.s32.totalorder %s15, 1
    %p46 = por %p44, %p45
    %p47 = scmp.ne.s32.totalorder %s39, %s42
    %p48 = scmp.eq.s32.totalorder %s15, 0
    %p49 = por %p47, %p48
    %p50 = scmp.ne.s32.totalorder %s39, %s42
    %p51 = scmp.eq.s32.totalorder %s20, 1
    %p52 = por %p50, %p51
    %p53 = scmp.ne.s32.totalorder %s42, %s43
    %p54 = scmp.eq.s32.totalorder %s20, 0
    %p55 = por %p53, %p54
    %p56 = scmp.ne.s32.totalorder %s42, %s43
    %p57 = scmp.eq.s32.totalorder %s21, 1
    %p58 = por %p56, %p57
    %p60 = scmp.ne.s32.totalorder %s43, %s59
    %p61 = scmp.eq.s32.totalorder %s21, 0
    %p62 = por %p60, %p61
    %s63 = ssub.s32 %s22, %s34
    %p64 = scmp.eq.s32.totalorder %s63, 0
    %s66 = sadd.s32 %s65, 1
    %s67 = scalar_select %p64, %s65, %s66
    %p70 = pneg %p64
    %p71 = scmp.eq.s32.totalorder %s15, 1
    %p72 = por %p70, %p71
    %p73 = scmp.ne.s32.totalorder %s65, %s68
    %p74 = scmp.eq.s32.totalorder %s15, 0
    %p75 = por %p73, %p74
    %p76 = scmp.ne.s32.totalorder %s65, %s68
    %p77 = scmp.eq.s32.totalorder %s20, 1
    %p78 = por %p76, %p77
    %p79 = scmp.ne.s32.totalorder %s68, %s69
    %p80 = scmp.eq.s32.totalorder %s20, 0
    %p81 = por %p79, %p80
    %p82 = scmp.ne.s32.totalorder %s68, %s69
    %p83 = scmp.eq.s32.totalorder %s21, 1
    %p84 = por %p82, %p83
    %p86 = scmp.ne.s32.totalorder %s69, %s85
    %p87 = scmp.eq.s32.totalorder %s21, 0
    %p88 = por %p86, %p87
    %s89 = ssub.s32 %s22, %s34
    %p90 = scmp.eq.s32.totalorder %s89, 0
    %s92 = sadd.s32 %s91, 1
    %s93 = scalar_select %p90, %s91, %s92
    %p96 = pneg %p90
    %p97 = scmp.eq.s32.totalorder %s15, 1
    %p98 = por %p96, %p97
    %p99 = scmp.ne.s32.totalorder %s91, %s94
    %p100 = scmp.eq.s32.totalorder %s15, 0
    %p101 = por %p99, %p100
    %p102 = scmp.ne.s32.totalorder %s91, %s94
    %p103 = scmp.eq.s32.totalorder %s20, 1
    %p104 = por %p102, %p103
    %p105 = scmp.ne.s32.totalorder %s94, %s95
    %p106 = scmp.eq.s32.totalorder %s20, 0
    %p107 = por %p105, %p106
    %p108 = scmp.ne.s32.totalorder %s94, %s95
    %p109 = scmp.eq.s32.totalorder %s21, 1
    %p110 = por %p108, %p109
    %p112 = scmp.ne.s32.totalorder %s95, %s111
    %p113 = scmp.eq.s32.totalorder %s21, 0
    %p114 = por %p112, %p113
    %s115 = ssub.s32 %s22, %s34
    %s116 = ssub.s32 %s23, %s30
    %s117 = sor.u32 %s115, %s116
    %p118 = scmp.eq.s32.totalorder %s117, 0
    %s120 = sadd.s32 %s119, 1
    %s121 = scalar_select %p118, %s119, %s120
    %p124 = pneg %p118
    %p125 = scmp.eq.s32.totalorder %s15, 1
    %p126 = por %p124, %p125
    %p127 = scmp.ne.s32.totalorder %s119, %s122
    %p128 = scmp.eq.s32.totalorder %s15, 0
    %p129 = por %p127, %p128
    %p130 = scmp.ne.s32.totalorder %s119, %s122
    %p131 = scmp.eq.s32.totalorder %s20, 1
    %p132 = por %p130, %p131
    %p133 = scmp.ne.s32.totalorder %s122, %s123
    %p134 = scmp.eq.s32.totalorder %s20, 0
    %p135 = por %p133, %p134
    %p136 = scmp.ne.s32.totalorder %s122, %s123
    %p137 = scmp.eq.s32.totalorder %s21, 1
    %p138 = por %p136, %p137
    %p140 = scmp.ne.s32.totalorder %s123, %s139
    %p141 = scmp.eq.s32.totalorder %s21, 0
    %p142 = por %p140, %p141
    %s143 = ssub.s32 %s22, %s34
    %p144 = scmp.eq.s32.totalorder %s143, 0
    %s146 = sadd.s32 %s145, 1
    %s147 = scalar_select %p144, %s145, %s146
    %p150 = pneg %p144
    %p151 = scmp.eq.s32.totalorder %s15, 1
    %p152 = por %p150, %p151
    %p153 = scmp.ne.s32.totalorder %s145, %s148
    %p154 = scmp.eq.s32.totalorder %s15, 0
    %p155 = por %p153, %p154
    %p156 = scmp.ne.s32.totalorder %s145, %s148
    %p157 = scmp.eq.s32.totalorder %s20, 1
    %p158 = por %p156, %p157
    %p159 = scmp.ne.s32.totalorder %s148, %s149
    %p160 = scmp.eq.s32.totalorder %s20, 0
    %p161 = por %p159, %p160
    %p162 = scmp.ne.s32.totalorder %s148, %s149
    %p163 = scmp.eq.s32.totalorder %s21, 1
    %p164 = por %p162, %p163
    %p166 = scmp.ne.s32.totalorder %s149, %s165
    %p167 = scmp.eq.s32.totalorder %s21, 0
    %p168 = por %p166, %p167
    %s170 = sadd.s32 %s169, 1
    %p173 = scmp.eq.s32.totalorder %s15, 1
    %p174 = scmp.ne.s32.totalorder %s169, %s171
    %p175 = scmp.eq.s32.totalorder %s15, 0
    %p176 = por %p174, %p175
    %p177 = scmp.ne.s32.totalorder %s169, %s171
    %p178 = scmp.eq.s32.totalorder %s20, 1
    %p179 = por %p177, %p178
    %p180 = scmp.ne.s32.totalorder %s171, %s172
    %p181 = scmp.eq.s32.totalorder %s20, 0
    %p182 = por %p180, %p181
    %p183 = scmp.ne.s32.totalorder %s171, %s172
    %p184 = scmp.eq.s32.totalorder %s21, 1
    %p185 = por %p183, %p184
    %p187 = scmp.ne.s32.totalorder %s172, %s186
    %p188 = scmp.eq.s32.totalorder %s21, 0
    %p189 = por %p187, %p188
    %s191 = sadd.s32 %s190, 1
    %p194 = scmp.eq.s32.totalorder %s15, 1
    %p195 = scmp.ne.s32.totalorder %s190, %s192
    %p196 = scmp.eq.s32.totalorder %s15, 0
    %p197 = por %p195, %p196
    %p198 = scmp.ne.s32.totalorder %s190, %s192
    %p199 = scmp.eq.s32.totalorder %s20, 1
    %p200 = por %p198, %p199
    %p201 = scmp.ne.s32.totalorder %s192, %s193
    %p202 = scmp.eq.s32.totalorder %s20, 0
    %p203 = por %p201, %p202
    %p204 = scmp.ne.s32.totalorder %s192, %s193
    %p205 = scmp.eq.s32.totalorder %s21, 1
    %p206 = por %p204, %p205
    %p208 = scmp.ne.s32.totalorder %s193, %s207
    %p209 = scmp.eq.s32.totalorder %s21, 0
    %p210 = por %p208, %p209
    %s212 = sadd.s32 %s211, 1
    %p215 = scmp.eq.s32.totalorder %s15, 1
    %p216 = scmp.ne.s32.totalorder %s211, %s213
    %p217 = scmp.eq.s32.totalorder %s15, 0
    %p218 = por %p216, %p217
    %p219 = scmp.ne.s32.totalorder %s211, %s213
    %p220 = scmp.eq.s32.totalorder %s20, 1
    %p221 = por %p219, %p220
    %p222 = scmp.ne.s32.totalorder %s213, %s214
    %p223 = scmp.eq.s32.totalorder %s20, 0
    %p224 = por %p222, %p223
    %p225 = scmp.ne.s32.totalorder %s213, %s214
    %p226 = scmp.eq.s32.totalorder %s21, 1
    %p227 = por %p225, %p226
    %p229 = scmp.ne.s32.totalorder %s214, %s228
    %p230 = scmp.eq.s32.totalorder %s21, 0
    %p231 = por %p229, %p230
    %s233 = sadd.s32 %s232, 1
    %p236 = scmp.eq.s32.totalorder %s15, 1
    %p237 = scmp.ne.s32.totalorder %s232, %s234
    %p238 = scmp.eq.s32.totalorder %s15, 0
    %p239 = por %p237, %p238
    %p240 = scmp.ne.s32.totalorder %s232, %s234
    %p241 = scmp.eq.s32.totalorder %s20, 1
    %p242 = por %p240, %p241
    %p243 = scmp.ne.s32.totalorder %s234, %s235
    %p244 = scmp.eq.s32.totalorder %s20, 0
    %p245 = por %p243, %p244
    %p246 = scmp.ne.s32.totalorder %s234, %s235
    %p247 = scmp.eq.s32.totalorder %s21, 1
    %p248 = por %p246, %p247
    %p250 = scmp.ne.s32.totalorder %s235, %s249
    %p251 = scmp.eq.s32.totalorder %s21, 0
    %p252 = por %p250, %p251
    %s253 = ssub.s32 %s22, %s34
    %s254 = ssub.s32 %s23, %s30
    %s255 = sor.u32 %s253, %s254
    %p256 = scmp.eq.s32.totalorder %s255, 0
    %s258 = sadd.s32 %s257, 1
    %s259 = scalar_select %p256, %s257, %s258
    %p262 = pneg %p256
    %p263 = scmp.eq.s32.totalorder %s15, 1
    %p264 = por %p262, %p263
    %p265 = scmp.ne.s32.totalorder %s257, %s260
    %p266 = scmp.eq.s32.totalorder %s15, 0
    %p267 = por %p265, %p266
    %p268 = scmp.ne.s32.totalorder %s257, %s260
    %p269 = scmp.eq.s32.totalorder %s20, 1
    %p270 = por %p268, %p269
    %p271 = scmp.ne.s32.totalorder %s260, %s261
    %p272 = scmp.eq.s32.totalorder %s20, 0
    %p273 = por %p271, %p272
    %p274 = scmp.ne.s32.totalorder %s260, %s261
    %p275 = scmp.eq.s32.totalorder %s21, 1
    %p276 = por %p274, %p275
    %p278 = scmp.ne.s32.totalorder %s261, %s277
    %p279 = scmp.eq.s32.totalorder %s21, 0
    %p280 = por %p278, %p279
    %p281 = scmp.le.s32.totalorder 1, %s15
    %p282 = scmp.lt.s32.totalorder %s15, 3
    %p283 = pnand %p281, %p282
    %p284 = pneg %p283
    // Predicated region
    $region9: #{transformer_forward.20} parent=5 // pred_check
      _
    $region10: #{transformer_forward.20} parent=5 // pred_check_branch
      %286 = sbr.rel (%p283) target = $region12
    $region11: #{transformer_forward.20} parent=5 // pred_region
      %s287 = ssub.s32 %s15, 1
      // Predicated region
      $region13: #{transformer_forward.20} parent=11 // pred_check
        %p288 = pneg %p182
      $region14: #{transformer_forward.20} parent=11 // pred_check_branch
        %290 = sbr.rel (%p288) target = $region16
      $region15: #{transformer_forward.20} parent=11 // pred_region
        _
      $region16: #{transformer_forward.20} parent=11 // pred_fallthru
        _
      // Predicated region
      $region17: #{transformer_forward.20} parent=11 // pred_check
        %p291 = pneg %p203
      $region18: #{transformer_forward.20} parent=11 // pred_check_branch
        %293 = sbr.rel (%p291) target = $region20
      $region19: #{transformer_forward.20} parent=11 // pred_region
        _
      $region20: #{transformer_forward.20} parent=11 // pred_fallthru
        _
      // Predicated region
      $region21: #{transformer_forward.20} parent=11 // pred_check
        %p294 = pneg %p224
      $region22: #{transformer_forward.20} parent=11 // pred_check_branch
        %296 = sbr.rel (%p294) target = $region24
      $region23: #{transformer_forward.20} parent=11 // pred_region
        _
      $region24: #{transformer_forward.20} parent=11 // pred_fallthru
        _
      // Predicated region
      $region25: #{transformer_forward.20} parent=11 // pred_check
        %p297 = pneg %p245
      $region26: #{transformer_forward.20} parent=11 // pred_check_branch
        %299 = sbr.rel (%p297) target = $region28
      $region27: #{transformer_forward.20} parent=11 // pred_region
        _
      $region28: #{transformer_forward.20} parent=11 // pred_fallthru
        _
    $region12: #{transformer_forward.20} parent=5 // pred_fallthru
      _
    %p300 = scmp.lt.s32.totalorder %s15, 2
    // Predicated region
    $region29: #{transformer_forward.20} parent=5 // pred_check
      %p301 = pneg %p300
    $region30: #{transformer_forward.20} parent=5 // pred_check_branch
      %303 = sbr.rel (%p301) target = $region32
    $region31: #{transformer_forward.20} parent=5 // pred_region
      // Predicated region
      $region33: #{transformer_forward.20} parent=31 // pred_check
        %p304 = pneg %p49
      $region34: #{transformer_forward.20} parent=31 // pred_check_branch
        %306 = sbr.rel (%p304) target = $region36
      $region35: #{transformer_forward.20} parent=31 // pred_region
        %p307 = scmp.lt.s32.totalorder %s22, 1
        %s308 = scalar_select %p307, %s22, 1
        %p309 = scmp.lt.s32.totalorder %s23, 0
        %s310 = scalar_select %p309, %s23, 0
        %s311 = smul.addr %s308, 4
        %s312 = sadd.s32 %s310, %s311
        %s313 = smul.addr %s312, 4
        %s314 = scalar_lea.vmem %s0, %s313
      $region36: #{transformer_forward.20} parent=31 // pred_fallthru
        _
      // Predicated region
      $region37: #{transformer_forward.20} parent=31 // pred_check
        %p315 = pneg %p75
      $region38: #{transformer_forward.20} parent=31 // pred_check_branch
        %317 = sbr.rel (%p315) target = $region40
      $region39: #{transformer_forward.20} parent=31 // pred_region
        %p318 = scmp.lt.s32.totalorder %s22, 1
        %s319 = scalar_select %p318, %s22, 1
        %s320 = smul.addr %s319, 4
        %s321 = smul.addr %s320, 4
        %s322 = scalar_lea.vmem %s1, %s321
      $region40: #{transformer_forward.20} parent=31 // pred_fallthru
        _
      // Predicated region
      $region41: #{transformer_forward.20} parent=31 // pred_check
        %p323 = pneg %p101
      $region42: #{transformer_forward.20} parent=31 // pred_check_branch
        %325 = sbr.rel (%p323) target = $region44
      $region43: #{transformer_forward.20} parent=31 // pred_region
        %p326 = scmp.lt.s32.totalorder %s22, 1
        %s327 = scalar_select %p326, %s22, 1
        %s328 = smul.addr %s327, 4
        %s329 = smul.addr %s328, 4
        %s330 = scalar_lea.vmem %s2, %s329
      $region44: #{transformer_forward.20} parent=31 // pred_fallthru
        _
      // Predicated region
      $region45: #{transformer_forward.20} parent=31 // pred_check
        %p331 = pneg %p129
      $region46: #{transformer_forward.20} parent=31 // pred_check_branch
        %333 = sbr.rel (%p331) target = $region48
      $region47: #{transformer_forward.20} parent=31 // pred_region
        %p334 = scmp.lt.s32.totalorder %s22, 1
        %s335 = scalar_select %p334, %s22, 1
        %p336 = scmp.lt.s32.totalorder %s23, 0
        %s337 = scalar_select %p336, %s23, 0
        %s338 = sadd.s32 %s337, %s335
        %s339 = smul.addr %s338, 8
        %s340 = scalar_lea.vmem %s3, %s339
      $region48: #{transformer_forward.20} parent=31 // pred_fallthru
        _
      // Predicated region
      $region49: #{transformer_forward.20} parent=31 // pred_check
        %p341 = pneg %p155
      $region50: #{transformer_forward.20} parent=31 // pred_check_branch
        %343 = sbr.rel (%p341) target = $region52
      $region51: #{transformer_forward.20} parent=31 // pred_region
        %p344 = scmp.lt.s32.totalorder %s22, 1
        %s345 = scalar_select %p344, %s22, 1
        %s346 = scalar_lea.vmem %s4, %s345
      $region52: #{transformer_forward.20} parent=31 // pred_fallthru
        _
    $region32: #{transformer_forward.20} parent=5 // pred_fallthru
      _
    %p347 = scmp.le.s32.totalorder 1, %s15
    %p348 = scmp.lt.s32.totalorder %s15, 3
    %p349 = pnand %p347, %p348
    %p350 = pneg %p349
    // Predicated region
    $region53: #{transformer_forward.20} parent=5 // pred_check
      _
    $region54: #{transformer_forward.20} parent=5 // pred_check_branch
      %352 = sbr.rel (%p349) target = $region56
    $region55: #{transformer_forward.20} parent=5 // pred_region
      %s353 = ssub.s32 %s15, 1
      %p354 = scmp.lt.s32.totalorder %s24, 1
      %s355 = scalar_select %p354, %s24, 1
      %p356 = scmp.lt.s32.totalorder %s25, 0
      %s357 = scalar_select %p356, %s25, 0
      %s358 = smul.addr %s355, 4
      %s359 = sadd.s32 %s357, %s358
      %s360 = smul.addr %s359, 4
      %s361 = scalar_lea.vmem %s0, %s360
      %p362 = pneg %p55
      %p363 = pneg %p52
      %p364 = scmp.lt.s32.totalorder %s24, 1
      %s365 = scalar_select %p364, %s24, 1
      %s366 = smul.addr %s365, 4
      %s367 = smul.addr %s366, 4
      %s368 = scalar_lea.vmem %s1, %s367
      %p369 = pneg %p81
      %p370 = pneg %p78
      %p371 = scmp.lt.s32.totalorder %s24, 1
      %s372 = scalar_select %p371, %s24, 1
      %s373 = smul.addr %s372, 4
      %s374 = smul.addr %s373, 4
      %s375 = scalar_lea.vmem %s2, %s374
      %p376 = pneg %p107
      %p377 = pneg %p104
      %p378 = scmp.lt.s32.totalorder %s24, 1
      %s379 = scalar_select %p378, %s24, 1
      %p380 = scmp.lt.s32.totalorder %s25, 0
      %s381 = scalar_select %p380, %s25, 0
      %s382 = sadd.s32 %s381, %s379
      %s383 = smul.addr %s382, 8
      %s384 = scalar_lea.vmem %s3, %s383
      %p385 = pneg %p135
      %p386 = pneg %p132
      %p387 = scmp.lt.s32.totalorder %s24, 1
      %s388 = scalar_select %p387, %s24, 1
      %s389 = scalar_lea.vmem %s4, %s388
      %p390 = pneg %p161
      %p391 = pneg %p158
      %p392 = pneg %p182
      %p393 = pneg %p179
      %p394 = pneg %p203
      %p395 = pneg %p200
      %p396 = pneg %p224
      %p397 = pneg %p221
      %p398 = pneg %p245
      %p399 = pneg %p242
      %p400 = pneg %p273
      %p401 = pneg %p270
      %p402 = scmp.lt.s32.totalorder %s24, 1
      %s403 = scalar_select %p402, %s24, 1
      %p404 = scmp.lt.s32.totalorder %s25, 0
      %s405 = scalar_select %p404, %s25, 0
      %s406 = sadd.s32 %s405, %s403
      %s407 = smul.addr %s406, 8
      %s408 = scalar_lea.vmem %s9, %s407
      %p409 = scmp.lt.s32.totalorder %s24, 1
      %s410 = scalar_select %p409, %s24, 1
      %p411 = scmp.lt.s32.totalorder %s25, 0
      %s412 = scalar_select %p411, %s25, 0
      %s413 = smul.addr %s410, 4
      %s414 = sadd.s32 %s412, %s413
      %s415 = smul.addr %s414, 4
      %s416 = scalar_lea.vmem %s0, %s415
      %p417 = scmp.lt.s32.totalorder %s24, 1
      %s418 = scalar_select %p417, %s24, 1
      %s419 = smul.addr %s418, 4
      %s420 = smul.addr %s419, 4
      %s421 = scalar_lea.vmem %s1, %s420
      %p422 = scmp.lt.s32.totalorder %s24, 1
      %s423 = scalar_select %p422, %s24, 1
      %s424 = smul.addr %s423, 4
      %s425 = smul.addr %s424, 4
      %s426 = scalar_lea.vmem %s2, %s425
      %p427 = scmp.lt.s32.totalorder %s24, 1
      %s428 = scalar_select %p427, %s24, 1
      %p429 = scmp.lt.s32.totalorder %s25, 0
      %s430 = scalar_select %p429, %s25, 0
      %s431 = sadd.s32 %s430, %s428
      %s432 = smul.addr %s431, 8
      %s433 = scalar_lea.vmem %s3, %s432
      %p434 = scmp.lt.s32.totalorder %s24, 1
      %s435 = scalar_select %p434, %s24, 1
      %s436 = scalar_lea.vmem %s4, %s435
      %p437 = scmp.lt.s32.totalorder %s24, 1
      %s438 = scalar_select %p437, %s24, 1
      %p439 = scmp.lt.s32.totalorder %s25, 0
      %s440 = scalar_select %p439, %s25, 0
      %s441 = sadd.s32 %s440, %s438
      %s442 = smul.addr %s441, 8
      %s443 = scalar_lea.vmem %s9, %s442
      %v445 = vld [vmem:[%s436] sm:$0x1]
      %vm446 = vcmp.ne.s32.totalorder %v445, 0
      %v447 = vsel %vm446, 1, 0
      %v448 = vlaneseq
      %v449 = vshrl.u32 %v448, 7
      %v450 = vsub.s32 0, %v449
      %v451 = vrot.slane %v447, %v450
      %vm452 = vcmp.eq.s32.totalorder %v451, 1
      %vm453 = vcmask 261120
      %454 = vst.msk [vmem:[#allocation2] sm:$0xff] %vm453, 0.0
      %v455 = vld [vmem:[%s416] sm:$0xf]
      %v456 = vld [vmem:[%s421] sm:$0xf]
      %v457 = vld [vmem:[%s426] sm:$0xf]
      %vm458 = vcmask 64512
      %v460 = vsel %vm458, %v455, 0
      %v463 = vsel %vm458, %v456, 0
      %465 = vmatprep.subr.bf16.mxu0 0
      %466 = vmatpush1.bf16.xpose.msra.mxu0 %v463
      %467 = vmatprep.subr.bf16.mxu0 0
      %468 = vmatpush1.bf16.xpose.msra.mxu0 0
      %469 = vmatprep.subr.bf16.mxu0 0
      %470 = vmatpush1.bf16.xpose.msra.mxu0 0
      %471 = vmatprep.subr.bf16.mxu0 0
      %472 = vmatpush1.bf16.xpose.msra.mxu0 0
      %473 = vmatprep.subr.bf16.mxu0 0
      %474 = vmatpush1.bf16.xpose.msra.mxu0 0
      %475 = vmatprep.subr.bf16.mxu0 0
      %476 = vmatpush1.bf16.xpose.msra.mxu0 0
      %477 = vmatprep.subr.bf16.mxu0 0
      %478 = vmatpush1.bf16.xpose.msra.mxu0 0
      %479 = vmatprep.subr.bf16.mxu0 0
      %480 = vmatpush1.bf16.xpose.msra.mxu0 0
      %481 = vmatprep.subr.bf16.mxu0 0
      %482 = vmatpush1.bf16.xpose.msra.mxu0 0
      %483 = vmatprep.subr.bf16.mxu0 0
      %484 = vmatpush1.bf16.xpose.msra.mxu0 0
      %485 = vmatprep.subr.bf16.mxu0 0
      %486 = vmatpush1.bf16.xpose.msra.mxu0 0
      %487 = vmatprep.subr.bf16.mxu0 0
      %488 = vmatpush1.bf16.xpose.msra.mxu0 0
      %489 = vmatprep.subr.bf16.mxu0 0
      %490 = vmatpush1.bf16.xpose.msra.mxu0 0
      %491 = vmatprep.subr.bf16.mxu0 0
      %492 = vmatpush1.bf16.xpose.msra.mxu0 0
      %493 = vmatprep.subr.bf16.mxu0 0
      %494 = vmatpush1.bf16.xpose.msra.mxu0 0
      %495 = vmatprep.subr.bf16.mxu0 0
      %496 = vmatpush1.bf16.xpose.msra.mxu0 0
      %497 = vmatprep.mubr.bf16.mxu0 0
      %498 = vmatmul.mubr.bf16.gmra.mrb[0].mxu0 %v460
      %v499 = vpop.f32.mrb[0].mxu0
      %v500 = vadd.f32 0.0, %v499
      %v501 = vpop.f32.mrb[0].mxu0
      %v502 = vpop.f32.mrb[0].mxu0
      %v503 = vpop.f32.mrb[0].mxu0
      %504 = vdwg.mxu0
      %v505 = vmul.f32 %v500, 0.35355338
      %v506 = vsel %vm452, %v505, -1e+20
      %v507 = vsel %vm458, %v506, -inf
      %508 = vmax.xlane.f32.xlu0 %v507
      %v509 = vpop.xlane.xlu0 %508
      %v510 = vsub.f32 %v506, %v509
      %v511 = vmul.f32 %v510, 1.442695
      %v512 = vpow.pop %v511
      %v513 = vsel %vm458, %v512, 0.0
      %514 = vadd.xlane.f32.xlu0 %v513
      %v515 = vpop.xlane.xlu0 %514
      %v516 = vrcp.pop %v515
      %v517 = vmul.f32 %v512, %v516
      %v518 = vpack.c.bf16 %v517, %v517
      %v520 = vsel %vm458, %v518, 0
      %vm522 = vcmask 1043456
      %v524 = vsel %vm522, %v457, 0
      %526 = vmatprep.subr.bf16.mxu0 0
      %527 = vmatpush1.bf16.msra.mxu0 %v524
      %528 = vmatprep.subr.bf16.mxu0 0
      %529 = vmatpush1.bf16.msra.mxu0 0
      %530 = vmatprep.subr.bf16.mxu0 0
      %531 = vmatpush1.bf16.msra.mxu0 0
      %532 = vmatprep.subr.bf16.mxu0 0
      %533 = vmatpush1.bf16.msra.mxu0 0
      %534 = vmatprep.subr.bf16.mxu0 0
      %535 = vmatpush1.bf16.msra.mxu0 0
      %536 = vmatprep.subr.bf16.mxu0 0
      %537 = vmatpush1.bf16.msra.mxu0 0
      %538 = vmatprep.subr.bf16.mxu0 0
      %539 = vmatpush1.bf16.msra.mxu0 0
      %540 = vmatprep.subr.bf16.mxu0 0
      %541 = vmatpush1.bf16.msra.mxu0 0
      %542 = vmatprep.subr.bf16.mxu0 0
      %543 = vmatpush1.bf16.msra.mxu0 0
      %544 = vmatprep.subr.bf16.mxu0 0
      %545 = vmatpush1.bf16.msra.mxu0 0
      %546 = vmatprep.subr.bf16.mxu0 0
      %547 = vmatpush1.bf16.msra.mxu0 0
      %548 = vmatprep.subr.bf16.mxu0 0
      %549 = vmatpush1.bf16.msra.mxu0 0
      %550 = vmatprep.subr.bf16.mxu0 0
      %551 = vmatpush1.bf16.msra.mxu0 0
      %552 = vmatprep.subr.bf16.mxu0 0
      %553 = vmatpush1.bf16.msra.mxu0 0
      %554 = vmatprep.subr.bf16.mxu0 0
      %555 = vmatpush1.bf16.msra.mxu0 0
      %556 = vmatprep.subr.bf16.mxu0 0
      %557 = vmatpush1.bf16.msra.mxu0 0
      %558 = vmatprep.mubr.bf16.mxu0 0
      %559 = vmatmul.mubr.bf16.gmra.mrb[0].mxu0 %v520
      %v560 = vpop.f32.mrb[0].mxu0
      %v561 = vadd.f32 0.0, %v560
      %v562 = vpop.f32.mrb[0].mxu0
      %v563 = vpop.f32.mrb[0].mxu0
      %v564 = vpop.f32.mrb[0].mxu0
      %565 = vdwg.mxu0
      %v566 = vld [vmem:[#allocation2] sm:$0xff]
      %v567 = vpack.c.bf16 %v561, %v561
      %v568 = vld [vmem:[%s5] sm:$0xf]
      %v570 = vsel %vm458, %v567, 0
      %v573 = vsel %vm522, %v568, 0
      %575 = vmatprep.subr.bf16.mxu0 0
      %576 = vmatpush1.bf16.msra.mxu0 %v573
      %577 = vmatprep.subr.bf16.mxu0 0
      %578 = vmatpush1.bf16.msra.mxu0 0
      %579 = vmatprep.subr.bf16.mxu0 0
      %580 = vmatpush1.bf16.msra.mxu0 0
      %581 = vmatprep.subr.bf16.mxu0 0
      %582 = vmatpush1.bf16.msra.mxu0 0
      %583 = vmatprep.subr.bf16.mxu0 0
      %584 = vmatpush1.bf16.msra.mxu0 0
      %585 = vmatprep.subr.bf16.mxu0 0
      %586 = vmatpush1.bf16.msra.mxu0 0
      %587 = vmatprep.subr.bf16.mxu0 0
      %588 = vmatpush1.bf16.msra.mxu0 0
      %589 = vmatprep.subr.bf16.mxu0 0
      %590 = vmatpush1.bf16.msra.mxu0 0
      %591 = vmatprep.subr.bf16.mxu0 0
      %592 = vmatpush1.bf16.msra.mxu0 0
      %593 = vmatprep.subr.bf16.mxu0 0
      %594 = vmatpush1.bf16.msra.mxu0 0
      %595 = vmatprep.subr.bf16.mxu0 0
      %596 = vmatpush1.bf16.msra.mxu0 0
      %597 = vmatprep.subr.bf16.mxu0 0
      %598 = vmatpush1.bf16.msra.mxu0 0
      %599 = vmatprep.subr.bf16.mxu0 0
      %600 = vmatpush1.bf16.msra.mxu0 0
      %601 = vmatprep.subr.bf16.mxu0 0
      %602 = vmatpush1.bf16.msra.mxu0 0
      %603 = vmatprep.subr.bf16.mxu0 0
      %604 = vmatpush1.bf16.msra.mxu0 0
      %605 = vmatprep.subr.bf16.mxu0 0
      %606 = vmatpush1.bf16.msra.mxu0 0
      %607 = vmatprep.mubr.bf16.mxu0 0
      %608 = vmatmul.mubr.bf16.gmra.mrb[0].mxu0 %v570
      %v609 = vpop.f32.mrb[0].mxu0
      %v610 = vadd.f32 0.0, %v609
      %v611 = vpop.f32.mrb[0].mxu0
      %v612 = vpop.f32.mrb[0].mxu0
      %v613 = vpop.f32.mrb[0].mxu0
      %614 = vdwg.mxu0
      %v615 = vadd.f32 %v566, %v610
      %616 = vst.msk [vmem:[#allocation2] sm:$0xff] %vm453, %v615
      %s617 = scalar_lea.vmem %s416, 4
      %v618 = vld [vmem:[%s617] sm:$0xf]
      %s619 = scalar_lea.vmem %s421, 4
      %v620 = vld [vmem:[%s619] sm:$0xf]
      %s621 = scalar_lea.vmem %s426, 4
      %v622 = vld [vmem:[%s621] sm:$0xf]
      %v624 = vsel %vm458, %v618, 0
      %v627 = vsel %vm458, %v620, 0
      %629 = vmatprep.subr.bf16.mxu0 0
      %630 = vmatpush1.bf16.xpose.msra.mxu0 %v627
      %631 = vmatprep.subr.bf16.mxu0 0
      %632 = vmatpush1.bf16.xpose.msra.mxu0 0
      %633 = vmatprep.subr.bf16.mxu0 0
      %634 = vmatpush1.bf16.xpose.msra.mxu0 0
      %635 = vmatprep.subr.bf16.mxu0 0
      %636 = vmatpush1.bf16.xpose.msra.mxu0 0
      %637 = vmatprep.subr.bf16.mxu0 0
      %638 = vmatpush1.bf16.xpose.msra.mxu0 0
      %639 = vmatprep.subr.bf16.mxu0 0
      %640 = vmatpush1.bf16.xpose.msra.mxu0 0
      %641 = vmatprep.subr.bf16.mxu0 0
      %642 = vmatpush1.bf16.xpose.msra.mxu0 0
      %643 = vmatprep.subr.bf16.mxu0 0
      %644 = vmatpush1.bf16.xpose.msra.mxu0 0
      %645 = vmatprep.subr.bf16.mxu0 0
      %646 = vmatpush1.bf16.xpose.msra.mxu0 0
      %647 = vmatprep.subr.bf16.mxu0 0
      %648 = vmatpush1.bf16.xpose.msra.mxu0 0
      %649 = vmatprep.subr.bf16.mxu0 0
      %650 = vmatpush1.bf16.xpose.msra.mxu0 0
      %651 = vmatprep.subr.bf16.mxu0 0
      %652 = vmatpush1.bf16.xpose.msra.mxu0 0
      %653 = vmatprep.subr.bf16.mxu0 0
      %654 = vmatpush1.bf16.xpose.msra.mxu0 0
      %655 = vmatprep.subr.bf16.mxu0 0
      %656 = vmatpush1.bf16.xpose.msra.mxu0 0
      %657 = vmatprep.subr.bf16.mxu0 0
      %658 = vmatpush1.bf16.xpose.msra.mxu0 0
      %659 = vmatprep.subr.bf16.mxu0 0
      %660 = vmatpush1.bf16.xpose.msra.mxu0 0
      %661 = vmatprep.mubr.bf16.mxu0 0
      %662 = vmatmul.mubr.bf16.gmra.mrb[0].mxu0 %v624
      %v663 = vpop.f32.mrb[0].mxu0
      %v664 = vadd.f32 0.0, %v663
      %v665 = vpop.f32.mrb[0].mxu0
      %v666 = vpop.f32.mrb[0].mxu0
      %v667 = vpop.f32.mrb[0].mxu0
      %668 = vdwg.mxu0
      %v669 = vmul.f32 %v664, 0.35355338
      %v670 = vsel %vm452, %v669, -1e+20
      %v671 = vsel %vm458, %v670, -inf
      %672 = vmax.xlane.f32.xlu0 %v671
      %v673 = vpop.xlane.xlu0 %672
      %v674 = vsub.f32 %v670, %v673
      %v675 = vmul.f32 %v674, 1.442695
      %v676 = vpow.pop %v675
      %v677 = vsel %vm458, %v676, 0.0
      %678 = vadd.xlane.f32.xlu0 %v677
      %v679 = vpop.xlane.xlu0 %678
      %v680 = vrcp.pop %v679
      %v681 = vmul.f32 %v676, %v680
      %v682 = vpack.c.bf16 %v681, %v681
      %v684 = vsel %vm458, %v682, 0
      %v687 = vsel %vm522, %v622, 0
      %689 = vmatprep.subr.bf16.mxu0 0
      %690 = vmatpush1.bf16.msra.mxu0 %v687
      %691 = vmatprep.subr.bf16.mxu0 0
      %692 = vmatpush1.bf16.msra.mxu0 0
      %693 = vmatprep.subr.bf16.mxu0 0
      %694 = vmatpush1.bf16.msra.mxu0 0
      %695 = vmatprep.subr.bf16.mxu0 0
      %696 = vmatpush1.bf16.msra.mxu0 0
      %697 = vmatprep.subr.bf16.mxu0 0
      %698 = vmatpush1.bf16.msra.mxu0 0
      %699 = vmatprep.subr.bf16.mxu0 0
      %700 = vmatpush1.bf16.msra.mxu0 0
      %701 = vmatprep.subr.bf16.mxu0 0
      %702 = vmatpush1.bf16.msra.mxu0 0
      %703 = vmatprep.subr.bf16.mxu0 0
      %704 = vmatpush1.bf16.msra.mxu0 0
      %705 = vmatprep.subr.bf16.mxu0 0
      %706 = vmatpush1.bf16.msra.mxu0 0
      %707 = vmatprep.subr.bf16.mxu0 0
      %708 = vmatpush1.bf16.msra.mxu0 0
      %709 = vmatprep.subr.bf16.mxu0 0
      %710 = vmatpush1.bf16.msra.mxu0 0
      %711 = vmatprep.subr.bf16.mxu0 0
      %712 = vmatpush1.bf16.msra.mxu0 0
      %713 = vmatprep.subr.bf16.mxu0 0
      %714 = vmatpush1.bf16.msra.mxu0 0
      %715 = vmatprep.subr.bf16.mxu0 0
      %716 = vmatpush1.bf16.msra.mxu0 0
      %717 = vmatprep.subr.bf16.mxu0 0
      %718 = vmatpush1.bf16.msra.mxu0 0
      %719 = vmatprep.subr.bf16.mxu0 0
      %720 = vmatpush1.bf16.msra.mxu0 0
      %721 = vmatprep.mubr.bf16.mxu0 0
      %722 = vmatmul.mubr.bf16.gmra.mrb[0].mxu0 %v684
      %v723 = vpop.f32.mrb[0].mxu0
      %v724 = vadd.f32 0.0, %v723
      %v725 = vpop.f32.mrb[0].mxu0
      %v726 = vpop.f32.mrb[0].mxu0
      %v727 = vpop.f32.mrb[0].mxu0
      %728 = vdwg.mxu0
      %v729 = vld [vmem:[#allocation2] sm:$0xff]
      %v730 = vpack.c.bf16 %v724, %v724
      %s731 = scalar_lea.vmem %s5, 4
      %v732 = vld [vmem:[%s731] sm:$0xf]
      %v734 = vsel %vm458, %v730, 0
      %v737 = vsel %vm522, %v732, 0
      %739 = vmatprep.subr.bf16.mxu0 0
      %740 = vmatpush1.bf16.msra.mxu0 %v737
      %741 = vmatprep.subr.bf16.mxu0 0
      %742 = vmatpush1.bf16.msra.mxu0 0
      %743 = vmatprep.subr.bf16.mxu0 0
      %744 = vmatpush1.bf16.msra.mxu0 0
      %745 = vmatprep.subr.bf16.mxu0 0
      %746 = vmatpush1.bf16.msra.mxu0 0
      %747 = vmatprep.subr.bf16.mxu0 0
      %748 = vmatpush1.bf16.msra.mxu0 0
      %749 = vmatprep.subr.bf16.mxu0 0
      %750 = vmatpush1.bf16.msra.mxu0 0
      %751 = vmatprep.subr.bf16.mxu0 0
      %752 = vmatpush1.bf16.msra.mxu0 0
      %753 = vmatprep.subr.bf16.mxu0 0
      %754 = vmatpush1.bf16.msra.mxu0 0
      %755 = vmatprep.subr.bf16.mxu0 0
      %756 = vmatpush1.bf16.msra.mxu0 0
      %757 = vmatprep.subr.bf16.mxu0 0
      %758 = vmatpush1.bf16.msra.mxu0 0
      %759 = vmatprep.subr.bf16.mxu0 0
      %760 = vmatpush1.bf16.msra.mxu0 0
      %761 = vmatprep.subr.bf16.mxu0 0
      %762 = vmatpush1.bf16.msra.mxu0 0
      %763 = vmatprep.subr.bf16.mxu0 0
      %764 = vmatpush1.bf16.msra.mxu0 0
      %765 = vmatprep.subr.bf16.mxu0 0
      %766 = vmatpush1.bf16.msra.mxu0 0
      %767 = vmatprep.subr.bf16.mxu0 0
      %768 = vmatpush1.bf16.msra.mxu0 0
      %769 = vmatprep.subr.bf16.mxu0 0
      %770 = vmatpush1.bf16.msra.mxu0 0
      %771 = vmatprep.mubr.bf16.mxu0 0
      %772 = vmatmul.mubr.bf16.gmra.mrb[0].mxu0 %v734
      %v773 = vpop.f32.mrb[0].mxu0
      %v774 = vadd.f32 0.0, %v773
      %v775 = vpop.f32.mrb[0].mxu0
      %v776 = vpop.f32.mrb[0].mxu0
      %v777 = vpop.f32.mrb[0].mxu0
      %778 = vdwg.mxu0
      %v779 = vadd.f32 %v729, %v774
      %780 = vst.msk [vmem:[#allocation2] sm:$0xff] %vm453, %v779
      %s781 = scalar_lea.vmem %s416, 8
      %v782 = vld [vmem:[%s781] sm:$0xf]
      %s783 = scalar_lea.vmem %s421, 8
      %v784 = vld [vmem:[%s783] sm:$0xf]
      %s785 = scalar_lea.vmem %s426, 8
      %v786 = vld [vmem:[%s785] sm:$0xf]
      %v788 = vsel %vm458, %v782, 0
      %v791 = vsel %vm458, %v784, 0
      %793 = vmatprep.subr.bf16.mxu0 0
      %794 = vmatpush1.bf16.xpose.msra.mxu0 %v791
      %795 = vmatprep.subr.bf16.mxu0 0
      %796 = vmatpush1.bf16.xpose.msra.mxu0 0
      %797 = vmatprep.subr.bf16.mxu0 0
      %798 = vmatpush1.bf16.xpose.msra.mxu0 0
      %799 = vmatprep.subr.bf16.mxu0 0
      %800 = vmatpush1.bf16.xpose.msra.mxu0 0
      %801 = vmatprep.subr.bf16.mxu0 0
      %802 = vmatpush1.bf16.xpose.msra.mxu0 0
      %803 = vmatprep.subr.bf16.mxu0 0
      %804 = vmatpush1.bf16.xpose.msra.mxu0 0
      %805 = vmatprep.subr.bf16.mxu0 0
      %806 = vmatpush1.bf16.xpose.msra.mxu0 0
      %807 = vmatprep.subr.bf16.mxu0 0
      %808 = vmatpush1.bf16.xpose.msra.mxu0 0
      %809 = vmatprep.subr.bf16.mxu0 0
      %810 = vmatpush1.bf16.xpose.msra.mxu0 0
      %811 = vmatprep.subr.bf16.mxu0 0
      %812 = vmatpush1.bf16.xpose.msra.mxu0 0
      %813 = vmatprep.subr.bf16.mxu0 0
      %814 = vmatpush1.bf16.xpose.msra.mxu0 0
      %815 = vmatprep.subr.bf16.mxu0 0
      %816 = vmatpush1.bf16.xpose.msra.mxu0 0
      %817 = vmatprep.subr.bf16.mxu0 0
      %818 = vmatpush1.bf16.xpose.msra.mxu0 0
      %819 = vmatprep.subr.bf16.mxu0 0
      %820 = vmatpush1.bf16.xpose.msra.mxu0 0
      %821 = vmatprep.subr.bf16.mxu0 0
      %822 = vmatpush1.bf16.xpose.msra.mxu0 0
      %823 = vmatprep.subr.bf16.mxu0 0
      %824 = vmatpush1.bf16.xpose.msra.mxu0 0
      %825 = vmatprep.mubr.bf16.mxu0 0
      %826 = vmatmul.mubr.bf16.gmra.mrb[0].mxu0 %v788
      %v827 = vpop.f32.mrb[0].mxu0
      %v828 = vadd.f32 0.0, %v827
      %v829 = vpop.f32.mrb[0].mxu0
      %v830 = vpop.f32.mrb[0].mxu0
      %v831 = vpop.f32.mrb[0].mxu0
      %832 = vdwg.mxu0
      %v833 = vmul.f32 %v828, 0.35355338
      %v834 = vsel %vm452, %v833, -1e+20
      %v835 = vsel %vm458, %v834, -inf
      %836 = vmax.xlane.f32.xlu0 %v835
      %v837 = vpop.xlane.xlu0 %836
      %v838 = vsub.f32 %v834, %v837
      %v839 = vmul.f32 %v838, 1.442695
      %v840 = vpow.pop %v839
      %v841 = vsel %vm458, %v840, 0.0
      %842 = vadd.xlane.f32.xlu0 %v841
      %v843 = vpop.xlane.xlu0 %842
      %v844 = vrcp.pop %v843
      %v845 = vmul.f32 %v840, %v844
      %v846 = vpack.c.bf16 %v845, %v845
      %v848 = vsel %vm458, %v846, 0
      %v851 = vsel %vm522, %v786, 0
      %853 = vmatprep.subr.bf16.mxu0 0
      %854 = vmatpush1.bf16.msra.mxu0 %v851
      %855 = vmatprep.subr.bf16.mxu0 0
      %856 = vmatpush1.bf16.msra.mxu0 0
      %857 = vmatprep.subr.bf16.mxu0 0
      %858 = vmatpush1.bf16.msra.mxu0 0
      %859 = vmatprep.subr.bf16.mxu0 0
      %860 = vmatpush1.bf16.msra.mxu0 0
      %861 = vmatprep.subr.bf16.mxu0 0
      %862 = vmatpush1.bf16.msra.mxu0 0
      %863 = vmatprep.subr.bf16.mxu0 0
      %864 = vmatpush1.bf16.msra.mxu0 0
      %865 = vmatprep.subr.bf16.mxu0 0
      %866 = vmatpush1.bf16.msra.mxu0 0
      %867 = vmatprep.subr.bf16.mxu0 0
      %868 = vmatpush1.bf16.msra.mxu0 0
      %869 = vmatprep.subr.bf16.mxu0 0
      %870 = vmatpush1.bf16.msra.mxu0 0
      %871 = vmatprep.subr.bf16.mxu0 0
      %872 = vmatpush1.bf16.msra.mxu0 0
      %873 = vmatprep.subr.bf16.mxu0 0
      %874 = vmatpush1.bf16.msra.mxu0 0
      %875 = vmatprep.subr.bf16.mxu0 0
      %876 = vmatpush1.bf16.msra.mxu0 0
      %877 = vmatprep.subr.bf16.mxu0 0
      %878 = vmatpush1.bf16.msra.mxu0 0
      %879 = vmatprep.subr.bf16.mxu0 0
      %880 = vmatpush1.bf16.msra.mxu0 0
      %881 = vmatprep.subr.bf16.mxu0 0
      %882 = vmatpush1.bf16.msra.mxu0 0
      %883 = vmatprep.subr.bf16.mxu0 0
      %884 = vmatpush1.bf16.msra.mxu0 0
      %885 = vmatprep.mubr.bf16.mxu0 0
      %886 = vmatmul.mubr.bf16.gmra.mrb[0].mxu0 %v848
      %v887 = vpop.f32.mrb[0].mxu0
      %v888 = vadd.f32 0.0, %v887
      %v889 = vpop.f32.mrb[0].mxu0
      %v890 = vpop.f32.mrb[0].mxu0
      %v891 = vpop.f32.mrb[0].mxu0
      %892 = vdwg.mxu0
      %v893 = vld [vmem:[#allocation2] sm:$0xff]
      %v894 = vpack.c.bf16 %v888, %v888
      %s895 = scalar_lea.vmem %s5, 8
      %v896 = vld [vmem:[%s895] sm:$0xf]
      %v898 = vsel %vm458, %v894, 0
      %v901 = vsel %vm522, %v896, 0
      %903 = vmatprep.subr.bf16.mxu0 0
      %904 = vmatpush1.bf16.msra.mxu0 %v901
      %905 = vmatprep.subr.bf16.mxu0 0
      %906 = vmatpush1.bf16.msra.mxu0 0
      %907 = vmatprep.subr.bf16.mxu0 0
      %908 = vmatpush1.bf16.msra.mxu0 0
      %909 = vmatprep.subr.bf16.mxu0 0
      %910 = vmatpush1.bf16.msra.mxu0 0
      %911 = vmatprep.subr.bf16.mxu0 0
      %912 = vmatpush1.bf16.msra.mxu0 0
      %913 = vmatprep.subr.bf16.mxu0 0
      %914 = vmatpush1.bf16.msra.mxu0 0
      %915 = vmatprep.subr.bf16.mxu0 0
      %916 = vmatpush1.bf16.msra.mxu0 0
      %917 = vmatprep.subr.bf16.mxu0 0
      %918 = vmatpush1.bf16.msra.mxu0 0
      %919 = vmatprep.subr.bf16.mxu0 0
      %920 = vmatpush1.bf16.msra.mxu0 0
      %921 = vmatprep.subr.bf16.mxu0 0
      %922 = vmatpush1.bf16.msra.mxu0 0
      %923 = vmatprep.subr.bf16.mxu0 0
      %924 = vmatpush1.bf16.msra.mxu0 0
      %925 = vmatprep.subr.bf16.mxu0 0
      %926 = vmatpush1.bf16.msra.mxu0 0
      %927 = vmatprep.subr.bf16.mxu0 0
      %928 = vmatpush1.bf16.msra.mxu0 0
      %929 = vmatprep.subr.bf16.mxu0 0
      %930 = vmatpush1.bf16.msra.mxu0 0
      %931 = vmatprep.subr.bf16.mxu0 0
      %932 = vmatpush1.bf16.msra.mxu0 0
      %933 = vmatprep.subr.bf16.mxu0 0
      %934 = vmatpush1.bf16.msra.mxu0 0
      %935 = vmatprep.mubr.bf16.mxu0 0
      %936 = vmatmul.mubr.bf16.gmra.mrb[0].mxu0 %v898
      %v937 = vpop.f32.mrb[0].mxu0
      %v938 = vadd.f32 0.0, %v937
      %v939 = vpop.f32.mrb[0].mxu0
      %v940 = vpop.f32.mrb[0].mxu0
      %v941 = vpop.f32.mrb[0].mxu0
      %942 = vdwg.mxu0
      %v943 = vadd.f32 %v893, %v938
      %944 = vst.msk [vmem:[#allocation2] sm:$0xff] %vm453, %v943
      %s945 = scalar_lea.vmem %s416, 12
      %v946 = vld [vmem:[%s945] sm:$0xf]
      %s947 = scalar_lea.vmem %s421, 12
      %v948 = vld [vmem:[%s947] sm:$0xf]
      %s949 = scalar_lea.vmem %s426, 12
      %v950 = vld [vmem:[%s949] sm:$0xf]
      %v952 = vsel %vm458, %v946, 0
      %v955 = vsel %vm458, %v948, 0
      %957 = vmatprep.subr.bf16.mxu0 0
      %958 = vmatpush1.bf16.xpose.msra.mxu0 %v955
      %959 = vmatprep.subr.bf16.mxu0 0
      %960 = vmatpush1.bf16.xpose.msra.mxu0 0
      %961 = vmatprep.subr.bf16.mxu0 0
      %962 = vmatpush1.bf16.xpose.msra.mxu0 0
      %963 = vmatprep.subr.bf16.mxu0 0
      %964 = vmatpush1.bf16.xpose.msra.mxu0 0
      %965 = vmatprep.subr.bf16.mxu0 0
      %966 = vmatpush1.bf16.xpose.msra.mxu0 0
      %967 = vmatprep.subr.bf16.mxu0 0
      %968 = vmatpush1.bf16.xpose.msra.mxu0 0
      %969 = vmatprep.subr.bf16.mxu0 0
      %970 = vmatpush1.bf16.xpose.msra.mxu0 0
      %971 = vmatprep.subr.bf16.mxu0 0
      %972 = vmatpush1.bf16.xpose.msra.mxu0 0
      %973 = vmatprep.subr.bf16.mxu0 0
      %974 = vmatpush1.bf16.xpose.msra.mxu0 0
      %975 = vmatprep.subr.bf16.mxu0 0
      %976 = vmatpush1.bf16.xpose.msra.mxu0 0
      %977 = vmatprep.subr.bf16.mxu0 0
      %978 = vmatpush1.bf16.xpose.msra.mxu0 0
      %979 = vmatprep.subr.bf16.mxu0 0
      %980 = vmatpush1.bf16.xpose.msra.mxu0 0
      %981 = vmatprep.subr.bf16.mxu0 0
      %982 = vmatpush1.bf16.xpose.msra.mxu0 0
      %983 = vmatprep.subr.bf16.mxu0 0
      %984 = vmatpush1.bf16.xpose.msra.mxu0 0
      %985 = vmatprep.subr.bf16.mxu0 0
      %986 = vmatpush1.bf16.xpose.msra.mxu0 0
      %987 = vmatprep.subr.bf16.mxu0 0
      %988 = vmatpush1.bf16.xpose.msra.mxu0 0
      %989 = vmatprep.mubr.bf16.mxu0 0
      %990 = vmatmul.mubr.bf16.gmra.mrb[0].mxu0 %v952
      %v991 = vpop.f32.mrb[0].mxu0
      %v992 = vadd.f32 0.0, %v991
      %v993 = vpop.f32.mrb[0].mxu0
      %v994 = vpop.f32.mrb[0].mxu0
      %v995 = vpop.f32.mrb[0].mxu0
      %996 = vdwg.mxu0
      %v997 = vmul.f32 %v992, 0.35355338
      %v998 = vsel %vm452, %v997, -1e+20
      %v999 = vsel %vm458, %v998, -inf
      %1000 = vmax.xlane.f32.xlu0 %v999
      %v1001 = vpop.xlane.xlu0 %1000
      %v1002 = vsub.f32 %v998, %v1001
      %v1003 = vmul.f32 %v1002, 1.442695
      %v1004 = vpow.pop %v1003
      %v1005 = vsel %vm458, %v1004, 0.0
      %1006 = vadd.xlane.f32.xlu0 %v1005
      %v1007 = vpop.xlane.xlu0 %1006
      %v1008 = vrcp.pop %v1007
      %v1009 = vmul.f32 %v1004, %v1008
      %v1010 = vpack.c.bf16 %v1009, %v1009
      %v1012 = vsel %vm458, %v1010, 0
      %v1015 = vsel %vm522, %v950, 0
      %1017 = vmatprep.subr.bf16.mxu0 0
      %1018 = vmatpush1.bf16.msra.mxu0 %v1015
      %1019 = vmatprep.subr.bf16.mxu0 0
      %1020 = vmatpush1.bf16.msra.mxu0 0
      %1021 = vmatprep.subr.bf16.mxu0 0
      %1022 = vmatpush1.bf16.msra.mxu0 0
      %1023 = vmatprep.subr.bf16.mxu0 0
      %1024 = vmatpush1.bf16.msra.mxu0 0
      %1025 = vmatprep.subr.bf16.mxu0 0
      %1026 = vmatpush1.bf16.msra.mxu0 0
      %1027 = vmatprep.subr.bf16.mxu0 0
      %1028 = vmatpush1.bf16.msra.mxu0 0
      %1029 = vmatprep.subr.bf16.mxu0 0
      %1030 = vmatpush1.bf16.msra.mxu0 0
      %1031 = vmatprep.subr.bf16.mxu0 0
      %1032 = vmatpush1.bf16.msra.mxu0 0
      %1033 = vmatprep.subr.bf16.mxu0 0
      %1034 = vmatpush1.bf16.msra.mxu0 0
      %1035 = vmatprep.subr.bf16.mxu0 0
      %1036 = vmatpush1.bf16.msra.mxu0 0
      %1037 = vmatprep.subr.bf16.mxu0 0
      %1038 = vmatpush1.bf16.msra.mxu0 0
      %1039 = vmatprep.subr.bf16.mxu0 0
      %1040 = vmatpush1.bf16.msra.mxu0 0
      %1041 = vmatprep.subr.bf16.mxu0 0
      %1042 = vmatpush1.bf16.msra.mxu0 0
      %1043 = vmatprep.subr.bf16.mxu0 0
      %1044 = vmatpush1.bf16.msra.mxu0 0
      %1045 = vmatprep.subr.bf16.mxu0 0
      %1046 = vmatpush1.bf16.msra.mxu0 0
      %1047 = vmatprep.subr.bf16.mxu0 0
      %1048 = vmatpush1.bf16.msra.mxu0 0
      %1049 = vmatprep.mubr.bf16.mxu0 0
      %1050 = vmatmul.mubr.bf16.gmra.mrb[0].mxu0 %v1012
      %v1051 = vpop.f32.mrb[0].mxu0
      %v1052 = vadd.f32 0.0, %v1051
      %v1053 = vpop.f32.mrb[0].mxu0
      %v1054 = vpop.f32.mrb[0].mxu0
      %v1055 = vpop.f32.mrb[0].mxu0
      %1056 = vdwg.mxu0
      %v1057 = vld [vmem:[#allocation2] sm:$0xff]
      %v1058 = vpack.c.bf16 %v1052, %v1052
      %s1059 = scalar_lea.vmem %s5, 12
      %v1060 = vld [vmem:[%s1059] sm:$0xf]
      %v1062 = vsel %vm458, %v1058, 0
      %v1065 = vsel %vm522, %v1060, 0
      %1067 = vmatprep.subr.bf16.mxu0 0
      %1068 = vmatpush1.bf16.msra.mxu0 %v1065
      %1069 = vmatprep.subr.bf16.mxu0 0
      %1070 = vmatpush1.bf16.msra.mxu0 0
      %1071 = vmatprep.subr.bf16.mxu0 0
      %1072 = vmatpush1.bf16.msra.mxu0 0
      %1073 = vmatprep.subr.bf16.mxu0 0
      %1074 = vmatpush1.bf16.msra.mxu0 0
      %1075 = vmatprep.subr.bf16.mxu0 0
      %1076 = vmatpush1.bf16.msra.mxu0 0
      %1077 = vmatprep.subr.bf16.mxu0 0
      %1078 = vmatpush1.bf16.msra.mxu0 0
      %1079 = vmatprep.subr.bf16.mxu0 0
      %1080 = vmatpush1.bf16.msra.mxu0 0
      %1081 = vmatprep.subr.bf16.mxu0 0
      %1082 = vmatpush1.bf16.msra.mxu0 0
      %1083 = vmatprep.subr.bf16.mxu0 0
      %1084 = vmatpush1.bf16.msra.mxu0 0
      %1085 = vmatprep.subr.bf16.mxu0 0
      %1086 = vmatpush1.bf16.msra.mxu0 0
      %1087 = vmatprep.subr.bf16.mxu0 0
      %1088 = vmatpush1.bf16.msra.mxu0 0
      %1089 = vmatprep.subr.bf16.mxu0 0
      %1090 = vmatpush1.bf16.msra.mxu0 0
      %1091 = vmatprep.subr.bf16.mxu0 0
      %1092 = vmatpush1.bf16.msra.mxu0 0
      %1093 = vmatprep.subr.bf16.mxu0 0
      %1094 = vmatpush1.bf16.msra.mxu0 0
      %1095 = vmatprep.subr.bf16.mxu0 0
      %1096 = vmatpush1.bf16.msra.mxu0 0
      %1097 = vmatprep.subr.bf16.mxu0 0
      %1098 = vmatpush1.bf16.msra.mxu0 0
      %1099 = vmatprep.mubr.bf16.mxu0 0
      %1100 = vmatmul.mubr.bf16.gmra.mrb[0].mxu0 %v1062
      %v1101 = vpop.f32.mrb[0].mxu0
      %v1102 = vadd.f32 0.0, %v1101
      %v1103 = vpop.f32.mrb[0].mxu0
      %v1104 = vpop.f32.mrb[0].mxu0
      %v1105 = vpop.f32.mrb[0].mxu0
      %1106 = vdwg.mxu0
      %v1107 = vadd.f32 %v1057, %v1102
      %1108 = vst.msk [vmem:[#allocation2] sm:$0xff] %vm453, %v1107
      %v1109 = vld [vmem:[%s433] sm:$0xff]
      %v1110 = vld [vmem:[#allocation2] sm:$0xff]
      %v1111 = vadd.f32 %v1109, %v1110
      %v1112 = vld [vmem:[%s6] sm:$0x1]
      %v1114 = vlaneseq
      %v1115 = vshrl.u32 %v1114, 7
      %v1116 = vsub.s32 0, %v1115
      %v1117 = vrot.slane %v1112, %v1116
      %v1119 = vadd.f32 %v1111, %v1117
      %v1120 = vsel %vm453, %v1119, 0.0
      %1121 = vadd.xlane.f32.xlu0 %v1120
      %v1122 = vpop.xlane.xlu0 %1121
      %v1123 = vrcp.pop 32.0
      %v1124 = vmul.f32 %v1122, %v1123
      %v1125 = vsub.f32 %v1119, %v1124
      %v1126 = vmul.f32 %v1125, %v1125
      %v1127 = vsel %vm453, %v1126, 0.0
      %1128 = vadd.xlane.f32.xlu0 %v1127
      %v1129 = vpop.xlane.xlu0 %1128
      %v1130 = vmul.f32 %v1129, 0.032258064
      %v1131 = vrsqrt.pop %v1130
      %v1132 = vmul.f32 %v1130, %v1131
      %vm1133 = vcmp.eq.f32.partialorder %v1130, inf
      %v1134 = vsel %vm1133, %v1130, %v1132
      %vm1135 = vcmp.eq.f32.partialorder %v1130, 0.0
      %v1136 = vand.u32 %v1130, 2147483648
      %v1137 = vsel %vm1135, %v1136, %v1134
      %v1138 = vadd.f32 %v1137, 1e-06
      %v1139 = vrcp.pop %v1138
      %v1140 = vld [vmem:[%s7] sm:$0x1]
      %v1142 = vlaneseq
      %v1143 = vshrl.u32 %v1142, 7
      %v1144 = vsub.s32 0, %v1143
      %v1145 = vrot.slane %v1140, %v1144
      %v1147 = vmul.f32 %v1145, %v1125
      %v1148 = vmul.f32 %v1147, %v1139
      %v1149 = vld [vmem:[%s8] sm:$0x1]
      %v1151 = vlaneseq
      %v1152 = vshrl.u32 %v1151, 7
      %v1153 = vsub.s32 0, %v1152
      %v1154 = vrot.slane %v1149, %v1153
      %v1156 = vadd.f32 %v1148, %v1154
      %1157 = vst.msk [vmem:[%s443] sm:$0xff] %vm453, %v1156
      %p1158 = scmp.lt.s32.totalorder %s24, 1
      %s1159 = scalar_select %p1158, %s24, 1
      %p1160 = scmp.lt.s32.totalorder %s25, 0
      %s1161 = scalar_select %p1160, %s25, 0
      %s1162 = sadd.s32 %s1161, %s1159
      %s1163 = smul.addr %s1162, 8
      %s1164 = scalar_lea.vmem %s9, %s1163
      // Predicated region
      $region57: #{transformer_forward.20} parent=55 // pred_check
        %p1165 = pneg %p270
      $region58: #{transformer_forward.20} parent=55 // pred_check_branch
        %1167 = sbr.rel (%p1165) target = $region60
      $region59: #{transformer_forward.20} parent=55 // pred_region
        _
      $region60: #{transformer_forward.20} parent=55 // pred_fallthru
        _
    $region56: #{transformer_forward.20} parent=5 // pred_fallthru
      _
    %p1168 = scmp.le.s32.totalorder 2, %s15
    // Predicated region
    $region61: #{transformer_forward.20} parent=5 // pred_check
      %p1169 = pneg %p1168
    $region62: #{transformer_forward.20} parent=5 // pred_check_branch
      %1171 = sbr.rel (%p1169) target = $region64
    $region63: #{transformer_forward.20} parent=5 // pred_region
      %s1172 = ssub.s32 %s15, 2
      // Predicated region
      $region65: #{transformer_forward.20} parent=63 // pred_check
        %p1173 = pneg %p276
      $region66: #{transformer_forward.20} parent=63 // pred_check_branch
        %1175 = sbr.rel (%p1173) target = $region68
      $region67: #{transformer_forward.20} parent=63 // pred_region
        %p1176 = scmp.lt.s32.totalorder %s26, 1
        %s1177 = scalar_select %p1176, %s26, 1
        %p1178 = scmp.lt.s32.totalorder %s27, 0
        %s1179 = scalar_select %p1178, %s27, 0
        %s1180 = sadd.s32 %s1179, %s1177
        %s1181 = smul.addr %s1180, 8
        %s1182 = scalar_lea.vmem %s9, %s1181
      $region68: #{transformer_forward.20} parent=63 // pred_fallthru
        _
    $region64: #{transformer_forward.20} parent=5 // pred_fallthru
      _
  $region6: #{transformer_forward.20} parent=0 // loop_footer
    %s19 = sadd.s32 1, %s15
  $region7: #{transformer_forward.20} parent=0 // loop_footer_branch
    %14 = sbr.rel target = $region3
  $region8: #{transformer_forward.20} parent=0 // loop_exit
    _

// kernel: transformer_forward.37
$region0: #{transformer_forward.37}
  #allocation0 [shape = 'u32[]', space=smem, size = 0x4, offset = 0x4, fixed_abs, tag = 'smem constant byte address 0x4 - core index']
  #allocation1 [shape = 'u32[144,128]{1,0:T(1,128)}', space=vmem, size = 0x12000, scoped, tag = 'internal scratch']
  #allocation2 [shape = 'f32[16,128]{1,0:T(8,128)}', space=vmem, size = 0x2000, scoped, tag = 'scratch operand']
  %s0 = inlined_call_operand.vmem [shape: f32[16,32], index: 0, kind: input, shape index: {}]
  %s1 = inlined_call_operand.vmem [shape: bf16[32,128], index: 1, kind: input, shape index: {}]
  %s2 = inlined_call_operand.vmem [shape: f32[1,128], index: 2, kind: input, shape index: {}]
  %s3 = inlined_call_operand.vmem [shape: f32[16,128], index: 3, kind: output, shape index: {}]
  %s4 = sld [smem:[#allocation0]]
  $region30: #{transformer_forward.37} parent=0
    _
  %s6 = ssub.s32 1, %s4
  %s7 = scalar_select 0, %s6, %s4
  // Predicated region
  $region2: #{transformer_forward.37} parent=0 // pred_check
    _
  $region3: #{transformer_forward.37} parent=0 // pred_check_branch
    %9 = sbr.rel (0) target = $region5
  $region4: #{transformer_forward.37} parent=0 // pred_region
    _
  $region5: #{transformer_forward.37} parent=0 // pred_fallthru
    _
  // Predicated region
  $region6: #{transformer_forward.37} parent=0 // pred_check
    _
  $region7: #{transformer_forward.37} parent=0 // pred_check_branch
    %11 = sbr.rel (0) target = $region9
  $region8: #{transformer_forward.37} parent=0 // pred_region
    _
  $region9: #{transformer_forward.37} parent=0 // pred_fallthru
    _
  // Predicated region
  $region10: #{transformer_forward.37} parent=0 // pred_check
    _
  $region11: #{transformer_forward.37} parent=0 // pred_check_branch
    %13 = sbr.rel (0) target = $region13
  $region12: #{transformer_forward.37} parent=0 // pred_region
    _
  $region13: #{transformer_forward.37} parent=0 // pred_fallthru
    _
  %p15 = scmp.eq.s32.totalorder 0, 0
  // Predicated region
  $region14: #{transformer_forward.37} parent=0 // pred_check
    %p16 = pneg %p15
  $region15: #{transformer_forward.37} parent=0 // pred_check_branch
    %18 = sbr.rel (%p16) target = $region17
  $region16: #{transformer_forward.37} parent=0 // pred_region
    %19 = vst [vmem:[#allocation2] sm:$0xff] 0.0
    %20 = vst [vmem:[#allocation2 + $0x8] sm:$0xff] 0.0
  $region17: #{transformer_forward.37} parent=0 // pred_fallthru
    _
  %v21 = vld [vmem:[#allocation2] sm:$0xff]
  %v22 = vld [vmem:[#allocation2 + $0x8] sm:$0xff]
  %v23 = vld [vmem:[%s0] sm:$0xff]
  %v24 = vld [vmem:[%s0 + $0x8] sm:$0xff]
  %v25 = vpack.c.bf16 %v24, %v23
  %v26 = vld [vmem:[%s1] sm:$0xf]
  %v27 = vld [vmem:[%s1 + $0x4] sm:$0xf]
  %v28 = vld [vmem:[%s1 + $0x8] sm:$0xf]
  %v29 = vld [vmem:[%s1 + $0xc] sm:$0xf]
  %v34 = vunpack.c.l.b16 %v26
  %v35 = vunpack.c.l.b16 %v27
  %v36 = vunpack.c.l.b16 %v28
  %v37 = vunpack.c.l.b16 %v29
  %v38 = vpack.c.b16 %v35, %v34
  %v39 = vpack.c.b16 %v37, %v36
  %vm42 = vcmask 261120
  %v44 = vsel %vm42, %v25, 0
  %46 = vmatprep.subr.bf16.mxu0 0
  %47 = vmatpush1.bf16.msra.mxu0 %v38
  %48 = vmatprep.subr.bf16.mxu0 0
  %49 = vmatpush1.bf16.msra.mxu0 %v39
  %50 = vmatprep.subr.bf16.mxu0 0
  %51 = vmatpush1.bf16.msra.mxu0 0
  %52 = vmatprep.subr.bf16.mxu0 0
  %53 = vmatpush1.bf16.msra.mxu0 0
  %54 = vmatprep.subr.bf16.mxu0 0
  %55 = vmatpush1.bf16.msra.mxu0 0
  %56 = vmatprep.subr.bf16.mxu0 0
  %57 = vmatpush1.bf16.msra.mxu0 0
  %58 = vmatprep.subr.bf16.mxu0 0
  %59 = vmatpush1.bf16.msra.mxu0 0
  %60 = vmatprep.subr.bf16.mxu0 0
  %61 = vmatpush1.bf16.msra.mxu0 0
  %62 = vmatprep.subr.bf16.mxu0 0
  %63 = vmatpush1.bf16.msra.mxu0 0
  %64 = vmatprep.subr.bf16.mxu0 0
  %65 = vmatpush1.bf16.msra.mxu0 0
  %66 = vmatprep.subr.bf16.mxu0 0
  %67 = vmatpush1.bf16.msra.mxu0 0
  %68 = vmatprep.subr.bf16.mxu0 0
  %69 = vmatpush1.bf16.msra.mxu0 0
  %70 = vmatprep.subr.bf16.mxu0 0
  %71 = vmatpush1.bf16.msra.mxu0 0
  %72 = vmatprep.subr.bf16.mxu0 0
  %73 = vmatpush1.bf16.msra.mxu0 0
  %74 = vmatprep.subr.bf16.mxu0 0
  %75 = vmatpush1.bf16.msra.mxu0 0
  %76 = vmatprep.subr.bf16.mxu0 0
  %77 = vmatpush1.bf16.msra.mxu0 0
  %78 = vmatprep.mubr.bf16.mxu0 0
  %79 = vmatmul.mubr.bf16.gmra.mrb[0].mxu0 %v44
  %v80 = vpop.f32.mrb[0].mxu0
  %v81 = vadd.f32 0.0, %v80
  %v82 = vpop.f32.mrb[0].mxu0
  %v83 = vpop.f32.mrb[0].mxu0
  %v84 = vadd.f32 0.0, %v83
  %v85 = vpop.f32.mrb[0].mxu0
  %86 = vdwg.mxu0
  %v87 = vadd.f32 %v21, %v81
  %v88 = vadd.f32 %v22, %v84
  %89 = vst [vmem:[#allocation2] sm:$0xff] %v87
  %90 = vst [vmem:[#allocation2 + $0x8] sm:$0xff] %v88
  // Predicated region
  $region18: #{transformer_forward.37} parent=0 // pred_check
    %p91 = pneg %p15
  $region19: #{transformer_forward.37} parent=0 // pred_check_branch
    %93 = sbr.rel (%p91) target = $region21
  $region20: #{transformer_forward.37} parent=0 // pred_region
    %v94 = vld [vmem:[#allocation2] sm:$0xff]
    %v95 = vld [vmem:[#allocation2 + $0x8] sm:$0xff]
    %v96 = vld [vmem:[%s2] sm:$0x1]
    %v98 = vlaneseq
    %v99 = vshrl.u32 %v98, 7
    %v100 = vsub.s32 0, %v99
    %v101 = vrot.slane %v96, %v100
    %v103 = vadd.f32 %v94, %v101
    %v104 = vadd.f32 %v95, %v101
    %105 = vst [vmem:[%s3] sm:$0xff] %v103
    %106 = vst [vmem:[%s3 + $0x8] sm:$0xff] %v104
  $region21: #{transformer_forward.37} parent=0 // pred_fallthru
    _
  // Predicated region
  $region22: #{transformer_forward.37} parent=0 // pred_check
    _
  $region23: #{transformer_forward.37} parent=0 // pred_check_branch
    %108 = sbr.rel (0) target = $region25
  $region24: #{transformer_forward.37} parent=0 // pred_region
    _
  $region25: #{transformer_forward.37} parent=0 // pred_fallthru
    _
  // Predicated region
  $region26: #{transformer_forward.37} parent=0 // pred_check
    _
  $region27: #{transformer_forward.37} parent=0 // pred_check_branch
    %110 = sbr.rel (0) target = $region29
  $region28: #{transformer_forward.37} parent=0 // pred_region
    _
  $region29: #{transformer_forward.37} parent=0 // pred_fallthru
    _

</llo_original>
